<compile_context>
chip_gen: v6e
topology: v6e:2x2x1
jax: 0.10.0
libtpu: 0.0.40
codegen_flags: <defaults>
</compile_context>

<pallas_src>
import functools
import math

import jax
import jax.numpy as jnp
from jax import lax
from jax.experimental import pallas as pl
from jax.experimental.pallas import tpu as pltpu


_NEG_BIG = -1e30  # "minus infinity" bias for padded action lanes (exp() == 0)


def _round_up(v, m):
    return ((v + m - 1) // m) * m


# ----------------------------------------------------------------------------
# Kernel
# ----------------------------------------------------------------------------
def _actor_kernel(x_ref, w1_ref, b1_ref, wih_ref, whh_ref, bl_ref,
                  w2_ref, b2_ref, h0_ref, c0_ref,
                  out_ref, hn_ref, cn_ref,
                  gx_scr, hseq_scr,
                  *, B_pad, H_pad, TC, mm_dtype,
                  log_1m_eps, log_eps_term, apply_eps_mix):
    # x_ref:    (TC*B_pad, Din)      time-major rows of this chunk
    # out_ref:  (TC*B_pad, A_pad)    lane-dense log-prob slab
    # hn/cn:    (B_pad, H_pad)       carried LSTM state (resident across chunks)
    # gx_scr:   (TC*B_pad, 4*H_pad)  hoisted input projection (+ folded bias)
    # hseq_scr: (TC*B_pad, H_pad)    per-step hidden states feeding fc2

    # ---- initialize carried state from (h0, c0) on the first chunk only.
    @pl.when(pl.program_id(0) == 0)
    def _init():
        hn_ref[...] = h0_ref[...]
        cn_ref[...] = c0_ref[...]

    # ---- fc1 + leaky_relu(0.01), then the hoisted LSTM input projection.
    # Both are single large chunk-wide matmuls; the combined LSTM bias
    # (b_ih + b_hh) is folded in here, outside the recurrence.
    x = x_ref[...].astype(mm_dtype)
    pre = jnp.dot(x, w1_ref[...], preferred_element_type=jnp.float32) + b1_ref[...]
    pre = jnp.where(pre >= 0.0, pre, 0.01 * pre)
    gx_scr[...] = (jnp.dot(pre.astype(mm_dtype), wih_ref[...],
                           preferred_element_type=jnp.float32) + bl_ref[...])

    # ---- LSTM recurrence (PyTorch gate order i, f, g, o).
    # Only the small h @ W_hh matmul remains on the serial dependence chain;
    # every gate slice is on a 128-lane boundary, every row slice on a
    # sublane-group boundary.
    def step(tt, carry):
        h, c = carry
        row0 = pl.multiple_of(tt * B_pad, B_pad)
        gates = (gx_scr[pl.ds(row0, B_pad), :]
                 + jnp.dot(h.astype(mm_dtype), whh_ref[...],
                           preferred_element_type=jnp.float32))
        i_g = jax.nn.sigmoid(gates[:, 0 * H_pad:1 * H_pad])
        f_g = jax.nn.sigmoid(gates[:, 1 * H_pad:2 * H_pad])
        g_g = jnp.tanh(gates[:, 2 * H_pad:3 * H_pad])
        o_g = jax.nn.sigmoid(gates[:, 3 * H_pad:4 * H_pad])
        c_new = f_g * c + i_g * g_g
        h_new = o_g * jnp.tanh(c_new)
        hseq_scr[pl.ds(row0, B_pad), :] = h_new
        return h_new, c_new

    if TC <= 32:
        unroll = True                                    # full unroll for LLO
    else:
        unroll = next(u for u in (8, 4, 2, 1) if TC % u == 0)
    h_fin, c_fin = lax.fori_loop(0, TC, step, (hn_ref[...], cn_ref[...]),
                                 unroll=unroll)
    hn_ref[...] = h_fin
    cn_ref[...] = c_fin

    # ---- fc2 + log_softmax (+ epsilon-exploration mix), one big matmul.
    # Padded action lanes carry a -1e30 bias, so they contribute exp() == 0 to
    # the softmax sum; the wrapper slices them away.
    hs = hseq_scr[...].astype(mm_dtype)
    y = jnp.dot(hs, w2_ref[...], preferred_element_type=jnp.float32) + b2_ref[...]
    m = jnp.max(y, axis=-1, keepdims=True)
    z = y - m
    logp = z - jnp.log(jnp.sum(jnp.exp(z), axis=-1, keepdims=True))

    if apply_eps_mix:
        l1 = logp + log_1m_eps
        l2 = jnp.full_like(logp, log_eps_term)
        mx = jnp.maximum(l1, l2)
        logp = mx + jnp.log(jnp.exp(l1 - mx) + jnp.exp(l2 - mx))

    out_ref[...] = logp


# ----------------------------------------------------------------------------
# Parameter padding to lane/sublane-aligned layouts
# ----------------------------------------------------------------------------
def _pad_params(params, H_pad, A_pad, mm_dtype):
    Din, H = params["w1"].shape
    A = params["w2"].shape[1]

    w1p = jnp.zeros((Din, H_pad), jnp.float32).at[:, :H].set(params["w1"])
    b1p = jnp.zeros((1, H_pad), jnp.float32).at[:, :H].set(params["b1"])

    def pad_gate_mat(w):  # (H, 4H) -> (H_pad, 4*H_pad), each gate 128-aligned
        out = jnp.zeros((H_pad, 4 * H_pad), jnp.float32)
        for g in range(4):
            out = out.at[:H, g * H_pad:g * H_pad + H].set(w[:, g * H:(g + 1) * H])
        return out

    wihp = pad_gate_mat(params["w_ih"])
    whhp = pad_gate_mat(params["w_hh"])
    blp = jnp.zeros((1, 4 * H_pad), jnp.float32)
    for g in range(4):
        blp = blp.at[:, g * H_pad:g * H_pad + H].set(
            params["b_lstm"][:, g * H:(g + 1) * H])

    w2p = jnp.zeros((H_pad, A_pad), jnp.float32).at[:H, :A].set(params["w2"])
    b2p = jnp.full((1, A_pad), _NEG_BIG, jnp.float32).at[:, :A].set(params["b2"])

    return (w1p.astype(mm_dtype), b1p, wihp.astype(mm_dtype),
            whhp.astype(mm_dtype), blp, w2p.astype(mm_dtype), b2p)


def _choose_time_chunk(T, B_pad, Din, H_pad, A_pad, budget_bytes=6 * 2**20):
    # Chunk-resident bytes per time step: double-buffered x/out blocks plus the
    # gx and hseq scratch rows. Pick the largest divisor of T within budget.
    per_step = B_pad * (2 * (Din + A_pad) + 5 * H_pad) * 4
    max_tc = max(1, budget_bytes // max(per_step, 1))
    tc = 1
    for d in range(1, T + 1):
        if T % d == 0 and d <= max_tc:
            tc = d
    return tc


# ----------------------------------------------------------------------------
# Wrapper
# ----------------------------------------------------------------------------
def actor_forward(params, x, h=None, eps=0.0, test_mode=False,
                  matmul_dtype=jnp.float32):
    """x: (B, T, input_dim) float32 (batch_first, like nn.LSTM(batch_first=True)).

    Returns (action_logits (B, T, A), (h_n, c_n)), h_n/c_n of shape (1, B, H).
    Set matmul_dtype=jnp.bfloat16 on v6e/v7x for MXU-native matmuls (f32 accum).
    """
    B, T, Din = x.shape
    H = params["w1"].shape[1]
    A = params["w2"].shape[1]

    B_pad = _round_up(B, 8)        # whole sublane groups per time step
    H_pad = _round_up(H, 128)      # 128-lane aligned gate blocks / hidden state
    A_pad = _round_up(A, 128)      # lane-dense (unmasked) output stores
    TC = _choose_time_chunk(T, B_pad, Din, H_pad, A_pad)
    n_chunks = T // TC
    rows = TC * B_pad

    w1p, b1p, wihp, whhp, blp, w2p, b2p = _pad_params(params, H_pad, A_pad,
                                                      matmul_dtype)

    h0 = jnp.zeros((B_pad, H_pad), jnp.float32)
    c0 = jnp.zeros((B_pad, H_pad), jnp.float32)
    if h is not None:
        h0 = h0.at[:B, :H].set(h[0].reshape(B, H))
        c0 = c0.at[:B, :H].set(h[1].reshape(B, H))

    # Time-major, batch-padded, 2D row layout for the kernel. This is the one
    # small host-side relayout kept (x has the narrowest feature dim involved).
    x_tm = jnp.transpose(x, (1, 0, 2))
    if B_pad != B:
        x_tm = jnp.pad(x_tm, ((0, 0), (0, B_pad - B), (0, 0)))
    x2d = x_tm.reshape(T * B_pad, Din)

    log_1m_eps = math.log(1.0 - eps) if eps < 1.0 else -math.inf
    log_eps_term = (math.log(eps) if eps > 0.0 else -math.inf) - math.log(A)
    apply_eps_mix = (not test_mode) and (eps > 0.0)

    kernel = functools.partial(
        _actor_kernel, B_pad=B_pad, H_pad=H_pad, TC=TC, mm_dtype=matmul_dtype,
        log_1m_eps=log_1m_eps, log_eps_term=log_eps_term,
        apply_eps_mix=apply_eps_mix)

    def _const(shape):
        return pl.BlockSpec(shape, lambda i: (0, 0))

    in_specs = [
        pl.BlockSpec((rows, Din), lambda i: (i, 0)),     # x, streamed per chunk
        _const((Din, H_pad)),                            # fc1 weight
        _const((1, H_pad)),                              # fc1 bias
        _const((H_pad, 4 * H_pad)),                      # W_ih (gate-padded)
        _const((H_pad, 4 * H_pad)),                      # W_hh (gate-padded)
        _const((1, 4 * H_pad)),                          # b_ih + b_hh
        _const((H_pad, A_pad)),                          # fc2 weight
        _const((1, A_pad)),                              # fc2 bias (-1e30 pad)
        _const((B_pad, H_pad)),                          # h0
        _const((B_pad, H_pad)),                          # c0
    ]
    out_specs = (
        pl.BlockSpec((rows, A_pad), lambda i: (i, 0)),   # log-prob slab
        _const((B_pad, H_pad)),                          # h_n (carried state)
        _const((B_pad, H_pad)),                          # c_n (carried state)
    )
    out_shape = (
        jax.ShapeDtypeStruct((T * B_pad, A_pad), jnp.float32),
        jax.ShapeDtypeStruct((B_pad, H_pad), jnp.float32),
        jax.ShapeDtypeStruct((B_pad, H_pad), jnp.float32),
    )
    scratch_shapes = [
        pltpu.VMEM((rows, 4 * H_pad), jnp.float32),      # hoisted gates_x
        pltpu.VMEM((rows, H_pad), jnp.float32),          # per-step hidden states
    ]

    # VMEM budget: weights + double-buffered x/out blocks + scratch + state,
    # with 2x headroom, floored at 16 MiB and capped for v7x portability.
    w_itm = jnp.dtype(matmul_dtype).itemsize
    est = ((Din * H_pad + 2 * H_pad * 4 * H_pad + H_pad * A_pad) * w_itm
           + (H_pad + 4 * H_pad + A_pad) * 4
           + 2 * rows * (Din + A_pad) * 4
           + rows * 5 * H_pad * 4
           + 4 * B_pad * H_pad * 4)
    vmem_limit = int(min(max(2 * est, 16 * 2**20), 64 * 2**20))

    out2d, hn, cn = pl.pallas_call(
        kernel,
        grid=(n_chunks,),
        in_specs=in_specs,
        out_specs=out_specs,
        out_shape=out_shape,
        scratch_shapes=scratch_shapes,
        compiler_params=pltpu.CompilerParams(
            dimension_semantics=("arbitrary",),          # (h, c) carried chunk->chunk
            vmem_limit_bytes=vmem_limit),
    )(x2d, w1p, b1p, wihp, whhp, blp, w2p, b2p, h0, c0)

    logits = jnp.transpose(out2d.reshape(T, B_pad, A_pad)[:, :B, :A], (1, 0, 2))
    return logits, (hn[:B, :H][None], cn[:B, :H][None])


# ----------------------------------------------------------------------------
# Deterministic parameter init (mirrors shapes from Actor.__init__)
# ----------------------------------------------------------------------------
def init_actor_params(key, input_dim, output_dim, hidden):
    ks = jax.random.split(key, 6)

    def xavier_uniform(k, fan_in, fan_out, gain):
        bound = gain * math.sqrt(6.0 / (fan_in + fan_out))
        return jax.random.uniform(k, (fan_in, fan_out), jnp.float32, -bound, bound)

    gain_lrelu = math.sqrt(2.0 / (1.0 + 0.01 ** 2))   # calculate_gain('leaky_relu')
    gain_linear = 1.0                                 # calculate_gain('linear')
    lstm_bound = 1.0 / math.sqrt(hidden)              # PyTorch LSTM default init

    return {
        "w1": xavier_uniform(ks[0], input_dim, hidden, gain_lrelu),       # fc1.weight.T
        "b1": jnp.zeros((1, hidden), jnp.float32),                        # fc1.bias
        "w_ih": jax.random.uniform(ks[1], (hidden, 4 * hidden), jnp.float32,
                                   -lstm_bound, lstm_bound),              # weight_ih_l0.T
        "w_hh": jax.random.uniform(ks[2], (hidden, 4 * hidden), jnp.float32,
                                   -lstm_bound, lstm_bound),              # weight_hh_l0.T
        "b_lstm": jax.random.uniform(ks[3], (1, 4 * hidden), jnp.float32,
                                     -lstm_bound, lstm_bound)
                  + jax.random.uniform(ks[4], (1, 4 * hidden), jnp.float32,
                                       -lstm_bound, lstm_bound),          # b_ih + b_hh
        "w2": xavier_uniform(ks[5], hidden, output_dim, gain_linear),     # fc2.weight.T
        "b2": jnp.zeros((1, output_dim), jnp.float32),                    # fc2.bias
    }


# ----------------------------------------------------------------------------
# Pure-JAX reference for verification (mirrors the matmul dtype)
# ----------------------------------------------------------------------------
def actor_ref(params, x, h0, c0, eps, test_mode, matmul_dtype=jnp.float32):
    H = params["w1"].shape[1]
    A = params["w2"].shape[1]
    B, T, Din = x.shape

    def mm(a, b):
        return jnp.dot(a.astype(matmul_dtype), b.astype(matmul_dtype),
                       preferred_element_type=jnp.float32)

    pre = mm(x.reshape(B * T, Din), params["w1"]).reshape(B, T, H) + params["b1"][0]
    pre = jnp.where(pre >= 0.0, pre, 0.01 * pre)

    def step(carry, xt):
        h, c = carry
        gates = mm(xt, params["w_ih"]) + mm(h, params["w_hh"]) + params["b_lstm"][0]
        i_g = jax.nn.sigmoid(gates[:, :H])
        f_g = jax.nn.sigmoid(gates[:, H:2 * H])
        g_g = jnp.tanh(gates[:, 2 * H:3 * H])
        o_g = jax.nn.sigmoid(gates[:, 3 * H:])
        c = f_g * c + i_g * g_g
        h = o_g * jnp.tanh(c)
        return (h, c), h

    (hn, cn), hs = lax.scan(step, (h0, c0), jnp.transpose(pre, (1, 0, 2)))
    hs = jnp.transpose(hs, (1, 0, 2))
    y = mm(hs.reshape(B * T, H), params["w2"]).reshape(B, T, A) + params["b2"][0]
    logp = jax.nn.log_softmax(y, axis=-1)
    if not test_mode:
        l1 = logp + math.log(1.0 - eps)
        l2 = jnp.full_like(logp, (math.log(eps) if eps > 0 else -math.inf)
                           - math.log(A))
        logp = jnp.logaddexp(l1, l2)
    return logp, hn, cn


if __name__ == "__main__":
    B, T, INPUT_DIM, HIDDEN, ACTIONS = 2, 8, 16, 32, 8
    EPS = 0.1

    key = jax.random.PRNGKey(0)
    k_param, k_x = jax.random.split(key)
    params = init_actor_params(k_param, INPUT_DIM, ACTIONS, HIDDEN)
    x = jax.random.normal(k_x, (B, T, INPUT_DIM), jnp.float32)
    h0 = jnp.zeros((B, HIDDEN), jnp.float32)
    c0 = jnp.zeros((B, HIDDEN), jnp.float32)

    # f32 matmuls (exact-path check) and bf16 matmuls (v6e/v7x MXU-native path),
    # each verified against a pure-JAX reference using the same matmul dtype.
    for mm_dtype, tol in ((jnp.float32, 2e-3), (jnp.bfloat16, 1e-2)):
        logits, (hn, cn) = actor_forward(params, x, h=None, eps=EPS,
                                         test_mode=False, matmul_dtype=mm_dtype)
        logits = jax.block_until_ready(logits)
        hn = jax.block_until_ready(hn)
        cn = jax.block_until_ready(cn)

        ref_logits, ref_hn, ref_cn = actor_ref(params, x, h0, c0, EPS, False,
                                               matmul_dtype=mm_dtype)
        assert logits.shape == (B, T, ACTIONS)
        assert hn.shape == (1, B, HIDDEN) and cn.shape == (1, B, HIDDEN)
        assert jnp.allclose(logits, ref_logits, atol=tol, rtol=tol), mm_dtype
        assert jnp.allclose(hn[0], ref_hn, atol=tol, rtol=tol), mm_dtype
        assert jnp.allclose(cn[0], ref_cn, atol=tol, rtol=tol), mm_dtype

    print("KERNEL_OK")
</pallas_src>

<mosaic_0001>
module attributes {stable_mosaic.version = 11 : i64} {
  func.func @_actor_kernel(%arg0: i32, %arg1: memref<64x16xf32, #tpu.memory_space<vmem>>, %arg2: memref<16x128xf32, #tpu.memory_space<vmem>>, %arg3: memref<1x128xf32, #tpu.memory_space<vmem>>, %arg4: memref<128x512xf32, #tpu.memory_space<vmem>>, %arg5: memref<128x512xf32, #tpu.memory_space<vmem>>, %arg6: memref<1x512xf32, #tpu.memory_space<vmem>>, %arg7: memref<128x128xf32, #tpu.memory_space<vmem>>, %arg8: memref<1x128xf32, #tpu.memory_space<vmem>>, %arg9: memref<8x128xf32, #tpu.memory_space<vmem>>, %arg10: memref<8x128xf32, #tpu.memory_space<vmem>>, %arg11: memref<64x128xf32, #tpu.memory_space<vmem>>, %arg12: memref<8x128xf32, #tpu.memory_space<vmem>>, %arg13: memref<8x128xf32, #tpu.memory_space<vmem>>, %arg14: memref<64x512xf32, #tpu.memory_space<vmem>>, %arg15: memref<64x128xf32, #tpu.memory_space<vmem>>) attributes {dimension_semantics = [#tpu.dimension_semantics<arbitrary>], iteration_bounds = array<i64: 1>, scalar_prefetch = 0 : i64, scratch_operands = 2 : i64, tpu.core_type = #tpu.core_type<tc>, window_params = [{transform_indices = @transform_0, window_bounds = array<i64: 64, 16>}, {pipeline_mode = #tpu.pipeline_mode<synchronous>, transform_indices = @transform_1, window_bounds = array<i64: 16, 128>}, {pipeline_mode = #tpu.pipeline_mode<synchronous>, transform_indices = @transform_2, window_bounds = array<i64: 1, 128>}, {pipeline_mode = #tpu.pipeline_mode<synchronous>, transform_indices = @transform_3, window_bounds = array<i64: 128, 512>}, {pipeline_mode = #tpu.pipeline_mode<synchronous>, transform_indices = @transform_4, window_bounds = array<i64: 128, 512>}, {pipeline_mode = #tpu.pipeline_mode<synchronous>, transform_indices = @transform_5, window_bounds = array<i64: 1, 512>}, {pipeline_mode = #tpu.pipeline_mode<synchronous>, transform_indices = @transform_6, window_bounds = array<i64: 128, 128>}, {pipeline_mode = #tpu.pipeline_mode<synchronous>, transform_indices = @transform_7, window_bounds = array<i64: 1, 128>}, {pipeline_mode = #tpu.pipeline_mode<synchronous>, transform_indices = @transform_8, window_bounds = array<i64: 8, 128>}, {pipeline_mode = #tpu.pipeline_mode<synchronous>, transform_indices = @transform_9, window_bounds = array<i64: 8, 128>}, {transform_indices = @transform_10, window_bounds = array<i64: 64, 128>}, {pipeline_mode = #tpu.pipeline_mode<synchronous>, transform_indices = @transform_11, window_bounds = array<i64: 8, 128>}, {pipeline_mode = #tpu.pipeline_mode<synchronous>, transform_indices = @transform_12, window_bounds = array<i64: 8, 128>}]} {
    %c0_i32 = arith.constant 0 : i32
    %0 = arith.cmpi eq, %arg0, %c0_i32 : i32
    %1 = arith.extui %0 : i1 to i32
    %c0_i32_0 = arith.constant 0 : i32
    %2 = arith.cmpi ne, %1, %c0_i32_0 : i32
    scf.if %2 {
      %c0_109 = arith.constant 0 : index
      %c0_110 = arith.constant 0 : index
      %324 = vector.load %arg9[%c0_109, %c0_110] : memref<8x128xf32, #tpu.memory_space<vmem>>, vector<8x128xf32>
      %c0_111 = arith.constant 0 : index
      %c0_112 = arith.constant 0 : index
      %325 = vector.load %arg12[%c0_111, %c0_112] : memref<8x128xf32, #tpu.memory_space<vmem>>, vector<8x128xf32>
      tpu.vector_store %arg12[%c0_111, %c0_112], %324 {strides = array<i32>} : memref<8x128xf32, #tpu.memory_space<vmem>>, vector<8x128xf32>,
      %c0_113 = arith.constant 0 : index
      %c0_114 = arith.constant 0 : index
      %326 = vector.load %arg10[%c0_113, %c0_114] : memref<8x128xf32, #tpu.memory_space<vmem>>, vector<8x128xf32>
      %c0_115 = arith.constant 0 : index
      %c0_116 = arith.constant 0 : index
      %327 = vector.load %arg13[%c0_115, %c0_116] : memref<8x128xf32, #tpu.memory_space<vmem>>, vector<8x128xf32>
      tpu.vector_store %arg13[%c0_115, %c0_116], %326 {strides = array<i32>} : memref<8x128xf32, #tpu.memory_space<vmem>>, vector<8x128xf32>,
    } else {
    }
    %c0 = arith.constant 0 : index
    %c0_1 = arith.constant 0 : index
    %3 = vector.load %arg1[%c0, %c0_1] : memref<64x16xf32, #tpu.memory_space<vmem>>, vector<64x16xf32>
    %c0_2 = arith.constant 0 : index
    %c0_3 = arith.constant 0 : index
    %4 = vector.load %arg2[%c0_2, %c0_3] : memref<16x128xf32, #tpu.memory_space<vmem>>, vector<16x128xf32>
    %cst = arith.constant dense<0.000000e+00> : vector<64x128xf32>
    %5 = tpu.matmul %3, %4, %cst {dimension_numbers = #tpu.dot_dimension_numbers<[1], [0], [0], [1], [0, 0, 1, 1], [], []>} : vector<64x16xf32>, vector<16x128xf32>, vector<64x128xf32> -> vector<64x128xf32>
    %c0_4 = arith.constant 0 : index
    %c0_5 = arith.constant 0 : index
    %6 = vector.load %arg3[%c0_4, %c0_5] : memref<1x128xf32, #tpu.memory_space<vmem>>, vector<1x128xf32>
    %7 = vector.broadcast %6 : vector<1x128xf32> to vector<64x128xf32>
    %8 = arith.addf %5, %7 : vector<64x128xf32>
    %cst_6 = arith.constant 0.000000e+00 : f32
    %9 = vector.broadcast %cst_6 : f32 to vector<64x128xf32>
    %10 = arith.cmpf oge, %8, %9 : vector<64x128xf32>
    %cst_7 = arith.constant 0.00999999977 : f32
    %11 = vector.broadcast %cst_7 : f32 to vector<64x128xf32>
    %12 = arith.mulf %11, %8 : vector<64x128xf32>
    %13 = arith.select %10, %8, %12 : vector<64x128xi1>, vector<64x128xf32>
    %c0_8 = arith.constant 0 : index
    %c0_9 = arith.constant 0 : index
    %14 = vector.load %arg4[%c0_8, %c0_9] : memref<128x512xf32, #tpu.memory_space<vmem>>, vector<128x512xf32>
    %cst_10 = arith.constant dense<0.000000e+00> : vector<64x512xf32>
    %15 = tpu.matmul %13, %14, %cst_10 {dimension_numbers = #tpu.dot_dimension_numbers<[1], [0], [0], [1], [0, 0, 1, 1], [], []>} : vector<64x128xf32>, vector<128x512xf32>, vector<64x512xf32> -> vector<64x512xf32>
    %c0_11 = arith.constant 0 : index
    %c0_12 = arith.constant 0 : index
    %16 = vector.load %arg6[%c0_11, %c0_12] : memref<1x512xf32, #tpu.memory_space<vmem>>, vector<1x512xf32>
    %17 = vector.broadcast %16 : vector<1x512xf32> to vector<64x512xf32>
    %18 = arith.addf %15, %17 : vector<64x512xf32>
    %c0_13 = arith.constant 0 : index
    %c0_14 = arith.constant 0 : index
    %19 = vector.load %arg14[%c0_13, %c0_14] : memref<64x512xf32, #tpu.memory_space<vmem>>, vector<64x512xf32>
    tpu.vector_store %arg14[%c0_13, %c0_14], %18 {strides = array<i32>} : memref<64x512xf32, #tpu.memory_space<vmem>>, vector<64x512xf32>,
    %c0_15 = arith.constant 0 : index
    %c0_16 = arith.constant 0 : index
    %20 = vector.load %arg12[%c0_15, %c0_16] : memref<8x128xf32, #tpu.memory_space<vmem>>, vector<8x128xf32>
    %c0_17 = arith.constant 0 : index
    %c0_18 = arith.constant 0 : index
    %21 = vector.load %arg13[%c0_17, %c0_18] : memref<8x128xf32, #tpu.memory_space<vmem>>, vector<8x128xf32>
    %c0_i32_19 = arith.constant 0 : i32
    %c8_i32 = arith.constant 8 : i32
    %22 = arith.muli %c0_i32_19, %c8_i32 : i32
    %23 = tpu.assume_multiple %22, 8 : i32
    %24 = arith.index_cast %23 : i32 to index
    %c0_20 = arith.constant 0 : index
    %25 = vector.load %arg14[%24, %c0_20] : memref<64x512xf32, #tpu.memory_space<vmem>>, vector<8x512xf32>
    %c0_21 = arith.constant 0 : index
    %c0_22 = arith.constant 0 : index
    %26 = vector.load %arg5[%c0_21, %c0_22] : memref<128x512xf32, #tpu.memory_space<vmem>>, vector<128x512xf32>
    %cst_23 = arith.constant dense<0.000000e+00> : vector<8x512xf32>
    %27 = tpu.matmul %20, %26, %cst_23 {dimension_numbers = #tpu.dot_dimension_numbers<[1], [0], [0], [1], [0, 0, 1, 1], [], []>} : vector<8x128xf32>, vector<128x512xf32>, vector<8x512xf32> -> vector<8x512xf32>
    %28 = arith.addf %25, %27 : vector<8x512xf32>
    %29 = vector.extract_strided_slice %28 {offsets = [0, 0], sizes = [8, 128], strides = [1, 1]} : vector<8x512xf32> to vector<8x128xf32>
    %30 = arith.negf %29 : vector<8x128xf32>
    %31 = math.exp %30 : vector<8x128xf32>
    %cst_24 = arith.constant 1.000000e+00 : f32
    %32 = vector.broadcast %cst_24 : f32 to vector<8x128xf32>
    %33 = arith.addf %32, %31 : vector<8x128xf32>
    %34 = arith.divf %32, %33 : vector<8x128xf32>
    %35 = vector.extract_strided_slice %28 {offsets = [0, 128], sizes = [8, 128], strides = [1, 1]} : vector<8x512xf32> to vector<8x128xf32>
    %36 = arith.negf %35 : vector<8x128xf32>
    %37 = math.exp %36 : vector<8x128xf32>
    %cst_25 = arith.constant 1.000000e+00 : f32
    %38 = vector.broadcast %cst_25 : f32 to vector<8x128xf32>
    %39 = arith.addf %38, %37 : vector<8x128xf32>
    %40 = arith.divf %38, %39 : vector<8x128xf32>
    %41 = vector.extract_strided_slice %28 {offsets = [0, 256], sizes = [8, 128], strides = [1, 1]} : vector<8x512xf32> to vector<8x128xf32>
    %42 = math.tanh %41 : vector<8x128xf32>
    %43 = vector.extract_strided_slice %28 {offsets = [0, 384], sizes = [8, 128], strides = [1, 1]} : vector<8x512xf32> to vector<8x128xf32>
    %44 = arith.negf %43 : vector<8x128xf32>
    %45 = math.exp %44 : vector<8x128xf32>
    %cst_26 = arith.constant 1.000000e+00 : f32
    %46 = vector.broadcast %cst_26 : f32 to vector<8x128xf32>
    %47 = arith.addf %46, %45 : vector<8x128xf32>
    %48 = arith.divf %46, %47 : vector<8x128xf32>
    %49 = arith.mulf %40, %21 : vector<8x128xf32>
    %50 = arith.mulf %34, %42 : vector<8x128xf32>
    %51 = arith.addf %49, %50 : vector<8x128xf32>
    %52 = math.tanh %51 : vector<8x128xf32>
    %53 = arith.mulf %48, %52 : vector<8x128xf32>
    %54 = arith.index_cast %23 : i32 to index
    %c0_27 = arith.constant 0 : index
    %55 = vector.load %arg15[%54, %c0_27] : memref<64x128xf32, #tpu.memory_space<vmem>>, vector<8x128xf32>
    tpu.vector_store %arg15[%54, %c0_27], %53 {strides = array<i32>} : memref<64x128xf32, #tpu.memory_space<vmem>>, vector<8x128xf32>,
    %c1_i32 = arith.constant 1 : i32
    %c8_i32_28 = arith.constant 8 : i32
    %56 = arith.muli %c1_i32, %c8_i32_28 : i32
    %57 = tpu.assume_multiple %56, 8 : i32
    %58 = arith.index_cast %57 : i32 to index
    %c0_29 = arith.constant 0 : index
    %59 = vector.load %arg14[%58, %c0_29] : memref<64x512xf32, #tpu.memory_space<vmem>>, vector<8x512xf32>
    %c0_30 = arith.constant 0 : index
    %c0_31 = arith.constant 0 : index
    %60 = vector.load %arg5[%c0_30, %c0_31] : memref<128x512xf32, #tpu.memory_space<vmem>>, vector<128x512xf32>
    %cst_32 = arith.constant dense<0.000000e+00> : vector<8x512xf32>
    %61 = tpu.matmul %53, %60, %cst_32 {dimension_numbers = #tpu.dot_dimension_numbers<[1], [0], [0], [1], [0, 0, 1, 1], [], []>} : vector<8x128xf32>, vector<128x512xf32>, vector<8x512xf32> -> vector<8x512xf32>
    %62 = arith.addf %59, %61 : vector<8x512xf32>
    %63 = vector.extract_strided_slice %62 {offsets = [0, 0], sizes = [8, 128], strides = [1, 1]} : vector<8x512xf32> to vector<8x128xf32>
    %64 = arith.negf %63 : vector<8x128xf32>
    %65 = math.exp %64 : vector<8x128xf32>
    %cst_33 = arith.constant 1.000000e+00 : f32
    %66 = vector.broadcast %cst_33 : f32 to vector<8x128xf32>
    %67 = arith.addf %66, %65 : vector<8x128xf32>
    %68 = arith.divf %66, %67 : vector<8x128xf32>
    %69 = vector.extract_strided_slice %62 {offsets = [0, 128], sizes = [8, 128], strides = [1, 1]} : vector<8x512xf32> to vector<8x128xf32>
    %70 = arith.negf %69 : vector<8x128xf32>
    %71 = math.exp %70 : vector<8x128xf32>
    %cst_34 = arith.constant 1.000000e+00 : f32
    %72 = vector.broadcast %cst_34 : f32 to vector<8x128xf32>
    %73 = arith.addf %72, %71 : vector<8x128xf32>
    %74 = arith.divf %72, %73 : vector<8x128xf32>
    %75 = vector.extract_strided_slice %62 {offsets = [0, 256], sizes = [8, 128], strides = [1, 1]} : vector<8x512xf32> to vector<8x128xf32>
    %76 = math.tanh %75 : vector<8x128xf32>
    %77 = vector.extract_strided_slice %62 {offsets = [0, 384], sizes = [8, 128], strides = [1, 1]} : vector<8x512xf32> to vector<8x128xf32>
    %78 = arith.negf %77 : vector<8x128xf32>
    %79 = math.exp %78 : vector<8x128xf32>
    %cst_35 = arith.constant 1.000000e+00 : f32
    %80 = vector.broadcast %cst_35 : f32 to vector<8x128xf32>
    %81 = arith.addf %80, %79 : vector<8x128xf32>
    %82 = arith.divf %80, %81 : vector<8x128xf32>
    %83 = arith.mulf %74, %51 : vector<8x128xf32>
    %84 = arith.mulf %68, %76 : vector<8x128xf32>
    %85 = arith.addf %83, %84 : vector<8x128xf32>
    %86 = math.tanh %85 : vector<8x128xf32>
    %87 = arith.mulf %82, %86 : vector<8x128xf32>
    %88 = arith.index_cast %57 : i32 to index
    %c0_36 = arith.constant 0 : index
    %89 = vector.load %arg15[%88, %c0_36] : memref<64x128xf32, #tpu.memory_space<vmem>>, vector<8x128xf32>
    tpu.vector_store %arg15[%88, %c0_36], %87 {strides = array<i32>} : memref<64x128xf32, #tpu.memory_space<vmem>>, vector<8x128xf32>,
    %c2_i32 = arith.constant 2 : i32
    %c8_i32_37 = arith.constant 8 : i32
    %90 = arith.muli %c2_i32, %c8_i32_37 : i32
    %91 = tpu.assume_multiple %90, 8 : i32
    %92 = arith.index_cast %91 : i32 to index
    %c0_38 = arith.constant 0 : index
    %93 = vector.load %arg14[%92, %c0_38] : memref<64x512xf32, #tpu.memory_space<vmem>>, vector<8x512xf32>
    %c0_39 = arith.constant 0 : index
    %c0_40 = arith.constant 0 : index
    %94 = vector.load %arg5[%c0_39, %c0_40] : memref<128x512xf32, #tpu.memory_space<vmem>>, vector<128x512xf32>
    %cst_41 = arith.constant dense<0.000000e+00> : vector<8x512xf32>
    %95 = tpu.matmul %87, %94, %cst_41 {dimension_numbers = #tpu.dot_dimension_numbers<[1], [0], [0], [1], [0, 0, 1, 1], [], []>} : vector<8x128xf32>, vector<128x512xf32>, vector<8x512xf32> -> vector<8x512xf32>
    %96 = arith.addf %93, %95 : vector<8x512xf32>
    %97 = vector.extract_strided_slice %96 {offsets = [0, 0], sizes = [8, 128], strides = [1, 1]} : vector<8x512xf32> to vector<8x128xf32>
    %98 = arith.negf %97 : vector<8x128xf32>
    %99 = math.exp %98 : vector<8x128xf32>
    %cst_42 = arith.constant 1.000000e+00 : f32
    %100 = vector.broadcast %cst_42 : f32 to vector<8x128xf32>
    %101 = arith.addf %100, %99 : vector<8x128xf32>
    %102 = arith.divf %100, %101 : vector<8x128xf32>
    %103 = vector.extract_strided_slice %96 {offsets = [0, 128], sizes = [8, 128], strides = [1, 1]} : vector<8x512xf32> to vector<8x128xf32>
    %104 = arith.negf %103 : vector<8x128xf32>
    %105 = math.exp %104 : vector<8x128xf32>
    %cst_43 = arith.constant 1.000000e+00 : f32
    %106 = vector.broadcast %cst_43 : f32 to vector<8x128xf32>
    %107 = arith.addf %106, %105 : vector<8x128xf32>
    %108 = arith.divf %106, %107 : vector<8x128xf32>
    %109 = vector.extract_strided_slice %96 {offsets = [0, 256], sizes = [8, 128], strides = [1, 1]} : vector<8x512xf32> to vector<8x128xf32>
    %110 = math.tanh %109 : vector<8x128xf32>
    %111 = vector.extract_strided_slice %96 {offsets = [0, 384], sizes = [8, 128], strides = [1, 1]} : vector<8x512xf32> to vector<8x128xf32>
    %112 = arith.negf %111 : vector<8x128xf32>
    %113 = math.exp %112 : vector<8x128xf32>
    %cst_44 = arith.constant 1.000000e+00 : f32
    %114 = vector.broadcast %cst_44 : f32 to vector<8x128xf32>
    %115 = arith.addf %114, %113 : vector<8x128xf32>
    %116 = arith.divf %114, %115 : vector<8x128xf32>
    %117 = arith.mulf %108, %85 : vector<8x128xf32>
    %118 = arith.mulf %102, %110 : vector<8x128xf32>
    %119 = arith.addf %117, %118 : vector<8x128xf32>
    %120 = math.tanh %119 : vector<8x128xf32>
    %121 = arith.mulf %116, %120 : vector<8x128xf32>
    %122 = arith.index_cast %91 : i32 to index
    %c0_45 = arith.constant 0 : index
    %123 = vector.load %arg15[%122, %c0_45] : memref<64x128xf32, #tpu.memory_space<vmem>>, vector<8x128xf32>
    tpu.vector_store %arg15[%122, %c0_45], %121 {strides = array<i32>} : memref<64x128xf32, #tpu.memory_space<vmem>>, vector<8x128xf32>,
    %c3_i32 = arith.constant 3 : i32
    %c8_i32_46 = arith.constant 8 : i32
    %124 = arith.muli %c3_i32, %c8_i32_46 : i32
    %125 = tpu.assume_multiple %124, 8 : i32
    %126 = arith.index_cast %125 : i32 to index
    %c0_47 = arith.constant 0 : index
    %127 = vector.load %arg14[%126, %c0_47] : memref<64x512xf32, #tpu.memory_space<vmem>>, vector<8x512xf32>
    %c0_48 = arith.constant 0 : index
    %c0_49 = arith.constant 0 : index
    %128 = vector.load %arg5[%c0_48, %c0_49] : memref<128x512xf32, #tpu.memory_space<vmem>>, vector<128x512xf32>
    %cst_50 = arith.constant dense<0.000000e+00> : vector<8x512xf32>
    %129 = tpu.matmul %121, %128, %cst_50 {dimension_numbers = #tpu.dot_dimension_numbers<[1], [0], [0], [1], [0, 0, 1, 1], [], []>} : vector<8x128xf32>, vector<128x512xf32>, vector<8x512xf32> -> vector<8x512xf32>
    %130 = arith.addf %127, %129 : vector<8x512xf32>
    %131 = vector.extract_strided_slice %130 {offsets = [0, 0], sizes = [8, 128], strides = [1, 1]} : vector<8x512xf32> to vector<8x128xf32>
    %132 = arith.negf %131 : vector<8x128xf32>
    %133 = math.exp %132 : vector<8x128xf32>
    %cst_51 = arith.constant 1.000000e+00 : f32
    %134 = vector.broadcast %cst_51 : f32 to vector<8x128xf32>
    %135 = arith.addf %134, %133 : vector<8x128xf32>
    %136 = arith.divf %134, %135 : vector<8x128xf32>
    %137 = vector.extract_strided_slice %130 {offsets = [0, 128], sizes = [8, 128], strides = [1, 1]} : vector<8x512xf32> to vector<8x128xf32>
    %138 = arith.negf %137 : vector<8x128xf32>
    %139 = math.exp %138 : vector<8x128xf32>
    %cst_52 = arith.constant 1.000000e+00 : f32
    %140 = vector.broadcast %cst_52 : f32 to vector<8x128xf32>
    %141 = arith.addf %140, %139 : vector<8x128xf32>
    %142 = arith.divf %140, %141 : vector<8x128xf32>
    %143 = vector.extract_strided_slice %130 {offsets = [0, 256], sizes = [8, 128], strides = [1, 1]} : vector<8x512xf32> to vector<8x128xf32>
    %144 = math.tanh %143 : vector<8x128xf32>
    %145 = vector.extract_strided_slice %130 {offsets = [0, 384], sizes = [8, 128], strides = [1, 1]} : vector<8x512xf32> to vector<8x128xf32>
    %146 = arith.negf %145 : vector<8x128xf32>
    %147 = math.exp %146 : vector<8x128xf32>
    %cst_53 = arith.constant 1.000000e+00 : f32
    %148 = vector.broadcast %cst_53 : f32 to vector<8x128xf32>
    %149 = arith.addf %148, %147 : vector<8x128xf32>
    %150 = arith.divf %148, %149 : vector<8x128xf32>
    %151 = arith.mulf %142, %119 : vector<8x128xf32>
    %152 = arith.mulf %136, %144 : vector<8x128xf32>
    %153 = arith.addf %151, %152 : vector<8x128xf32>
    %154 = math.tanh %153 : vector<8x128xf32>
    %155 = arith.mulf %150, %154 : vector<8x128xf32>
    %156 = arith.index_cast %125 : i32 to index
    %c0_54 = arith.constant 0 : index
    %157 = vector.load %arg15[%156, %c0_54] : memref<64x128xf32, #tpu.memory_space<vmem>>, vector<8x128xf32>
    tpu.vector_store %arg15[%156, %c0_54], %155 {strides = array<i32>} : memref<64x128xf32, #tpu.memory_space<vmem>>, vector<8x128xf32>,
    %c4_i32 = arith.constant 4 : i32
    %c8_i32_55 = arith.constant 8 : i32
    %158 = arith.muli %c4_i32, %c8_i32_55 : i32
    %159 = tpu.assume_multiple %158, 8 : i32
    %160 = arith.index_cast %159 : i32 to index
    %c0_56 = arith.constant 0 : index
    %161 = vector.load %arg14[%160, %c0_56] : memref<64x512xf32, #tpu.memory_space<vmem>>, vector<8x512xf32>
    %c0_57 = arith.constant 0 : index
    %c0_58 = arith.constant 0 : index
    %162 = vector.load %arg5[%c0_57, %c0_58] : memref<128x512xf32, #tpu.memory_space<vmem>>, vector<128x512xf32>
    %cst_59 = arith.constant dense<0.000000e+00> : vector<8x512xf32>
    %163 = tpu.matmul %155, %162, %cst_59 {dimension_numbers = #tpu.dot_dimension_numbers<[1], [0], [0], [1], [0, 0, 1, 1], [], []>} : vector<8x128xf32>, vector<128x512xf32>, vector<8x512xf32> -> vector<8x512xf32>
    %164 = arith.addf %161, %163 : vector<8x512xf32>
    %165 = vector.extract_strided_slice %164 {offsets = [0, 0], sizes = [8, 128], strides = [1, 1]} : vector<8x512xf32> to vector<8x128xf32>
    %166 = arith.negf %165 : vector<8x128xf32>
    %167 = math.exp %166 : vector<8x128xf32>
    %cst_60 = arith.constant 1.000000e+00 : f32
    %168 = vector.broadcast %cst_60 : f32 to vector<8x128xf32>
    %169 = arith.addf %168, %167 : vector<8x128xf32>
    %170 = arith.divf %168, %169 : vector<8x128xf32>
    %171 = vector.extract_strided_slice %164 {offsets = [0, 128], sizes = [8, 128], strides = [1, 1]} : vector<8x512xf32> to vector<8x128xf32>
    %172 = arith.negf %171 : vector<8x128xf32>
    %173 = math.exp %172 : vector<8x128xf32>
    %cst_61 = arith.constant 1.000000e+00 : f32
    %174 = vector.broadcast %cst_61 : f32 to vector<8x128xf32>
    %175 = arith.addf %174, %173 : vector<8x128xf32>
    %176 = arith.divf %174, %175 : vector<8x128xf32>
    %177 = vector.extract_strided_slice %164 {offsets = [0, 256], sizes = [8, 128], strides = [1, 1]} : vector<8x512xf32> to vector<8x128xf32>
    %178 = math.tanh %177 : vector<8x128xf32>
    %179 = vector.extract_strided_slice %164 {offsets = [0, 384], sizes = [8, 128], strides = [1, 1]} : vector<8x512xf32> to vector<8x128xf32>
    %180 = arith.negf %179 : vector<8x128xf32>
    %181 = math.exp %180 : vector<8x128xf32>
    %cst_62 = arith.constant 1.000000e+00 : f32
    %182 = vector.broadcast %cst_62 : f32 to vector<8x128xf32>
    %183 = arith.addf %182, %181 : vector<8x128xf32>
    %184 = arith.divf %182, %183 : vector<8x128xf32>
    %185 = arith.mulf %176, %153 : vector<8x128xf32>
    %186 = arith.mulf %170, %178 : vector<8x128xf32>
    %187 = arith.addf %185, %186 : vector<8x128xf32>
    %188 = math.tanh %187 : vector<8x128xf32>
    %189 = arith.mulf %184, %188 : vector<8x128xf32>
    %190 = arith.index_cast %159 : i32 to index
    %c0_63 = arith.constant 0 : index
    %191 = vector.load %arg15[%190, %c0_63] : memref<64x128xf32, #tpu.memory_space<vmem>>, vector<8x128xf32>
    tpu.vector_store %arg15[%190, %c0_63], %189 {strides = array<i32>} : memref<64x128xf32, #tpu.memory_space<vmem>>, vector<8x128xf32>,
    %c5_i32 = arith.constant 5 : i32
    %c8_i32_64 = arith.constant 8 : i32
    %192 = arith.muli %c5_i32, %c8_i32_64 : i32
    %193 = tpu.assume_multiple %192, 8 : i32
    %194 = arith.index_cast %193 : i32 to index
    %c0_65 = arith.constant 0 : index
    %195 = vector.load %arg14[%194, %c0_65] : memref<64x512xf32, #tpu.memory_space<vmem>>, vector<8x512xf32>
    %c0_66 = arith.constant 0 : index
    %c0_67 = arith.constant 0 : index
    %196 = vector.load %arg5[%c0_66, %c0_67] : memref<128x512xf32, #tpu.memory_space<vmem>>, vector<128x512xf32>
    %cst_68 = arith.constant dense<0.000000e+00> : vector<8x512xf32>
    %197 = tpu.matmul %189, %196, %cst_68 {dimension_numbers = #tpu.dot_dimension_numbers<[1], [0], [0], [1], [0, 0, 1, 1], [], []>} : vector<8x128xf32>, vector<128x512xf32>, vector<8x512xf32> -> vector<8x512xf32>
    %198 = arith.addf %195, %197 : vector<8x512xf32>
    %199 = vector.extract_strided_slice %198 {offsets = [0, 0], sizes = [8, 128], strides = [1, 1]} : vector<8x512xf32> to vector<8x128xf32>
    %200 = arith.negf %199 : vector<8x128xf32>
    %201 = math.exp %200 : vector<8x128xf32>
    %cst_69 = arith.constant 1.000000e+00 : f32
    %202 = vector.broadcast %cst_69 : f32 to vector<8x128xf32>
    %203 = arith.addf %202, %201 : vector<8x128xf32>
    %204 = arith.divf %202, %203 : vector<8x128xf32>
    %205 = vector.extract_strided_slice %198 {offsets = [0, 128], sizes = [8, 128], strides = [1, 1]} : vector<8x512xf32> to vector<8x128xf32>
    %206 = arith.negf %205 : vector<8x128xf32>
    %207 = math.exp %206 : vector<8x128xf32>
    %cst_70 = arith.constant 1.000000e+00 : f32
    %208 = vector.broadcast %cst_70 : f32 to vector<8x128xf32>
    %209 = arith.addf %208, %207 : vector<8x128xf32>
    %210 = arith.divf %208, %209 : vector<8x128xf32>
    %211 = vector.extract_strided_slice %198 {offsets = [0, 256], sizes = [8, 128], strides = [1, 1]} : vector<8x512xf32> to vector<8x128xf32>
    %212 = math.tanh %211 : vector<8x128xf32>
    %213 = vector.extract_strided_slice %198 {offsets = [0, 384], sizes = [8, 128], strides = [1, 1]} : vector<8x512xf32> to vector<8x128xf32>
    %214 = arith.negf %213 : vector<8x128xf32>
    %215 = math.exp %214 : vector<8x128xf32>
    %cst_71 = arith.constant 1.000000e+00 : f32
    %216 = vector.broadcast %cst_71 : f32 to vector<8x128xf32>
    %217 = arith.addf %216, %215 : vector<8x128xf32>
    %218 = arith.divf %216, %217 : vector<8x128xf32>
    %219 = arith.mulf %210, %187 : vector<8x128xf32>
    %220 = arith.mulf %204, %212 : vector<8x128xf32>
    %221 = arith.addf %219, %220 : vector<8x128xf32>
    %222 = math.tanh %221 : vector<8x128xf32>
    %223 = arith.mulf %218, %222 : vector<8x128xf32>
    %224 = arith.index_cast %193 : i32 to index
    %c0_72 = arith.constant 0 : index
    %225 = vector.load %arg15[%224, %c0_72] : memref<64x128xf32, #tpu.memory_space<vmem>>, vector<8x128xf32>
    tpu.vector_store %arg15[%224, %c0_72], %223 {strides = array<i32>} : memref<64x128xf32, #tpu.memory_space<vmem>>, vector<8x128xf32>,
    %c6_i32 = arith.constant 6 : i32
    %c8_i32_73 = arith.constant 8 : i32
    %226 = arith.muli %c6_i32, %c8_i32_73 : i32
    %227 = tpu.assume_multiple %226, 8 : i32
    %228 = arith.index_cast %227 : i32 to index
    %c0_74 = arith.constant 0 : index
    %229 = vector.load %arg14[%228, %c0_74] : memref<64x512xf32, #tpu.memory_space<vmem>>, vector<8x512xf32>
    %c0_75 = arith.constant 0 : index
    %c0_76 = arith.constant 0 : index
    %230 = vector.load %arg5[%c0_75, %c0_76] : memref<128x512xf32, #tpu.memory_space<vmem>>, vector<128x512xf32>
    %cst_77 = arith.constant dense<0.000000e+00> : vector<8x512xf32>
    %231 = tpu.matmul %223, %230, %cst_77 {dimension_numbers = #tpu.dot_dimension_numbers<[1], [0], [0], [1], [0, 0, 1, 1], [], []>} : vector<8x128xf32>, vector<128x512xf32>, vector<8x512xf32> -> vector<8x512xf32>
    %232 = arith.addf %229, %231 : vector<8x512xf32>
    %233 = vector.extract_strided_slice %232 {offsets = [0, 0], sizes = [8, 128], strides = [1, 1]} : vector<8x512xf32> to vector<8x128xf32>
    %234 = arith.negf %233 : vector<8x128xf32>
    %235 = math.exp %234 : vector<8x128xf32>
    %cst_78 = arith.constant 1.000000e+00 : f32
    %236 = vector.broadcast %cst_78 : f32 to vector<8x128xf32>
    %237 = arith.addf %236, %235 : vector<8x128xf32>
    %238 = arith.divf %236, %237 : vector<8x128xf32>
    %239 = vector.extract_strided_slice %232 {offsets = [0, 128], sizes = [8, 128], strides = [1, 1]} : vector<8x512xf32> to vector<8x128xf32>
    %240 = arith.negf %239 : vector<8x128xf32>
    %241 = math.exp %240 : vector<8x128xf32>
    %cst_79 = arith.constant 1.000000e+00 : f32
    %242 = vector.broadcast %cst_79 : f32 to vector<8x128xf32>
    %243 = arith.addf %242, %241 : vector<8x128xf32>
    %244 = arith.divf %242, %243 : vector<8x128xf32>
    %245 = vector.extract_strided_slice %232 {offsets = [0, 256], sizes = [8, 128], strides = [1, 1]} : vector<8x512xf32> to vector<8x128xf32>
    %246 = math.tanh %245 : vector<8x128xf32>
    %247 = vector.extract_strided_slice %232 {offsets = [0, 384], sizes = [8, 128], strides = [1, 1]} : vector<8x512xf32> to vector<8x128xf32>
    %248 = arith.negf %247 : vector<8x128xf32>
    %249 = math.exp %248 : vector<8x128xf32>
    %cst_80 = arith.constant 1.000000e+00 : f32
    %250 = vector.broadcast %cst_80 : f32 to vector<8x128xf32>
    %251 = arith.addf %250, %249 : vector<8x128xf32>
    %252 = arith.divf %250, %251 : vector<8x128xf32>
    %253 = arith.mulf %244, %221 : vector<8x128xf32>
    %254 = arith.mulf %238, %246 : vector<8x128xf32>
    %255 = arith.addf %253, %254 : vector<8x128xf32>
    %256 = math.tanh %255 : vector<8x128xf32>
    %257 = arith.mulf %252, %256 : vector<8x128xf32>
    %258 = arith.index_cast %227 : i32 to index
    %c0_81 = arith.constant 0 : index
    %259 = vector.load %arg15[%258, %c0_81] : memref<64x128xf32, #tpu.memory_space<vmem>>, vector<8x128xf32>
    tpu.vector_store %arg15[%258, %c0_81], %257 {strides = array<i32>} : memref<64x128xf32, #tpu.memory_space<vmem>>, vector<8x128xf32>,
    %c7_i32 = arith.constant 7 : i32
    %c8_i32_82 = arith.constant 8 : i32
    %260 = arith.muli %c7_i32, %c8_i32_82 : i32
    %261 = tpu.assume_multiple %260, 8 : i32
    %262 = arith.index_cast %261 : i32 to index
    %c0_83 = arith.constant 0 : index
    %263 = vector.load %arg14[%262, %c0_83] : memref<64x512xf32, #tpu.memory_space<vmem>>, vector<8x512xf32>
    %c0_84 = arith.constant 0 : index
    %c0_85 = arith.constant 0 : index
    %264 = vector.load %arg5[%c0_84, %c0_85] : memref<128x512xf32, #tpu.memory_space<vmem>>, vector<128x512xf32>
    %cst_86 = arith.constant dense<0.000000e+00> : vector<8x512xf32>
    %265 = tpu.matmul %257, %264, %cst_86 {dimension_numbers = #tpu.dot_dimension_numbers<[1], [0], [0], [1], [0, 0, 1, 1], [], []>} : vector<8x128xf32>, vector<128x512xf32>, vector<8x512xf32> -> vector<8x512xf32>
    %266 = arith.addf %263, %265 : vector<8x512xf32>
    %267 = vector.extract_strided_slice %266 {offsets = [0, 0], sizes = [8, 128], strides = [1, 1]} : vector<8x512xf32> to vector<8x128xf32>
    %268 = arith.negf %267 : vector<8x128xf32>
    %269 = math.exp %268 : vector<8x128xf32>
    %cst_87 = arith.constant 1.000000e+00 : f32
    %270 = vector.broadcast %cst_87 : f32 to vector<8x128xf32>
    %271 = arith.addf %270, %269 : vector<8x128xf32>
    %272 = arith.divf %270, %271 : vector<8x128xf32>
    %273 = vector.extract_strided_slice %266 {offsets = [0, 128], sizes = [8, 128], strides = [1, 1]} : vector<8x512xf32> to vector<8x128xf32>
    %274 = arith.negf %273 : vector<8x128xf32>
    %275 = math.exp %274 : vector<8x128xf32>
    %cst_88 = arith.constant 1.000000e+00 : f32
    %276 = vector.broadcast %cst_88 : f32 to vector<8x128xf32>
    %277 = arith.addf %276, %275 : vector<8x128xf32>
    %278 = arith.divf %276, %277 : vector<8x128xf32>
    %279 = vector.extract_strided_slice %266 {offsets = [0, 256], sizes = [8, 128], strides = [1, 1]} : vector<8x512xf32> to vector<8x128xf32>
    %280 = math.tanh %279 : vector<8x128xf32>
    %281 = vector.extract_strided_slice %266 {offsets = [0, 384], sizes = [8, 128], strides = [1, 1]} : vector<8x512xf32> to vector<8x128xf32>
    %282 = arith.negf %281 : vector<8x128xf32>
    %283 = math.exp %282 : vector<8x128xf32>
    %cst_89 = arith.constant 1.000000e+00 : f32
    %284 = vector.broadcast %cst_89 : f32 to vector<8x128xf32>
    %285 = arith.addf %284, %283 : vector<8x128xf32>
    %286 = arith.divf %284, %285 : vector<8x128xf32>
    %287 = arith.mulf %278, %255 : vector<8x128xf32>
    %288 = arith.mulf %272, %280 : vector<8x128xf32>
    %289 = arith.addf %287, %288 : vector<8x128xf32>
    %290 = math.tanh %289 : vector<8x128xf32>
    %291 = arith.mulf %286, %290 : vector<8x128xf32>
    %292 = arith.index_cast %261 : i32 to index
    %c0_90 = arith.constant 0 : index
    %293 = vector.load %arg15[%292, %c0_90] : memref<64x128xf32, #tpu.memory_space<vmem>>, vector<8x128xf32>
    tpu.vector_store %arg15[%292, %c0_90], %291 {strides = array<i32>} : memref<64x128xf32, #tpu.memory_space<vmem>>, vector<8x128xf32>,
    %c8_i32_91 = arith.constant 8 : i32
    %c0_92 = arith.constant 0 : index
    %c0_93 = arith.constant 0 : index
    %294 = vector.load %arg12[%c0_92, %c0_93] : memref<8x128xf32, #tpu.memory_space<vmem>>, vector<8x128xf32>
    tpu.vector_store %arg12[%c0_92, %c0_93], %291 {strides = array<i32>} : memref<8x128xf32, #tpu.memory_space<vmem>>, vector<8x128xf32>,
    %c0_94 = arith.constant 0 : index
    %c0_95 = arith.constant 0 : index
    %295 = vector.load %arg13[%c0_94, %c0_95] : memref<8x128xf32, #tpu.memory_space<vmem>>, vector<8x128xf32>
    tpu.vector_store %arg13[%c0_94, %c0_95], %289 {strides = array<i32>} : memref<8x128xf32, #tpu.memory_space<vmem>>, vector<8x128xf32>,
    %c0_96 = arith.constant 0 : index
    %c0_97 = arith.constant 0 : index
    %296 = vector.load %arg15[%c0_96, %c0_97] : memref<64x128xf32, #tpu.memory_space<vmem>>, vector<64x128xf32>
    %c0_98 = arith.constant 0 : index
    %c0_99 = arith.constant 0 : index
    %297 = vector.load %arg7[%c0_98, %c0_99] : memref<128x128xf32, #tpu.memory_space<vmem>>, vector<128x128xf32>
    %cst_100 = arith.constant dense<0.000000e+00> : vector<64x128xf32>
    %298 = tpu.matmul %296, %297, %cst_100 {dimension_numbers = #tpu.dot_dimension_numbers<[1], [0], [0], [1], [0, 0, 1, 1], [], []>} : vector<64x128xf32>, vector<128x128xf32>, vector<64x128xf32> -> vector<64x128xf32>
    %c0_101 = arith.constant 0 : index
    %c0_102 = arith.constant 0 : index
    %299 = vector.load %arg8[%c0_101, %c0_102] : memref<1x128xf32, #tpu.memory_space<vmem>>, vector<1x128xf32>
    %300 = vector.broadcast %299 : vector<1x128xf32> to vector<64x128xf32>
    %301 = arith.addf %298, %300 : vector<64x128xf32>
    %cst_103 = arith.constant dense<0xFF800000> : vector<64xf32>
    %302 = vector.multi_reduction <maximumf>, %301, %cst_103 [1] : vector<64x128xf32> to vector<64xf32>
    %303 = vector.shape_cast %302 : vector<64xf32> to vector<64x1xf32>
    %304 = vector.broadcast %303 : vector<64x1xf32> to vector<64x128xf32>
    %305 = arith.subf %301, %304 : vector<64x128xf32>
    %306 = math.exp %305 : vector<64x128xf32>
    %cst_104 = arith.constant dense<0.000000e+00> : vector<64xf32>
    %307 = vector.multi_reduction <add>, %306, %cst_104 [1] : vector<64x128xf32> to vector<64xf32>
    %308 = vector.shape_cast %307 : vector<64xf32> to vector<64x1xf32>
    %309 = math.log %308 : vector<64x1xf32>
    %310 = vector.broadcast %309 : vector<64x1xf32> to vector<64x128xf32>
    %311 = arith.subf %305, %310 : vector<64x128xf32>
    %cst_105 = arith.constant -0.105360515 : f32
    %312 = vector.broadcast %cst_105 : f32 to vector<64x128xf32>
    %313 = arith.addf %311, %312 : vector<64x128xf32>
    %cst_106 = arith.constant -4.38202667 : f32
    %314 = vector.broadcast %cst_106 : f32 to vector<64x128xf32>
    %315 = arith.maximumf %313, %314 : vector<64x128xf32>
    %316 = arith.subf %313, %315 : vector<64x128xf32>
    %317 = math.exp %316 : vector<64x128xf32>
    %318 = arith.subf %314, %315 : vector<64x128xf32>
    %319 = math.exp %318 : vector<64x128xf32>
    %320 = arith.addf %317, %319 : vector<64x128xf32>
    %321 = math.log %320 : vector<64x128xf32>
    %322 = arith.addf %315, %321 : vector<64x128xf32>
    %c0_107 = arith.constant 0 : index
    %c0_108 = arith.constant 0 : index
    %323 = vector.load %arg11[%c0_107, %c0_108] : memref<64x128xf32, #tpu.memory_space<vmem>>, vector<64x128xf32>
    tpu.vector_store %arg11[%c0_107, %c0_108], %322 {strides = array<i32>} : memref<64x128xf32, #tpu.memory_space<vmem>>, vector<64x128xf32>,
    return
  }
  func.func @transform_0(%arg0: i32) -> (i32, i32) {
    %c0_i32 = arith.constant 0 : i32
    %c0_i32_0 = arith.constant 0 : i32
    return %arg0, %c0_i32 : i32, i32
  }
  func.func @transform_1(%arg0: i32) -> (i32, i32) {
    %c0_i32 = arith.constant 0 : i32
    %c0_i32_0 = arith.constant 0 : i32
    %c0_i32_1 = arith.constant 0 : i32
    return %c0_i32, %c0_i32_0 : i32, i32
  }
  func.func @transform_2(%arg0: i32) -> (i32, i32) {
    %c0_i32 = arith.constant 0 : i32
    %c0_i32_0 = arith.constant 0 : i32
    %c0_i32_1 = arith.constant 0 : i32
    return %c0_i32, %c0_i32_0 : i32, i32
  }
  func.func @transform_3(%arg0: i32) -> (i32, i32) {
    %c0_i32 = arith.constant 0 : i32
    %c0_i32_0 = arith.constant 0 : i32
    %c0_i32_1 = arith.constant 0 : i32
    return %c0_i32, %c0_i32_0 : i32, i32
  }
  func.func @transform_4(%arg0: i32) -> (i32, i32) {
    %c0_i32 = arith.constant 0 : i32
    %c0_i32_0 = arith.constant 0 : i32
    %c0_i32_1 = arith.constant 0 : i32
    return %c0_i32, %c0_i32_0 : i32, i32
  }
  func.func @transform_5(%arg0: i32) -> (i32, i32) {
    %c0_i32 = arith.constant 0 : i32
    %c0_i32_0 = arith.constant 0 : i32
    %c0_i32_1 = arith.constant 0 : i32
    return %c0_i32, %c0_i32_0 : i32, i32
  }
  func.func @transform_6(%arg0: i32) -> (i32, i32) {
    %c0_i32 = arith.constant 0 : i32
    %c0_i32_0 = arith.constant 0 : i32
    %c0_i32_1 = arith.constant 0 : i32
    return %c0_i32, %c0_i32_0 : i32, i32
  }
  func.func @transform_7(%arg0: i32) -> (i32, i32) {
    %c0_i32 = arith.constant 0 : i32
    %c0_i32_0 = arith.constant 0 : i32
    %c0_i32_1 = arith.constant 0 : i32
    return %c0_i32, %c0_i32_0 : i32, i32
  }
  func.func @transform_8(%arg0: i32) -> (i32, i32) {
    %c0_i32 = arith.constant 0 : i32
    %c0_i32_0 = arith.constant 0 : i32
    %c0_i32_1 = arith.constant 0 : i32
    return %c0_i32, %c0_i32_0 : i32, i32
  }
  func.func @transform_9(%arg0: i32) -> (i32, i32) {
    %c0_i32 = arith.constant 0 : i32
    %c0_i32_0 = arith.constant 0 : i32
    %c0_i32_1 = arith.constant 0 : i32
    return %c0_i32, %c0_i32_0 : i32, i32
  }
  func.func @transform_10(%arg0: i32) -> (i32, i32) {
    %c0_i32 = arith.constant 0 : i32
    %c0_i32_0 = arith.constant 0 : i32
    return %arg0, %c0_i32 : i32, i32
  }
  func.func @transform_11(%arg0: i32) -> (i32, i32) {
    %c0_i32 = arith.constant 0 : i32
    %c0_i32_0 = arith.constant 0 : i32
    %c0_i32_1 = arith.constant 0 : i32
    return %c0_i32, %c0_i32_0 : i32, i32
  }
  func.func @transform_12(%arg0: i32) -> (i32, i32) {
    %c0_i32 = arith.constant 0 : i32
    %c0_i32_0 = arith.constant 0 : i32
    %c0_i32_1 = arith.constant 0 : i32
    return %c0_i32, %c0_i32_0 : i32, i32
  }
}

</mosaic_0001>

<llo_original>
// kernel: tpu_custom_call.1
$region0: #{tpu_custom_call.1}
  #allocation0 [shape = 'u32[]', space=smem, size = 0x4, offset = 0x4, fixed_abs, tag = 'smem constant byte address 0x4 - core index']
  #allocation1 [shape = 'u32[144,128]{1,0:T(1,128)}', space=vmem, size = 0x12000, scoped, tag = 'internal scratch']
  #allocation2 [shape = 'f32[64,512]{1,0:T(8,128)}', space=vmem, size = 0x20000, scoped, tag = 'scratch operand']
  #allocation3 [shape = 'f32[64,128]{1,0:T(8,128)}', space=vmem, size = 0x8000, scoped, tag = 'scratch operand']
  %s0 = inlined_call_operand.vmem [shape: f32[64,16], index: 0, kind: input, shape index: {}]
  %s1 = inlined_call_operand.vmem [shape: f32[16,128], index: 1, kind: input, shape index: {}]
  %s2 = inlined_call_operand.vmem [shape: f32[1,128], index: 2, kind: input, shape index: {}]
  %s3 = inlined_call_operand.hbm [shape: f32[128,512], index: 3, kind: input, shape index: {}]
  %s4 = inlined_call_operand.hbm [shape: f32[128,512], index: 4, kind: input, shape index: {}]
  %s5 = inlined_call_operand.vmem [shape: f32[1,512], index: 5, kind: input, shape index: {}]
  %s6 = inlined_call_operand.hbm [shape: f32[128,128], index: 6, kind: input, shape index: {}]
  %s7 = inlined_call_operand.vmem [shape: f32[1,128], index: 7, kind: input, shape index: {}]
  %s8 = inlined_call_operand.vmem [shape: f32[8,128], index: 8, kind: input, shape index: {}]
  %s9 = inlined_call_operand.vmem [shape: f32[8,128], index: 9, kind: input, shape index: {}]
  %s10 = inlined_call_operand.hbm [shape: f32[64,128], index: 10, kind: output, shape index: {0}]
  %s11 = inlined_call_operand.hbm [shape: f32[8,128], index: 11, kind: output, shape index: {1}]
  %s12 = inlined_call_operand.hbm [shape: f32[8,128], index: 12, kind: output, shape index: {2}]
  %13 = xla_tuple %s10, %s11, %s12
  %s14 = sld [smem:[#allocation0]]
  $region82: #{tpu_custom_call.1} parent=0
    _
  %s16 = ssub.s32 1, %s14
  %s17 = scalar_select 0, %s16, %s14
  $region1: #{tpu_custom_call.1} parent=0
    #allocation4 [shape = 'u8[262144]{0}', space=vmem, size = 0x40000, scoped, tag = 'input window, operand 3, single buffered']
    #allocation5 [shape = 's32[1]{0}', space=sflag, size = 0x4, scoped, tag = 'scoped memory for tpu_custom_call.1']
    #allocation6 [shape = 's32[1]{0}', space=sflag, size = 0x4, scoped, tag = 'scoped memory for tpu_custom_call.1']
    #allocation7 [shape = 'u8[262144]{0}', space=vmem, size = 0x40000, scoped, tag = 'input window, operand 4, single buffered']
    #allocation8 [shape = 's32[1]{0}', space=sflag, size = 0x4, scoped, tag = 'scoped memory for tpu_custom_call.1']
    #allocation9 [shape = 'u8[65536]{0}', space=vmem, size = 0x10000, scoped, tag = 'input window, operand 6, single buffered']
    #allocation10 [shape = 'u8[32768]{0}', space=vmem, size = 0x8000, scoped, tag = 'output window, operand 0, single buffered']
    #allocation11 [shape = 'u8[4096]{0}', space=vmem, size = 0x1000, scoped, tag = 'output window, operand 1, single buffered']
    #allocation12 [shape = 's32[1]{0}', space=sflag, size = 0x4, scoped, tag = 'scoped memory for tpu_custom_call.1']
    #allocation13 [shape = 'u8[4096]{0}', space=vmem, size = 0x1000, scoped, tag = 'output window, operand 2, single buffered']
    %18 = vsyncpa [#allocation5], 0
    %19 = vsyncpa [#allocation8], 0
    %20 = vsyncpa [#allocation6], 0
    %21 = vsyncpa [#allocation12], 0
    // Predicated region
    $region2: #{tpu_custom_call.1} parent=1 // pred_check
      _
    $region3: #{tpu_custom_call.1} parent=1 // pred_check_branch
      %23 = sbr.rel (0) target = $region5
    $region4: #{tpu_custom_call.1} parent=1 // pred_region
      _
    $region5: #{tpu_custom_call.1} parent=1 // pred_fallthru
      _
    // Predicated region
    $region6: #{tpu_custom_call.1} parent=1 // pred_check
      _
    $region7: #{tpu_custom_call.1} parent=1 // pred_check_branch
      %25 = sbr.rel (0) target = $region9
    $region8: #{tpu_custom_call.1} parent=1 // pred_region
      _
    $region9: #{tpu_custom_call.1} parent=1 // pred_fallthru
      _
    // Predicated region
    $region10: #{tpu_custom_call.1} parent=1 // pred_check
      _
    $region11: #{tpu_custom_call.1} parent=1 // pred_check_branch
      %27 = sbr.rel (0) target = $region13
    $region12: #{tpu_custom_call.1} parent=1 // pred_region
      _
    $region13: #{tpu_custom_call.1} parent=1 // pred_fallthru
      _
    // Predicated region
    $region14: #{tpu_custom_call.1} parent=1 // pred_check
      _
    $region15: #{tpu_custom_call.1} parent=1 // pred_check_branch
      %29 = sbr.rel (0) target = $region17
    $region16: #{tpu_custom_call.1} parent=1 // pred_region
      %s31 = ssub.s32 8192, 8192
      %32 = vsyncadd [#allocation5], %s31
      %s33 = sshll.u32 [#allocation4], 4
      %s34 = int_to_ptr.vmem [resolvable:$true] %s33
      %39 = dma.hbm_to_vmem [thread:$0]  %s3, 8192, %s34, [#allocation5], 512, 512, 32
    $region17: #{tpu_custom_call.1} parent=1 // pred_fallthru
      _
    // Predicated region
    $region18: #{tpu_custom_call.1} parent=1 // pred_check
      _
    $region19: #{tpu_custom_call.1} parent=1 // pred_check_branch
      %41 = sbr.rel (0) target = $region21
    $region20: #{tpu_custom_call.1} parent=1 // pred_region
      %s43 = ssub.s32 8192, 8192
      %44 = vsyncadd [#allocation8], %s43
      %s45 = sshll.u32 [#allocation7], 4
      %s46 = int_to_ptr.vmem [resolvable:$true] %s45
      %51 = dma.hbm_to_vmem [thread:$0]  %s4, 8192, %s46, [#allocation8], 512, 512, 32
    $region21: #{tpu_custom_call.1} parent=1 // pred_fallthru
      _
    // Predicated region
    $region22: #{tpu_custom_call.1} parent=1 // pred_check
      _
    $region23: #{tpu_custom_call.1} parent=1 // pred_check_branch
      %53 = sbr.rel (0) target = $region25
    $region24: #{tpu_custom_call.1} parent=1 // pred_region
      _
    $region25: #{tpu_custom_call.1} parent=1 // pred_fallthru
      _
    // Predicated region
    $region26: #{tpu_custom_call.1} parent=1 // pred_check
      _
    $region27: #{tpu_custom_call.1} parent=1 // pred_check_branch
      %55 = sbr.rel (0) target = $region29
    $region28: #{tpu_custom_call.1} parent=1 // pred_region
      %s57 = ssub.s32 2048, 2048
      %58 = vsyncadd [#allocation8], %s57
      %s59 = sshll.u32 [#allocation9], 4
      %s60 = int_to_ptr.vmem [resolvable:$true] %s59
      %65 = dma.hbm_to_vmem [thread:$0]  %s6, 2048, %s60, [#allocation8], 128, 128, 8
    $region29: #{tpu_custom_call.1} parent=1 // pred_fallthru
      _
    // Predicated region
    $region30: #{tpu_custom_call.1} parent=1 // pred_check
      _
    $region31: #{tpu_custom_call.1} parent=1 // pred_check_branch
      %67 = sbr.rel (0) target = $region33
    $region32: #{tpu_custom_call.1} parent=1 // pred_region
      _
    $region33: #{tpu_custom_call.1} parent=1 // pred_fallthru
      _
    // Predicated region
    $region34: #{tpu_custom_call.1} parent=1 // pred_check
      _
    $region35: #{tpu_custom_call.1} parent=1 // pred_check_branch
      %69 = sbr.rel (0) target = $region37
    $region36: #{tpu_custom_call.1} parent=1 // pred_region
      _
    $region37: #{tpu_custom_call.1} parent=1 // pred_fallthru
      _
    // Predicated region
    $region38: #{tpu_custom_call.1} parent=1 // pred_check
      _
    $region39: #{tpu_custom_call.1} parent=1 // pred_check_branch
      %71 = sbr.rel (0) target = $region41
    $region40: #{tpu_custom_call.1} parent=1 // pred_region
      _
    $region41: #{tpu_custom_call.1} parent=1 // pred_fallthru
      _
    // Predicated region
    $region42: #{tpu_custom_call.1} parent=1 // pred_check
      _
    $region43: #{tpu_custom_call.1} parent=1 // pred_check_branch
      %73 = sbr.rel (0) target = $region45
    $region44: #{tpu_custom_call.1} parent=1 // pred_region
      %74 = dma.done [#allocation5], 8192
    $region45: #{tpu_custom_call.1} parent=1 // pred_fallthru
      _
    // Predicated region
    $region46: #{tpu_custom_call.1} parent=1 // pred_check
      _
    $region47: #{tpu_custom_call.1} parent=1 // pred_check_branch
      %76 = sbr.rel (0) target = $region49
    $region48: #{tpu_custom_call.1} parent=1 // pred_region
      %77 = dma.done [#allocation8], 8192
    $region49: #{tpu_custom_call.1} parent=1 // pred_fallthru
      _
    // Predicated region
    $region50: #{tpu_custom_call.1} parent=1 // pred_check
      _
    $region51: #{tpu_custom_call.1} parent=1 // pred_check_branch
      %79 = sbr.rel (0) target = $region53
    $region52: #{tpu_custom_call.1} parent=1 // pred_region
      %80 = dma.done [#allocation8], 2048
    $region53: #{tpu_custom_call.1} parent=1 // pred_fallthru
      _
    %p81 = scmp.eq.s32.totalorder 0, 0
    // Predicated region
    $region54: #{tpu_custom_call.1} parent=1 // pred_check
      %p82 = pneg %p81
    $region55: #{tpu_custom_call.1} parent=1 // pred_check_branch
      %84 = sbr.rel (%p82) target = $region57
    $region56: #{tpu_custom_call.1} parent=1 // pred_region
      %v85 = vld [vmem:[%s8] sm:$0xff]
      %86 = vst [vmem:[#allocation11] sm:$0xff] %v85
      %v87 = vld [vmem:[%s9] sm:$0xff]
      %88 = vst [vmem:[#allocation13] sm:$0xff] %v87
    $region57: #{tpu_custom_call.1} parent=1 // pred_fallthru
      _
    %v89 = vld [vmem:[%s0] sm:$0xff]
    %v90 = vld [vmem:[%s0 + $0x8] sm:$0xff]
    %v91 = vld [vmem:[%s0 + $0x10] sm:$0xff]
    %v92 = vld [vmem:[%s0 + $0x18] sm:$0xff]
    %v93 = vld [vmem:[%s0 + $0x20] sm:$0xff]
    %v94 = vld [vmem:[%s0 + $0x28] sm:$0xff]
    %v95 = vld [vmem:[%s0 + $0x30] sm:$0xff]
    %v96 = vld [vmem:[%s0 + $0x38] sm:$0xff]
    %v97 = vld [vmem:[%s1] sm:$0xff]
    %v98 = vld [vmem:[%s1 + $0x8] sm:$0xff]
    %v99 = vld [vmem:[%s2] sm:$0x1]
    %v101 = vlaneseq
    %v102 = vshrl.u32 %v101, 7
    %v103 = vsub.s32 0, %v102
    %v104 = vrot.slane %v99, %v103
    %vm106 = vcmask 130048
    %v108 = vsel %vm106, %v89, 0
    %v111 = vsel %vm106, %v90, 0
    %v114 = vsel %vm106, %v91, 0
    %v117 = vsel %vm106, %v92, 0
    %v120 = vsel %vm106, %v93, 0
    %v123 = vsel %vm106, %v94, 0
    %v126 = vsel %vm106, %v95, 0
    %v129 = vsel %vm106, %v96, 0
    %131 = vmatprep.subr.mxu0 0.0
    %132 = vmatpush1.msra.mxu0 0.0
    %133 = vmatprep.subr.mxu0 0.0
    %134 = vmatpush1.msra.mxu0 0.0
    %135 = vmatprep.subr.mxu0 0.0
    %136 = vmatpush1.msra.mxu0 0.0
    %137 = vmatprep.subr.mxu0 0.0
    %138 = vmatpush1.msra.mxu0 0.0
    %139 = vmatprep.subr.mxu0 0.0
    %140 = vmatpush1.msra.mxu0 0.0
    %141 = vmatprep.subr.mxu0 0.0
    %142 = vmatpush1.msra.mxu0 0.0
    %143 = vmatprep.subr.mxu0 0.0
    %144 = vmatpush1.msra.mxu0 0.0
    %145 = vmatprep.subr.mxu0 0.0
    %146 = vmatpush1.msra.mxu0 0.0
    %147 = vmatprep.subr.mxu0 0.0
    %148 = vmatpush1.msra.mxu0 0.0
    %149 = vmatprep.subr.mxu0 0.0
    %150 = vmatpush1.msra.mxu0 0.0
    %151 = vmatprep.subr.mxu0 0.0
    %152 = vmatpush1.msra.mxu0 0.0
    %153 = vmatprep.subr.mxu0 0.0
    %154 = vmatpush1.msra.mxu0 0.0
    %155 = vmatprep.subr.mxu0 0.0
    %156 = vmatpush1.msra.mxu0 0.0
    %157 = vmatprep.subr.mxu0 0.0
    %158 = vmatpush1.msra.mxu0 0.0
    %159 = vmatprep.subr.mxu0 0.0
    %160 = vmatpush1.msra.mxu0 %v98
    %161 = vmatprep.subr.mxu0 0.0
    %162 = vmatpush1.msra.mxu0 %v97
    %163 = vmatprep.subr.mxu0 0.0
    %164 = vmatpush2.msra.mxu0 0.0
    %165 = vmatprep.subr.mxu0 0.0
    %166 = vmatpush2.msra.mxu0 0.0
    %167 = vmatprep.subr.mxu0 0.0
    %168 = vmatpush2.msra.mxu0 0.0
    %169 = vmatprep.subr.mxu0 0.0
    %170 = vmatpush2.msra.mxu0 0.0
    %171 = vmatprep.subr.mxu0 0.0
    %172 = vmatpush2.msra.mxu0 0.0
    %173 = vmatprep.subr.mxu0 0.0
    %174 = vmatpush2.msra.mxu0 0.0
    %175 = vmatprep.subr.mxu0 0.0
    %176 = vmatpush2.msra.mxu0 0.0
    %177 = vmatprep.subr.mxu0 0.0
    %178 = vmatpush2.msra.mxu0 0.0
    %179 = vmatprep.subr.mxu0 0.0
    %180 = vmatpush2.msra.mxu0 0.0
    %181 = vmatprep.subr.mxu0 0.0
    %182 = vmatpush2.msra.mxu0 0.0
    %183 = vmatprep.subr.mxu0 0.0
    %184 = vmatpush2.msra.mxu0 0.0
    %185 = vmatprep.subr.mxu0 0.0
    %186 = vmatpush2.msra.mxu0 0.0
    %187 = vmatprep.subr.mxu0 0.0
    %188 = vmatpush2.msra.mxu0 0.0
    %189 = vmatprep.subr.mxu0 0.0
    %190 = vmatpush2.msra.mxu0 0.0
    %191 = vmatprep.subr.mxu0 0.0
    %192 = vmatpush2.msra.mxu0 0.0
    %193 = vmatprep.subr.mxu0 0.0
    %194 = vmatpush2.msra.mxu0 0.0
    %195 = vmatprep.mubr.f32.mxu0 0.0
    %196 = vmatmul.mubr.f32.gmra.mxu0 %v108
    %v197 = vpop.f32.mrf.mxu0
    %v198 = vadd.f32 %v104, %v197
    %v199 = vpop.f32.mrf.mxu0
    %200 = vmatprep.mubr.f32.mxu0 0.0
    %201 = vmatmul.mubr.f32.gmra.mxu0 %v111
    %v202 = vpop.f32.mrf.mxu0
    %v203 = vadd.f32 %v104, %v202
    %v204 = vpop.f32.mrf.mxu0
    %205 = vmatprep.mubr.f32.mxu0 0.0
    %206 = vmatmul.mubr.f32.gmra.mxu0 %v114
    %v207 = vpop.f32.mrf.mxu0
    %v208 = vadd.f32 %v104, %v207
    %v209 = vpop.f32.mrf.mxu0
    %210 = vmatprep.mubr.f32.mxu0 0.0
    %211 = vmatmul.mubr.f32.gmra.mxu0 %v117
    %v212 = vpop.f32.mrf.mxu0
    %v213 = vadd.f32 %v104, %v212
    %v214 = vpop.f32.mrf.mxu0
    %215 = vmatprep.mubr.f32.mxu0 0.0
    %216 = vmatmul.mubr.f32.gmra.mxu0 %v120
    %v217 = vpop.f32.mrf.mxu0
    %v218 = vadd.f32 %v104, %v217
    %v219 = vpop.f32.mrf.mxu0
    %220 = vmatprep.mubr.f32.mxu0 0.0
    %221 = vmatmul.mubr.f32.gmra.mxu0 %v123
    %v222 = vpop.f32.mrf.mxu0
    %v223 = vadd.f32 %v104, %v222
    %v224 = vpop.f32.mrf.mxu0
    %225 = vmatprep.mubr.f32.mxu0 0.0
    %226 = vmatmul.mubr.f32.gmra.mxu0 %v126
    %v227 = vpop.f32.mrf.mxu0
    %v228 = vadd.f32 %v104, %v227
    %v229 = vpop.f32.mrf.mxu0
    %230 = vmatprep.mubr.f32.mxu0 0.0
    %231 = vmatmul.mubr.f32.gmra.mxu0 %v129
    %v232 = vpop.f32.mrf.mxu0
    %v233 = vadd.f32 %v104, %v232
    %v234 = vpop.f32.mrf.mxu0
    %235 = vdwg.mxu0
    %vm236 = vcmp.ge.f32.partialorder %v198, 0.0
    %vm237 = vcmp.ge.f32.partialorder %v203, 0.0
    %vm238 = vcmp.ge.f32.partialorder %v208, 0.0
    %vm239 = vcmp.ge.f32.partialorder %v213, 0.0
    %vm240 = vcmp.ge.f32.partialorder %v218, 0.0
    %vm241 = vcmp.ge.f32.partialorder %v223, 0.0
    %vm242 = vcmp.ge.f32.partialorder %v228, 0.0
    %vm243 = vcmp.ge.f32.partialorder %v233, 0.0
    %v244 = vmul.f32 %v198, 0.01
    %v245 = vmul.f32 %v203, 0.01
    %v246 = vmul.f32 %v208, 0.01
    %v247 = vmul.f32 %v213, 0.01
    %v248 = vmul.f32 %v218, 0.01
    %v249 = vmul.f32 %v223, 0.01
    %v250 = vmul.f32 %v228, 0.01
    %v251 = vmul.f32 %v233, 0.01
    %v252 = vsel %vm236, %v198, %v244
    %v253 = vsel %vm237, %v203, %v245
    %v254 = vsel %vm238, %v208, %v246
    %v255 = vsel %vm239, %v213, %v247
    %v256 = vsel %vm240, %v218, %v248
    %v257 = vsel %vm241, %v223, %v249
    %v258 = vsel %vm242, %v228, %v250
    %v259 = vsel %vm243, %v233, %v251
    %v260 = vld [vmem:[#allocation4] sm:$0xff]
    %v261 = vld [vmem:[#allocation4 + $0x8] sm:$0xff]
    %v262 = vld [vmem:[#allocation4 + $0x10] sm:$0xff]
    %v263 = vld [vmem:[#allocation4 + $0x18] sm:$0xff]
    %v264 = vld [vmem:[#allocation4 + $0x20] sm:$0xff]
    %v265 = vld [vmem:[#allocation4 + $0x28] sm:$0xff]
    %v266 = vld [vmem:[#allocation4 + $0x30] sm:$0xff]
    %v267 = vld [vmem:[#allocation4 + $0x38] sm:$0xff]
    %v268 = vld [vmem:[#allocation4 + $0x40] sm:$0xff]
    %v269 = vld [vmem:[#allocation4 + $0x48] sm:$0xff]
    %v270 = vld [vmem:[#allocation4 + $0x50] sm:$0xff]
    %v271 = vld [vmem:[#allocation4 + $0x58] sm:$0xff]
    %v272 = vld [vmem:[#allocation4 + $0x60] sm:$0xff]
    %v273 = vld [vmem:[#allocation4 + $0x68] sm:$0xff]
    %v274 = vld [vmem:[#allocation4 + $0x70] sm:$0xff]
    %v275 = vld [vmem:[#allocation4 + $0x78] sm:$0xff]
    %v276 = vld [vmem:[#allocation4 + $0x80] sm:$0xff]
    %v277 = vld [vmem:[#allocation4 + $0x88] sm:$0xff]
    %v278 = vld [vmem:[#allocation4 + $0x90] sm:$0xff]
    %v279 = vld [vmem:[#allocation4 + $0x98] sm:$0xff]
    %v280 = vld [vmem:[#allocation4 + $0xa0] sm:$0xff]
    %v281 = vld [vmem:[#allocation4 + $0xa8] sm:$0xff]
    %v282 = vld [vmem:[#allocation4 + $0xb0] sm:$0xff]
    %v283 = vld [vmem:[#allocation4 + $0xb8] sm:$0xff]
    %v284 = vld [vmem:[#allocation4 + $0xc0] sm:$0xff]
    %v285 = vld [vmem:[#allocation4 + $0xc8] sm:$0xff]
    %v286 = vld [vmem:[#allocation4 + $0xd0] sm:$0xff]
    %v287 = vld [vmem:[#allocation4 + $0xd8] sm:$0xff]
    %v288 = vld [vmem:[#allocation4 + $0xe0] sm:$0xff]
    %v289 = vld [vmem:[#allocation4 + $0xe8] sm:$0xff]
    %v290 = vld [vmem:[#allocation4 + $0xf0] sm:$0xff]
    %v291 = vld [vmem:[#allocation4 + $0xf8] sm:$0xff]
    %v292 = vld [vmem:[#allocation4 + $0x100] sm:$0xff]
    %v293 = vld [vmem:[#allocation4 + $0x108] sm:$0xff]
    %v294 = vld [vmem:[#allocation4 + $0x110] sm:$0xff]
    %v295 = vld [vmem:[#allocation4 + $0x118] sm:$0xff]
    %v296 = vld [vmem:[#allocation4 + $0x120] sm:$0xff]
    %v297 = vld [vmem:[#allocation4 + $0x128] sm:$0xff]
    %v298 = vld [vmem:[#allocation4 + $0x130] sm:$0xff]
    %v299 = vld [vmem:[#allocation4 + $0x138] sm:$0xff]
    %v300 = vld [vmem:[#allocation4 + $0x140] sm:$0xff]
    %v301 = vld [vmem:[#allocation4 + $0x148] sm:$0xff]
    %v302 = vld [vmem:[#allocation4 + $0x150] sm:$0xff]
    %v303 = vld [vmem:[#allocation4 + $0x158] sm:$0xff]
    %v304 = vld [vmem:[#allocation4 + $0x160] sm:$0xff]
    %v305 = vld [vmem:[#allocation4 + $0x168] sm:$0xff]
    %v306 = vld [vmem:[#allocation4 + $0x170] sm:$0xff]
    %v307 = vld [vmem:[#allocation4 + $0x178] sm:$0xff]
    %v308 = vld [vmem:[#allocation4 + $0x180] sm:$0xff]
    %v309 = vld [vmem:[#allocation4 + $0x188] sm:$0xff]
    %v310 = vld [vmem:[#allocation4 + $0x190] sm:$0xff]
    %v311 = vld [vmem:[#allocation4 + $0x198] sm:$0xff]
    %v312 = vld [vmem:[#allocation4 + $0x1a0] sm:$0xff]
    %v313 = vld [vmem:[#allocation4 + $0x1a8] sm:$0xff]
    %v314 = vld [vmem:[#allocation4 + $0x1b0] sm:$0xff]
    %v315 = vld [vmem:[#allocation4 + $0x1b8] sm:$0xff]
    %v316 = vld [vmem:[#allocation4 + $0x1c0] sm:$0xff]
    %v317 = vld [vmem:[#allocation4 + $0x1c8] sm:$0xff]
    %v318 = vld [vmem:[#allocation4 + $0x1d0] sm:$0xff]
    %v319 = vld [vmem:[#allocation4 + $0x1d8] sm:$0xff]
    %v320 = vld [vmem:[#allocation4 + $0x1e0] sm:$0xff]
    %v321 = vld [vmem:[#allocation4 + $0x1e8] sm:$0xff]
    %v322 = vld [vmem:[#allocation4 + $0x1f0] sm:$0xff]
    %v323 = vld [vmem:[#allocation4 + $0x1f8] sm:$0xff]
    %v324 = vld [vmem:[%s5] sm:$0xf]
    %v326 = vlaneseq
    %v327 = vshrl.u32 %v326, 7
    %v328 = vsub.s32 0, %v327
    %v329 = vrot.slane %v324, %v328
    %v330 = vlaneseq
    %v331 = vshrl.u32 %v330, 7
    %v332 = vsub.s32 1, %v331
    %v333 = vrot.slane %v324, %v332
    %v334 = vlaneseq
    %v335 = vshrl.u32 %v334, 7
    %v336 = vsub.s32 2, %v335
    %v337 = vrot.slane %v324, %v336
    %v338 = vlaneseq
    %v339 = vshrl.u32 %v338, 7
    %v340 = vsub.s32 3, %v339
    %v341 = vrot.slane %v324, %v340
    %346 = vmatprep.subr.mxu0 %v321
    %347 = vmatpush1.msra.mxu0 %v320
    %348 = vmatprep.subr.mxu0 %v317
    %349 = vmatpush1.msra.mxu0 %v316
    %350 = vmatprep.subr.mxu0 %v313
    %351 = vmatpush1.msra.mxu0 %v312
    %352 = vmatprep.subr.mxu0 %v309
    %353 = vmatpush1.msra.mxu0 %v308
    %354 = vmatprep.subr.mxu0 %v305
    %355 = vmatpush1.msra.mxu0 %v304
    %356 = vmatprep.subr.mxu0 %v301
    %357 = vmatpush1.msra.mxu0 %v300
    %358 = vmatprep.subr.mxu0 %v297
    %359 = vmatpush1.msra.mxu0 %v296
    %360 = vmatprep.subr.mxu0 %v293
    %361 = vmatpush1.msra.mxu0 %v292
    %362 = vmatprep.subr.mxu0 %v289
    %363 = vmatpush1.msra.mxu0 %v288
    %364 = vmatprep.subr.mxu0 %v285
    %365 = vmatpush1.msra.mxu0 %v284
    %366 = vmatprep.subr.mxu0 %v281
    %367 = vmatpush1.msra.mxu0 %v280
    %368 = vmatprep.subr.mxu0 %v277
    %369 = vmatpush1.msra.mxu0 %v276
    %370 = vmatprep.subr.mxu0 %v273
    %371 = vmatpush1.msra.mxu0 %v272
    %372 = vmatprep.subr.mxu0 %v269
    %373 = vmatpush1.msra.mxu0 %v268
    %374 = vmatprep.subr.mxu0 %v265
    %375 = vmatpush1.msra.mxu0 %v264
    %376 = vmatprep.subr.mxu0 %v261
    %377 = vmatpush1.msra.mxu0 %v260
    %378 = vmatprep.subr.mxu0 0.0
    %379 = vmatpush2.msra.mxu0 0.0
    %380 = vmatprep.subr.mxu0 0.0
    %381 = vmatpush2.msra.mxu0 0.0
    %382 = vmatprep.subr.mxu0 0.0
    %383 = vmatpush2.msra.mxu0 0.0
    %384 = vmatprep.subr.mxu0 0.0
    %385 = vmatpush2.msra.mxu0 0.0
    %386 = vmatprep.subr.mxu0 0.0
    %387 = vmatpush2.msra.mxu0 0.0
    %388 = vmatprep.subr.mxu0 0.0
    %389 = vmatpush2.msra.mxu0 0.0
    %390 = vmatprep.subr.mxu0 0.0
    %391 = vmatpush2.msra.mxu0 0.0
    %392 = vmatprep.subr.mxu0 0.0
    %393 = vmatpush2.msra.mxu0 0.0
    %394 = vmatprep.subr.mxu0 0.0
    %395 = vmatpush2.msra.mxu0 0.0
    %396 = vmatprep.subr.mxu0 0.0
    %397 = vmatpush2.msra.mxu0 0.0
    %398 = vmatprep.subr.mxu0 0.0
    %399 = vmatpush2.msra.mxu0 0.0
    %400 = vmatprep.subr.mxu0 0.0
    %401 = vmatpush2.msra.mxu0 0.0
    %402 = vmatprep.subr.mxu0 0.0
    %403 = vmatpush2.msra.mxu0 0.0
    %404 = vmatprep.subr.mxu0 0.0
    %405 = vmatpush2.msra.mxu0 0.0
    %406 = vmatprep.subr.mxu0 0.0
    %407 = vmatpush2.msra.mxu0 0.0
    %408 = vmatprep.subr.mxu0 0.0
    %409 = vmatpush2.msra.mxu0 0.0
    %410 = vmatprep.mubr.f32.mxu0 0.0
    %411 = vmatmul.mubr.f32.gmra.mxu0 %v252
    %v412 = vpop.f32.mrf.mxu0
    %v413 = vadd.f32 %v329, %v412
    %v414 = vpop.f32.mrf.mxu0
    %v415 = vadd.f32 %v333, %v414
    %416 = vmatprep.mubr.f32.mxu0 0.0
    %417 = vmatmul.mubr.f32.gmra.mxu0 %v253
    %v418 = vpop.f32.mrf.mxu0
    %v419 = vadd.f32 %v329, %v418
    %v420 = vpop.f32.mrf.mxu0
    %v421 = vadd.f32 %v333, %v420
    %422 = vmatprep.mubr.f32.mxu0 0.0
    %423 = vmatmul.mubr.f32.gmra.mxu0 %v254
    %v424 = vpop.f32.mrf.mxu0
    %v425 = vadd.f32 %v329, %v424
    %v426 = vpop.f32.mrf.mxu0
    %v427 = vadd.f32 %v333, %v426
    %428 = vmatprep.mubr.f32.mxu0 0.0
    %429 = vmatmul.mubr.f32.gmra.mxu0 %v255
    %v430 = vpop.f32.mrf.mxu0
    %v431 = vadd.f32 %v329, %v430
    %v432 = vpop.f32.mrf.mxu0
    %v433 = vadd.f32 %v333, %v432
    %434 = vmatprep.mubr.f32.mxu0 0.0
    %435 = vmatmul.mubr.f32.gmra.mxu0 %v256
    %v436 = vpop.f32.mrf.mxu0
    %v437 = vadd.f32 %v329, %v436
    %v438 = vpop.f32.mrf.mxu0
    %v439 = vadd.f32 %v333, %v438
    %440 = vmatprep.mubr.f32.mxu0 0.0
    %441 = vmatmul.mubr.f32.gmra.mxu0 %v257
    %v442 = vpop.f32.mrf.mxu0
    %v443 = vadd.f32 %v329, %v442
    %v444 = vpop.f32.mrf.mxu0
    %v445 = vadd.f32 %v333, %v444
    %446 = vmatprep.mubr.f32.mxu0 0.0
    %447 = vmatmul.mubr.f32.gmra.mxu0 %v258
    %v448 = vpop.f32.mrf.mxu0
    %v449 = vadd.f32 %v329, %v448
    %v450 = vpop.f32.mrf.mxu0
    %v451 = vadd.f32 %v333, %v450
    %452 = vmatprep.mubr.f32.mxu0 0.0
    %453 = vmatmul.mubr.f32.gmra.mxu0 %v259
    %v454 = vpop.f32.mrf.mxu0
    %v455 = vadd.f32 %v329, %v454
    %v456 = vpop.f32.mrf.mxu0
    %v457 = vadd.f32 %v333, %v456
    %458 = vdwg.mxu0
    %459 = vmatprep.subr.mxu0 %v323
    %460 = vmatpush1.msra.mxu0 %v322
    %461 = vmatprep.subr.mxu0 %v319
    %462 = vmatpush1.msra.mxu0 %v318
    %463 = vmatprep.subr.mxu0 %v315
    %464 = vmatpush1.msra.mxu0 %v314
    %465 = vmatprep.subr.mxu0 %v311
    %466 = vmatpush1.msra.mxu0 %v310
    %467 = vmatprep.subr.mxu0 %v307
    %468 = vmatpush1.msra.mxu0 %v306
    %469 = vmatprep.subr.mxu0 %v303
    %470 = vmatpush1.msra.mxu0 %v302
    %471 = vmatprep.subr.mxu0 %v299
    %472 = vmatpush1.msra.mxu0 %v298
    %473 = vmatprep.subr.mxu0 %v295
    %474 = vmatpush1.msra.mxu0 %v294
    %475 = vmatprep.subr.mxu0 %v291
    %476 = vmatpush1.msra.mxu0 %v290
    %477 = vmatprep.subr.mxu0 %v287
    %478 = vmatpush1.msra.mxu0 %v286
    %479 = vmatprep.subr.mxu0 %v283
    %480 = vmatpush1.msra.mxu0 %v282
    %481 = vmatprep.subr.mxu0 %v279
    %482 = vmatpush1.msra.mxu0 %v278
    %483 = vmatprep.subr.mxu0 %v275
    %484 = vmatpush1.msra.mxu0 %v274
    %485 = vmatprep.subr.mxu0 %v271
    %486 = vmatpush1.msra.mxu0 %v270
    %487 = vmatprep.subr.mxu0 %v267
    %488 = vmatpush1.msra.mxu0 %v266
    %489 = vmatprep.subr.mxu0 %v263
    %490 = vmatpush1.msra.mxu0 %v262
    %491 = vmatprep.subr.mxu0 0.0
    %492 = vmatpush2.msra.mxu0 0.0
    %493 = vmatprep.subr.mxu0 0.0
    %494 = vmatpush2.msra.mxu0 0.0
    %495 = vmatprep.subr.mxu0 0.0
    %496 = vmatpush2.msra.mxu0 0.0
    %497 = vmatprep.subr.mxu0 0.0
    %498 = vmatpush2.msra.mxu0 0.0
    %499 = vmatprep.subr.mxu0 0.0
    %500 = vmatpush2.msra.mxu0 0.0
    %501 = vmatprep.subr.mxu0 0.0
    %502 = vmatpush2.msra.mxu0 0.0
    %503 = vmatprep.subr.mxu0 0.0
    %504 = vmatpush2.msra.mxu0 0.0
    %505 = vmatprep.subr.mxu0 0.0
    %506 = vmatpush2.msra.mxu0 0.0
    %507 = vmatprep.subr.mxu0 0.0
    %508 = vmatpush2.msra.mxu0 0.0
    %509 = vmatprep.subr.mxu0 0.0
    %510 = vmatpush2.msra.mxu0 0.0
    %511 = vmatprep.subr.mxu0 0.0
    %512 = vmatpush2.msra.mxu0 0.0
    %513 = vmatprep.subr.mxu0 0.0
    %514 = vmatpush2.msra.mxu0 0.0
    %515 = vmatprep.subr.mxu0 0.0
    %516 = vmatpush2.msra.mxu0 0.0
    %517 = vmatprep.subr.mxu0 0.0
    %518 = vmatpush2.msra.mxu0 0.0
    %519 = vmatprep.subr.mxu0 0.0
    %520 = vmatpush2.msra.mxu0 0.0
    %521 = vmatprep.subr.mxu0 0.0
    %522 = vmatpush2.msra.mxu0 0.0
    %523 = vmatprep.mubr.f32.mxu0 0.0
    %524 = vmatmul.mubr.f32.gmra.mxu0 %v252
    %v525 = vpop.f32.mrf.mxu0
    %v526 = vadd.f32 %v337, %v525
    %v527 = vpop.f32.mrf.mxu0
    %v528 = vadd.f32 %v341, %v527
    %529 = vmatprep.mubr.f32.mxu0 0.0
    %530 = vmatmul.mubr.f32.gmra.mxu0 %v253
    %v531 = vpop.f32.mrf.mxu0
    %v532 = vadd.f32 %v337, %v531
    %v533 = vpop.f32.mrf.mxu0
    %v534 = vadd.f32 %v341, %v533
    %535 = vmatprep.mubr.f32.mxu0 0.0
    %536 = vmatmul.mubr.f32.gmra.mxu0 %v254
    %v537 = vpop.f32.mrf.mxu0
    %v538 = vadd.f32 %v337, %v537
    %v539 = vpop.f32.mrf.mxu0
    %v540 = vadd.f32 %v341, %v539
    %541 = vmatprep.mubr.f32.mxu0 0.0
    %542 = vmatmul.mubr.f32.gmra.mxu0 %v255
    %v543 = vpop.f32.mrf.mxu0
    %v544 = vadd.f32 %v337, %v543
    %v545 = vpop.f32.mrf.mxu0
    %v546 = vadd.f32 %v341, %v545
    %547 = vmatprep.mubr.f32.mxu0 0.0
    %548 = vmatmul.mubr.f32.gmra.mxu0 %v256
    %v549 = vpop.f32.mrf.mxu0
    %v550 = vadd.f32 %v337, %v549
    %v551 = vpop.f32.mrf.mxu0
    %v552 = vadd.f32 %v341, %v551
    %553 = vmatprep.mubr.f32.mxu0 0.0
    %554 = vmatmul.mubr.f32.gmra.mxu0 %v257
    %v555 = vpop.f32.mrf.mxu0
    %v556 = vadd.f32 %v337, %v555
    %v557 = vpop.f32.mrf.mxu0
    %v558 = vadd.f32 %v341, %v557
    %559 = vmatprep.mubr.f32.mxu0 0.0
    %560 = vmatmul.mubr.f32.gmra.mxu0 %v258
    %v561 = vpop.f32.mrf.mxu0
    %v562 = vadd.f32 %v337, %v561
    %v563 = vpop.f32.mrf.mxu0
    %v564 = vadd.f32 %v341, %v563
    %565 = vmatprep.mubr.f32.mxu0 0.0
    %566 = vmatmul.mubr.f32.gmra.mxu0 %v259
    %v567 = vpop.f32.mrf.mxu0
    %v568 = vadd.f32 %v337, %v567
    %v569 = vpop.f32.mrf.mxu0
    %v570 = vadd.f32 %v341, %v569
    %571 = vdwg.mxu0
    %572 = vst [vmem:[#allocation2] sm:$0xff] %v413
    %573 = vst [vmem:[#allocation2 + $0x8] sm:$0xff] %v415
    %574 = vst [vmem:[#allocation2 + $0x10] sm:$0xff] %v526
    %575 = vst [vmem:[#allocation2 + $0x18] sm:$0xff] %v528
    %576 = vst [vmem:[#allocation2 + $0x20] sm:$0xff] %v419
    %577 = vst [vmem:[#allocation2 + $0x28] sm:$0xff] %v421
    %578 = vst [vmem:[#allocation2 + $0x30] sm:$0xff] %v532
    %579 = vst [vmem:[#allocation2 + $0x38] sm:$0xff] %v534
    %580 = vst [vmem:[#allocation2 + $0x40] sm:$0xff] %v425
    %581 = vst [vmem:[#allocation2 + $0x48] sm:$0xff] %v427
    %582 = vst [vmem:[#allocation2 + $0x50] sm:$0xff] %v538
    %583 = vst [vmem:[#allocation2 + $0x58] sm:$0xff] %v540
    %584 = vst [vmem:[#allocation2 + $0x60] sm:$0xff] %v431
    %585 = vst [vmem:[#allocation2 + $0x68] sm:$0xff] %v433
    %586 = vst [vmem:[#allocation2 + $0x70] sm:$0xff] %v544
    %587 = vst [vmem:[#allocation2 + $0x78] sm:$0xff] %v546
    %588 = vst [vmem:[#allocation2 + $0x80] sm:$0xff] %v437
    %589 = vst [vmem:[#allocation2 + $0x88] sm:$0xff] %v439
    %590 = vst [vmem:[#allocation2 + $0x90] sm:$0xff] %v550
    %591 = vst [vmem:[#allocation2 + $0x98] sm:$0xff] %v552
    %592 = vst [vmem:[#allocation2 + $0xa0] sm:$0xff] %v443
    %593 = vst [vmem:[#allocation2 + $0xa8] sm:$0xff] %v445
    %594 = vst [vmem:[#allocation2 + $0xb0] sm:$0xff] %v556
    %595 = vst [vmem:[#allocation2 + $0xb8] sm:$0xff] %v558
    %596 = vst [vmem:[#allocation2 + $0xc0] sm:$0xff] %v449
    %597 = vst [vmem:[#allocation2 + $0xc8] sm:$0xff] %v451
    %598 = vst [vmem:[#allocation2 + $0xd0] sm:$0xff] %v562
    %599 = vst [vmem:[#allocation2 + $0xd8] sm:$0xff] %v564
    %600 = vst [vmem:[#allocation2 + $0xe0] sm:$0xff] %v455
    %601 = vst [vmem:[#allocation2 + $0xe8] sm:$0xff] %v457
    %602 = vst [vmem:[#allocation2 + $0xf0] sm:$0xff] %v568
    %603 = vst [vmem:[#allocation2 + $0xf8] sm:$0xff] %v570
    %v604 = vld [vmem:[#allocation11] sm:$0xff]
    %v605 = vld [vmem:[#allocation13] sm:$0xff]
    %s606 = smul.u32 0, 4
    %s607 = smul.addr %s606, 8
    %s608 = scalar_lea.vmem [#allocation2], %s607
    %v609 = vld [vmem:[%s608] sm:$0xff]
    %v610 = vld [vmem:[%s608 + $0x8] sm:$0xff]
    %v611 = vld [vmem:[%s608 + $0x10] sm:$0xff]
    %v612 = vld [vmem:[%s608 + $0x18] sm:$0xff]
    %v613 = vld [vmem:[#allocation7] sm:$0xff]
    %v614 = vld [vmem:[#allocation7 + $0x8] sm:$0xff]
    %v615 = vld [vmem:[#allocation7 + $0x10] sm:$0xff]
    %v616 = vld [vmem:[#allocation7 + $0x18] sm:$0xff]
    %v617 = vld [vmem:[#allocation7 + $0x20] sm:$0xff]
    %v618 = vld [vmem:[#allocation7 + $0x28] sm:$0xff]
    %v619 = vld [vmem:[#allocation7 + $0x30] sm:$0xff]
    %v620 = vld [vmem:[#allocation7 + $0x38] sm:$0xff]
    %v621 = vld [vmem:[#allocation7 + $0x40] sm:$0xff]
    %v622 = vld [vmem:[#allocation7 + $0x48] sm:$0xff]
    %v623 = vld [vmem:[#allocation7 + $0x50] sm:$0xff]
    %v624 = vld [vmem:[#allocation7 + $0x58] sm:$0xff]
    %v625 = vld [vmem:[#allocation7 + $0x60] sm:$0xff]
    %v626 = vld [vmem:[#allocation7 + $0x68] sm:$0xff]
    %v627 = vld [vmem:[#allocation7 + $0x70] sm:$0xff]
    %v628 = vld [vmem:[#allocation7 + $0x78] sm:$0xff]
    %v629 = vld [vmem:[#allocation7 + $0x80] sm:$0xff]
    %v630 = vld [vmem:[#allocation7 + $0x88] sm:$0xff]
    %v631 = vld [vmem:[#allocation7 + $0x90] sm:$0xff]
    %v632 = vld [vmem:[#allocation7 + $0x98] sm:$0xff]
    %v633 = vld [vmem:[#allocation7 + $0xa0] sm:$0xff]
    %v634 = vld [vmem:[#allocation7 + $0xa8] sm:$0xff]
    %v635 = vld [vmem:[#allocation7 + $0xb0] sm:$0xff]
    %v636 = vld [vmem:[#allocation7 + $0xb8] sm:$0xff]
    %v637 = vld [vmem:[#allocation7 + $0xc0] sm:$0xff]
    %v638 = vld [vmem:[#allocation7 + $0xc8] sm:$0xff]
    %v639 = vld [vmem:[#allocation7 + $0xd0] sm:$0xff]
    %v640 = vld [vmem:[#allocation7 + $0xd8] sm:$0xff]
    %v641 = vld [vmem:[#allocation7 + $0xe0] sm:$0xff]
    %v642 = vld [vmem:[#allocation7 + $0xe8] sm:$0xff]
    %v643 = vld [vmem:[#allocation7 + $0xf0] sm:$0xff]
    %v644 = vld [vmem:[#allocation7 + $0xf8] sm:$0xff]
    %v645 = vld [vmem:[#allocation7 + $0x100] sm:$0xff]
    %v646 = vld [vmem:[#allocation7 + $0x108] sm:$0xff]
    %v647 = vld [vmem:[#allocation7 + $0x110] sm:$0xff]
    %v648 = vld [vmem:[#allocation7 + $0x118] sm:$0xff]
    %v649 = vld [vmem:[#allocation7 + $0x120] sm:$0xff]
    %v650 = vld [vmem:[#allocation7 + $0x128] sm:$0xff]
    %v651 = vld [vmem:[#allocation7 + $0x130] sm:$0xff]
    %v652 = vld [vmem:[#allocation7 + $0x138] sm:$0xff]
    %v653 = vld [vmem:[#allocation7 + $0x140] sm:$0xff]
    %v654 = vld [vmem:[#allocation7 + $0x148] sm:$0xff]
    %v655 = vld [vmem:[#allocation7 + $0x150] sm:$0xff]
    %v656 = vld [vmem:[#allocation7 + $0x158] sm:$0xff]
    %v657 = vld [vmem:[#allocation7 + $0x160] sm:$0xff]
    %v658 = vld [vmem:[#allocation7 + $0x168] sm:$0xff]
    %v659 = vld [vmem:[#allocation7 + $0x170] sm:$0xff]
    %v660 = vld [vmem:[#allocation7 + $0x178] sm:$0xff]
    %v661 = vld [vmem:[#allocation7 + $0x180] sm:$0xff]
    %v662 = vld [vmem:[#allocation7 + $0x188] sm:$0xff]
    %v663 = vld [vmem:[#allocation7 + $0x190] sm:$0xff]
    %v664 = vld [vmem:[#allocation7 + $0x198] sm:$0xff]
    %v665 = vld [vmem:[#allocation7 + $0x1a0] sm:$0xff]
    %v666 = vld [vmem:[#allocation7 + $0x1a8] sm:$0xff]
    %v667 = vld [vmem:[#allocation7 + $0x1b0] sm:$0xff]
    %v668 = vld [vmem:[#allocation7 + $0x1b8] sm:$0xff]
    %v669 = vld [vmem:[#allocation7 + $0x1c0] sm:$0xff]
    %v670 = vld [vmem:[#allocation7 + $0x1c8] sm:$0xff]
    %v671 = vld [vmem:[#allocation7 + $0x1d0] sm:$0xff]
    %v672 = vld [vmem:[#allocation7 + $0x1d8] sm:$0xff]
    %v673 = vld [vmem:[#allocation7 + $0x1e0] sm:$0xff]
    %v674 = vld [vmem:[#allocation7 + $0x1e8] sm:$0xff]
    %v675 = vld [vmem:[#allocation7 + $0x1f0] sm:$0xff]
    %v676 = vld [vmem:[#allocation7 + $0x1f8] sm:$0xff]
    %677 = vmatprep.subr.mxu0 %v674
    %678 = vmatpush1.msra.mxu0 %v673
    %679 = vmatprep.subr.mxu0 %v670
    %680 = vmatpush1.msra.mxu0 %v669
    %681 = vmatprep.subr.mxu0 %v666
    %682 = vmatpush1.msra.mxu0 %v665
    %683 = vmatprep.subr.mxu0 %v662
    %684 = vmatpush1.msra.mxu0 %v661
    %685 = vmatprep.subr.mxu0 %v658
    %686 = vmatpush1.msra.mxu0 %v657
    %687 = vmatprep.subr.mxu0 %v654
    %688 = vmatpush1.msra.mxu0 %v653
    %689 = vmatprep.subr.mxu0 %v650
    %690 = vmatpush1.msra.mxu0 %v649
    %691 = vmatprep.subr.mxu0 %v646
    %692 = vmatpush1.msra.mxu0 %v645
    %693 = vmatprep.subr.mxu0 %v642
    %694 = vmatpush1.msra.mxu0 %v641
    %695 = vmatprep.subr.mxu0 %v638
    %696 = vmatpush1.msra.mxu0 %v637
    %697 = vmatprep.subr.mxu0 %v634
    %698 = vmatpush1.msra.mxu0 %v633
    %699 = vmatprep.subr.mxu0 %v630
    %700 = vmatpush1.msra.mxu0 %v629
    %701 = vmatprep.subr.mxu0 %v626
    %702 = vmatpush1.msra.mxu0 %v625
    %703 = vmatprep.subr.mxu0 %v622
    %704 = vmatpush1.msra.mxu0 %v621
    %705 = vmatprep.subr.mxu0 %v618
    %706 = vmatpush1.msra.mxu0 %v617
    %707 = vmatprep.subr.mxu0 %v614
    %708 = vmatpush1.msra.mxu0 %v613
    %709 = vmatprep.subr.mxu0 0.0
    %710 = vmatpush2.msra.mxu0 0.0
    %711 = vmatprep.subr.mxu0 0.0
    %712 = vmatpush2.msra.mxu0 0.0
    %713 = vmatprep.subr.mxu0 0.0
    %714 = vmatpush2.msra.mxu0 0.0
    %715 = vmatprep.subr.mxu0 0.0
    %716 = vmatpush2.msra.mxu0 0.0
    %717 = vmatprep.subr.mxu0 0.0
    %718 = vmatpush2.msra.mxu0 0.0
    %719 = vmatprep.subr.mxu0 0.0
    %720 = vmatpush2.msra.mxu0 0.0
    %721 = vmatprep.subr.mxu0 0.0
    %722 = vmatpush2.msra.mxu0 0.0
    %723 = vmatprep.subr.mxu0 0.0
    %724 = vmatpush2.msra.mxu0 0.0
    %725 = vmatprep.subr.mxu0 0.0
    %726 = vmatpush2.msra.mxu0 0.0
    %727 = vmatprep.subr.mxu0 0.0
    %728 = vmatpush2.msra.mxu0 0.0
    %729 = vmatprep.subr.mxu0 0.0
    %730 = vmatpush2.msra.mxu0 0.0
    %731 = vmatprep.subr.mxu0 0.0
    %732 = vmatpush2.msra.mxu0 0.0
    %733 = vmatprep.subr.mxu0 0.0
    %734 = vmatpush2.msra.mxu0 0.0
    %735 = vmatprep.subr.mxu0 0.0
    %736 = vmatpush2.msra.mxu0 0.0
    %737 = vmatprep.subr.mxu0 0.0
    %738 = vmatpush2.msra.mxu0 0.0
    %739 = vmatprep.subr.mxu0 0.0
    %740 = vmatpush2.msra.mxu0 0.0
    %741 = vmatprep.mubr.f32.mxu0 0.0
    %742 = vmatmul.mubr.f32.gmra.mxu0 %v604
    %v743 = vpop.f32.mrf.mxu0
    %v744 = vadd.f32 0.0, %v743
    %v745 = vpop.f32.mrf.mxu0
    %v746 = vadd.f32 0.0, %v745
    %747 = vdwg.mxu0
    %748 = vmatprep.subr.mxu0 %v676
    %749 = vmatpush1.msra.mxu0 %v675
    %750 = vmatprep.subr.mxu0 %v672
    %751 = vmatpush1.msra.mxu0 %v671
    %752 = vmatprep.subr.mxu0 %v668
    %753 = vmatpush1.msra.mxu0 %v667
    %754 = vmatprep.subr.mxu0 %v664
    %755 = vmatpush1.msra.mxu0 %v663
    %756 = vmatprep.subr.mxu0 %v660
    %757 = vmatpush1.msra.mxu0 %v659
    %758 = vmatprep.subr.mxu0 %v656
    %759 = vmatpush1.msra.mxu0 %v655
    %760 = vmatprep.subr.mxu0 %v652
    %761 = vmatpush1.msra.mxu0 %v651
    %762 = vmatprep.subr.mxu0 %v648
    %763 = vmatpush1.msra.mxu0 %v647
    %764 = vmatprep.subr.mxu0 %v644
    %765 = vmatpush1.msra.mxu0 %v643
    %766 = vmatprep.subr.mxu0 %v640
    %767 = vmatpush1.msra.mxu0 %v639
    %768 = vmatprep.subr.mxu0 %v636
    %769 = vmatpush1.msra.mxu0 %v635
    %770 = vmatprep.subr.mxu0 %v632
    %771 = vmatpush1.msra.mxu0 %v631
    %772 = vmatprep.subr.mxu0 %v628
    %773 = vmatpush1.msra.mxu0 %v627
    %774 = vmatprep.subr.mxu0 %v624
    %775 = vmatpush1.msra.mxu0 %v623
    %776 = vmatprep.subr.mxu0 %v620
    %777 = vmatpush1.msra.mxu0 %v619
    %778 = vmatprep.subr.mxu0 %v616
    %779 = vmatpush1.msra.mxu0 %v615
    %780 = vmatprep.subr.mxu0 0.0
    %781 = vmatpush2.msra.mxu0 0.0
    %782 = vmatprep.subr.mxu0 0.0
    %783 = vmatpush2.msra.mxu0 0.0
    %784 = vmatprep.subr.mxu0 0.0
    %785 = vmatpush2.msra.mxu0 0.0
    %786 = vmatprep.subr.mxu0 0.0
    %787 = vmatpush2.msra.mxu0 0.0
    %788 = vmatprep.subr.mxu0 0.0
    %789 = vmatpush2.msra.mxu0 0.0
    %790 = vmatprep.subr.mxu0 0.0
    %791 = vmatpush2.msra.mxu0 0.0
    %792 = vmatprep.subr.mxu0 0.0
    %793 = vmatpush2.msra.mxu0 0.0
    %794 = vmatprep.subr.mxu0 0.0
    %795 = vmatpush2.msra.mxu0 0.0
    %796 = vmatprep.subr.mxu0 0.0
    %797 = vmatpush2.msra.mxu0 0.0
    %798 = vmatprep.subr.mxu0 0.0
    %799 = vmatpush2.msra.mxu0 0.0
    %800 = vmatprep.subr.mxu0 0.0
    %801 = vmatpush2.msra.mxu0 0.0
    %802 = vmatprep.subr.mxu0 0.0
    %803 = vmatpush2.msra.mxu0 0.0
    %804 = vmatprep.subr.mxu0 0.0
    %805 = vmatpush2.msra.mxu0 0.0
    %806 = vmatprep.subr.mxu0 0.0
    %807 = vmatpush2.msra.mxu0 0.0
    %808 = vmatprep.subr.mxu0 0.0
    %809 = vmatpush2.msra.mxu0 0.0
    %810 = vmatprep.subr.mxu0 0.0
    %811 = vmatpush2.msra.mxu0 0.0
    %812 = vmatprep.mubr.f32.mxu0 0.0
    %813 = vmatmul.mubr.f32.gmra.mxu0 %v604
    %v814 = vpop.f32.mrf.mxu0
    %v815 = vadd.f32 0.0, %v814
    %v816 = vpop.f32.mrf.mxu0
    %v817 = vadd.f32 0.0, %v816
    %818 = vdwg.mxu0
    %v819 = vadd.f32 %v609, %v744
    %v820 = vadd.f32 %v610, %v746
    %v821 = vadd.f32 %v611, %v815
    %v822 = vadd.f32 %v612, %v817
    %v823 = vxor.u32 %v819, 2147483648
    %v824 = vmul.f32 %v823, 1.442695
    %v825 = vpow.pop %v824
    %v826 = vadd.f32 %v825, 1.0
    %v827 = vrcp.pop %v826
    %v828 = vmul.f32 1.0, %v827
    %v829 = vxor.u32 %v820, 2147483648
    %v830 = vmul.f32 %v829, 1.442695
    %v831 = vpow.pop %v830
    %v832 = vadd.f32 %v831, 1.0
    %v833 = vrcp.pop %v832
    %v834 = vmul.f32 1.0, %v833
    %v835 = vtanh.pop %v821
    %v836 = vxor.u32 %v822, 2147483648
    %v837 = vmul.f32 %v836, 1.442695
    %v838 = vpow.pop %v837
    %v839 = vadd.f32 %v838, 1.0
    %v840 = vrcp.pop %v839
    %v841 = vmul.f32 1.0, %v840
    %v842 = vmul.f32 %v834, %v605
    %v843 = vmul.f32 %v828, %v835
    %v844 = vadd.f32 %v842, %v843
    %v845 = vtanh.pop %v844
    %v846 = vmul.f32 %v841, %v845
    %847 = vst [vmem:[#allocation3] sm:$0xff] %v846
    %s848 = smul.u32 1, 4
    %s849 = smul.addr %s848, 8
    %s850 = scalar_lea.vmem [#allocation2], %s849
    %v851 = vld [vmem:[%s850] sm:$0xff]
    %v852 = vld [vmem:[%s850 + $0x8] sm:$0xff]
    %v853 = vld [vmem:[%s850 + $0x10] sm:$0xff]
    %v854 = vld [vmem:[%s850 + $0x18] sm:$0xff]
    %v855 = vld [vmem:[#allocation7] sm:$0xff]
    %v856 = vld [vmem:[#allocation7 + $0x8] sm:$0xff]
    %v857 = vld [vmem:[#allocation7 + $0x10] sm:$0xff]
    %v858 = vld [vmem:[#allocation7 + $0x18] sm:$0xff]
    %v859 = vld [vmem:[#allocation7 + $0x20] sm:$0xff]
    %v860 = vld [vmem:[#allocation7 + $0x28] sm:$0xff]
    %v861 = vld [vmem:[#allocation7 + $0x30] sm:$0xff]
    %v862 = vld [vmem:[#allocation7 + $0x38] sm:$0xff]
    %v863 = vld [vmem:[#allocation7 + $0x40] sm:$0xff]
    %v864 = vld [vmem:[#allocation7 + $0x48] sm:$0xff]
    %v865 = vld [vmem:[#allocation7 + $0x50] sm:$0xff]
    %v866 = vld [vmem:[#allocation7 + $0x58] sm:$0xff]
    %v867 = vld [vmem:[#allocation7 + $0x60] sm:$0xff]
    %v868 = vld [vmem:[#allocation7 + $0x68] sm:$0xff]
    %v869 = vld [vmem:[#allocation7 + $0x70] sm:$0xff]
    %v870 = vld [vmem:[#allocation7 + $0x78] sm:$0xff]
    %v871 = vld [vmem:[#allocation7 + $0x80] sm:$0xff]
    %v872 = vld [vmem:[#allocation7 + $0x88] sm:$0xff]
    %v873 = vld [vmem:[#allocation7 + $0x90] sm:$0xff]
    %v874 = vld [vmem:[#allocation7 + $0x98] sm:$0xff]
    %v875 = vld [vmem:[#allocation7 + $0xa0] sm:$0xff]
    %v876 = vld [vmem:[#allocation7 + $0xa8] sm:$0xff]
    %v877 = vld [vmem:[#allocation7 + $0xb0] sm:$0xff]
    %v878 = vld [vmem:[#allocation7 + $0xb8] sm:$0xff]
    %v879 = vld [vmem:[#allocation7 + $0xc0] sm:$0xff]
    %v880 = vld [vmem:[#allocation7 + $0xc8] sm:$0xff]
    %v881 = vld [vmem:[#allocation7 + $0xd0] sm:$0xff]
    %v882 = vld [vmem:[#allocation7 + $0xd8] sm:$0xff]
    %v883 = vld [vmem:[#allocation7 + $0xe0] sm:$0xff]
    %v884 = vld [vmem:[#allocation7 + $0xe8] sm:$0xff]
    %v885 = vld [vmem:[#allocation7 + $0xf0] sm:$0xff]
    %v886 = vld [vmem:[#allocation7 + $0xf8] sm:$0xff]
    %v887 = vld [vmem:[#allocation7 + $0x100] sm:$0xff]
    %v888 = vld [vmem:[#allocation7 + $0x108] sm:$0xff]
    %v889 = vld [vmem:[#allocation7 + $0x110] sm:$0xff]
    %v890 = vld [vmem:[#allocation7 + $0x118] sm:$0xff]
    %v891 = vld [vmem:[#allocation7 + $0x120] sm:$0xff]
    %v892 = vld [vmem:[#allocation7 + $0x128] sm:$0xff]
    %v893 = vld [vmem:[#allocation7 + $0x130] sm:$0xff]
    %v894 = vld [vmem:[#allocation7 + $0x138] sm:$0xff]
    %v895 = vld [vmem:[#allocation7 + $0x140] sm:$0xff]
    %v896 = vld [vmem:[#allocation7 + $0x148] sm:$0xff]
    %v897 = vld [vmem:[#allocation7 + $0x150] sm:$0xff]
    %v898 = vld [vmem:[#allocation7 + $0x158] sm:$0xff]
    %v899 = vld [vmem:[#allocation7 + $0x160] sm:$0xff]
    %v900 = vld [vmem:[#allocation7 + $0x168] sm:$0xff]
    %v901 = vld [vmem:[#allocation7 + $0x170] sm:$0xff]
    %v902 = vld [vmem:[#allocation7 + $0x178] sm:$0xff]
    %v903 = vld [vmem:[#allocation7 + $0x180] sm:$0xff]
    %v904 = vld [vmem:[#allocation7 + $0x188] sm:$0xff]
    %v905 = vld [vmem:[#allocation7 + $0x190] sm:$0xff]
    %v906 = vld [vmem:[#allocation7 + $0x198] sm:$0xff]
    %v907 = vld [vmem:[#allocation7 + $0x1a0] sm:$0xff]
    %v908 = vld [vmem:[#allocation7 + $0x1a8] sm:$0xff]
    %v909 = vld [vmem:[#allocation7 + $0x1b0] sm:$0xff]
    %v910 = vld [vmem:[#allocation7 + $0x1b8] sm:$0xff]
    %v911 = vld [vmem:[#allocation7 + $0x1c0] sm:$0xff]
    %v912 = vld [vmem:[#allocation7 + $0x1c8] sm:$0xff]
    %v913 = vld [vmem:[#allocation7 + $0x1d0] sm:$0xff]
    %v914 = vld [vmem:[#allocation7 + $0x1d8] sm:$0xff]
    %v915 = vld [vmem:[#allocation7 + $0x1e0] sm:$0xff]
    %v916 = vld [vmem:[#allocation7 + $0x1e8] sm:$0xff]
    %v917 = vld [vmem:[#allocation7 + $0x1f0] sm:$0xff]
    %v918 = vld [vmem:[#allocation7 + $0x1f8] sm:$0xff]
    %919 = vmatprep.subr.mxu0 %v916
    %920 = vmatpush1.msra.mxu0 %v915
    %921 = vmatprep.subr.mxu0 %v912
    %922 = vmatpush1.msra.mxu0 %v911
    %923 = vmatprep.subr.mxu0 %v908
    %924 = vmatpush1.msra.mxu0 %v907
    %925 = vmatprep.subr.mxu0 %v904
    %926 = vmatpush1.msra.mxu0 %v903
    %927 = vmatprep.subr.mxu0 %v900
    %928 = vmatpush1.msra.mxu0 %v899
    %929 = vmatprep.subr.mxu0 %v896
    %930 = vmatpush1.msra.mxu0 %v895
    %931 = vmatprep.subr.mxu0 %v892
    %932 = vmatpush1.msra.mxu0 %v891
    %933 = vmatprep.subr.mxu0 %v888
    %934 = vmatpush1.msra.mxu0 %v887
    %935 = vmatprep.subr.mxu0 %v884
    %936 = vmatpush1.msra.mxu0 %v883
    %937 = vmatprep.subr.mxu0 %v880
    %938 = vmatpush1.msra.mxu0 %v879
    %939 = vmatprep.subr.mxu0 %v876
    %940 = vmatpush1.msra.mxu0 %v875
    %941 = vmatprep.subr.mxu0 %v872
    %942 = vmatpush1.msra.mxu0 %v871
    %943 = vmatprep.subr.mxu0 %v868
    %944 = vmatpush1.msra.mxu0 %v867
    %945 = vmatprep.subr.mxu0 %v864
    %946 = vmatpush1.msra.mxu0 %v863
    %947 = vmatprep.subr.mxu0 %v860
    %948 = vmatpush1.msra.mxu0 %v859
    %949 = vmatprep.subr.mxu0 %v856
    %950 = vmatpush1.msra.mxu0 %v855
    %951 = vmatprep.subr.mxu0 0.0
    %952 = vmatpush2.msra.mxu0 0.0
    %953 = vmatprep.subr.mxu0 0.0
    %954 = vmatpush2.msra.mxu0 0.0
    %955 = vmatprep.subr.mxu0 0.0
    %956 = vmatpush2.msra.mxu0 0.0
    %957 = vmatprep.subr.mxu0 0.0
    %958 = vmatpush2.msra.mxu0 0.0
    %959 = vmatprep.subr.mxu0 0.0
    %960 = vmatpush2.msra.mxu0 0.0
    %961 = vmatprep.subr.mxu0 0.0
    %962 = vmatpush2.msra.mxu0 0.0
    %963 = vmatprep.subr.mxu0 0.0
    %964 = vmatpush2.msra.mxu0 0.0
    %965 = vmatprep.subr.mxu0 0.0
    %966 = vmatpush2.msra.mxu0 0.0
    %967 = vmatprep.subr.mxu0 0.0
    %968 = vmatpush2.msra.mxu0 0.0
    %969 = vmatprep.subr.mxu0 0.0
    %970 = vmatpush2.msra.mxu0 0.0
    %971 = vmatprep.subr.mxu0 0.0
    %972 = vmatpush2.msra.mxu0 0.0
    %973 = vmatprep.subr.mxu0 0.0
    %974 = vmatpush2.msra.mxu0 0.0
    %975 = vmatprep.subr.mxu0 0.0
    %976 = vmatpush2.msra.mxu0 0.0
    %977 = vmatprep.subr.mxu0 0.0
    %978 = vmatpush2.msra.mxu0 0.0
    %979 = vmatprep.subr.mxu0 0.0
    %980 = vmatpush2.msra.mxu0 0.0
    %981 = vmatprep.subr.mxu0 0.0
    %982 = vmatpush2.msra.mxu0 0.0
    %983 = vmatprep.mubr.f32.mxu0 0.0
    %984 = vmatmul.mubr.f32.gmra.mxu0 %v846
    %v985 = vpop.f32.mrf.mxu0
    %v986 = vadd.f32 0.0, %v985
    %v987 = vpop.f32.mrf.mxu0
    %v988 = vadd.f32 0.0, %v987
    %989 = vdwg.mxu0
    %990 = vmatprep.subr.mxu0 %v918
    %991 = vmatpush1.msra.mxu0 %v917
    %992 = vmatprep.subr.mxu0 %v914
    %993 = vmatpush1.msra.mxu0 %v913
    %994 = vmatprep.subr.mxu0 %v910
    %995 = vmatpush1.msra.mxu0 %v909
    %996 = vmatprep.subr.mxu0 %v906
    %997 = vmatpush1.msra.mxu0 %v905
    %998 = vmatprep.subr.mxu0 %v902
    %999 = vmatpush1.msra.mxu0 %v901
    %1000 = vmatprep.subr.mxu0 %v898
    %1001 = vmatpush1.msra.mxu0 %v897
    %1002 = vmatprep.subr.mxu0 %v894
    %1003 = vmatpush1.msra.mxu0 %v893
    %1004 = vmatprep.subr.mxu0 %v890
    %1005 = vmatpush1.msra.mxu0 %v889
    %1006 = vmatprep.subr.mxu0 %v886
    %1007 = vmatpush1.msra.mxu0 %v885
    %1008 = vmatprep.subr.mxu0 %v882
    %1009 = vmatpush1.msra.mxu0 %v881
    %1010 = vmatprep.subr.mxu0 %v878
    %1011 = vmatpush1.msra.mxu0 %v877
    %1012 = vmatprep.subr.mxu0 %v874
    %1013 = vmatpush1.msra.mxu0 %v873
    %1014 = vmatprep.subr.mxu0 %v870
    %1015 = vmatpush1.msra.mxu0 %v869
    %1016 = vmatprep.subr.mxu0 %v866
    %1017 = vmatpush1.msra.mxu0 %v865
    %1018 = vmatprep.subr.mxu0 %v862
    %1019 = vmatpush1.msra.mxu0 %v861
    %1020 = vmatprep.subr.mxu0 %v858
    %1021 = vmatpush1.msra.mxu0 %v857
    %1022 = vmatprep.subr.mxu0 0.0
    %1023 = vmatpush2.msra.mxu0 0.0
    %1024 = vmatprep.subr.mxu0 0.0
    %1025 = vmatpush2.msra.mxu0 0.0
    %1026 = vmatprep.subr.mxu0 0.0
    %1027 = vmatpush2.msra.mxu0 0.0
    %1028 = vmatprep.subr.mxu0 0.0
    %1029 = vmatpush2.msra.mxu0 0.0
    %1030 = vmatprep.subr.mxu0 0.0
    %1031 = vmatpush2.msra.mxu0 0.0
    %1032 = vmatprep.subr.mxu0 0.0
    %1033 = vmatpush2.msra.mxu0 0.0
    %1034 = vmatprep.subr.mxu0 0.0
    %1035 = vmatpush2.msra.mxu0 0.0
    %1036 = vmatprep.subr.mxu0 0.0
    %1037 = vmatpush2.msra.mxu0 0.0
    %1038 = vmatprep.subr.mxu0 0.0
    %1039 = vmatpush2.msra.mxu0 0.0
    %1040 = vmatprep.subr.mxu0 0.0
    %1041 = vmatpush2.msra.mxu0 0.0
    %1042 = vmatprep.subr.mxu0 0.0
    %1043 = vmatpush2.msra.mxu0 0.0
    %1044 = vmatprep.subr.mxu0 0.0
    %1045 = vmatpush2.msra.mxu0 0.0
    %1046 = vmatprep.subr.mxu0 0.0
    %1047 = vmatpush2.msra.mxu0 0.0
    %1048 = vmatprep.subr.mxu0 0.0
    %1049 = vmatpush2.msra.mxu0 0.0
    %1050 = vmatprep.subr.mxu0 0.0
    %1051 = vmatpush2.msra.mxu0 0.0
    %1052 = vmatprep.subr.mxu0 0.0
    %1053 = vmatpush2.msra.mxu0 0.0
    %1054 = vmatprep.mubr.f32.mxu0 0.0
    %1055 = vmatmul.mubr.f32.gmra.mxu0 %v846
    %v1056 = vpop.f32.mrf.mxu0
    %v1057 = vadd.f32 0.0, %v1056
    %v1058 = vpop.f32.mrf.mxu0
    %v1059 = vadd.f32 0.0, %v1058
    %1060 = vdwg.mxu0
    %v1061 = vadd.f32 %v851, %v986
    %v1062 = vadd.f32 %v852, %v988
    %v1063 = vadd.f32 %v853, %v1057
    %v1064 = vadd.f32 %v854, %v1059
    %v1065 = vxor.u32 %v1061, 2147483648
    %v1066 = vmul.f32 %v1065, 1.442695
    %v1067 = vpow.pop %v1066
    %v1068 = vadd.f32 %v1067, 1.0
    %v1069 = vrcp.pop %v1068
    %v1070 = vmul.f32 1.0, %v1069
    %v1071 = vxor.u32 %v1062, 2147483648
    %v1072 = vmul.f32 %v1071, 1.442695
    %v1073 = vpow.pop %v1072
    %v1074 = vadd.f32 %v1073, 1.0
    %v1075 = vrcp.pop %v1074
    %v1076 = vmul.f32 1.0, %v1075
    %v1077 = vtanh.pop %v1063
    %v1078 = vxor.u32 %v1064, 2147483648
    %v1079 = vmul.f32 %v1078, 1.442695
    %v1080 = vpow.pop %v1079
    %v1081 = vadd.f32 %v1080, 1.0
    %v1082 = vrcp.pop %v1081
    %v1083 = vmul.f32 1.0, %v1082
    %v1084 = vmul.f32 %v1076, %v844
    %v1085 = vmul.f32 %v1070, %v1077
    %v1086 = vadd.f32 %v1084, %v1085
    %v1087 = vtanh.pop %v1086
    %v1088 = vmul.f32 %v1083, %v1087
    %s1089 = scalar_lea.vmem [#allocation3], 8
    %1090 = vst [vmem:[%s1089] sm:$0xff] %v1088
    %s1091 = smul.u32 2, 4
    %s1092 = smul.addr %s1091, 8
    %s1093 = scalar_lea.vmem [#allocation2], %s1092
    %v1094 = vld [vmem:[%s1093] sm:$0xff]
    %v1095 = vld [vmem:[%s1093 + $0x8] sm:$0xff]
    %v1096 = vld [vmem:[%s1093 + $0x10] sm:$0xff]
    %v1097 = vld [vmem:[%s1093 + $0x18] sm:$0xff]
    %v1098 = vld [vmem:[#allocation7] sm:$0xff]
    %v1099 = vld [vmem:[#allocation7 + $0x8] sm:$0xff]
    %v1100 = vld [vmem:[#allocation7 + $0x10] sm:$0xff]
    %v1101 = vld [vmem:[#allocation7 + $0x18] sm:$0xff]
    %v1102 = vld [vmem:[#allocation7 + $0x20] sm:$0xff]
    %v1103 = vld [vmem:[#allocation7 + $0x28] sm:$0xff]
    %v1104 = vld [vmem:[#allocation7 + $0x30] sm:$0xff]
    %v1105 = vld [vmem:[#allocation7 + $0x38] sm:$0xff]
    %v1106 = vld [vmem:[#allocation7 + $0x40] sm:$0xff]
    %v1107 = vld [vmem:[#allocation7 + $0x48] sm:$0xff]
    %v1108 = vld [vmem:[#allocation7 + $0x50] sm:$0xff]
    %v1109 = vld [vmem:[#allocation7 + $0x58] sm:$0xff]
    %v1110 = vld [vmem:[#allocation7 + $0x60] sm:$0xff]
    %v1111 = vld [vmem:[#allocation7 + $0x68] sm:$0xff]
    %v1112 = vld [vmem:[#allocation7 + $0x70] sm:$0xff]
    %v1113 = vld [vmem:[#allocation7 + $0x78] sm:$0xff]
    %v1114 = vld [vmem:[#allocation7 + $0x80] sm:$0xff]
    %v1115 = vld [vmem:[#allocation7 + $0x88] sm:$0xff]
    %v1116 = vld [vmem:[#allocation7 + $0x90] sm:$0xff]
    %v1117 = vld [vmem:[#allocation7 + $0x98] sm:$0xff]
    %v1118 = vld [vmem:[#allocation7 + $0xa0] sm:$0xff]
    %v1119 = vld [vmem:[#allocation7 + $0xa8] sm:$0xff]
    %v1120 = vld [vmem:[#allocation7 + $0xb0] sm:$0xff]
    %v1121 = vld [vmem:[#allocation7 + $0xb8] sm:$0xff]
    %v1122 = vld [vmem:[#allocation7 + $0xc0] sm:$0xff]
    %v1123 = vld [vmem:[#allocation7 + $0xc8] sm:$0xff]
    %v1124 = vld [vmem:[#allocation7 + $0xd0] sm:$0xff]
    %v1125 = vld [vmem:[#allocation7 + $0xd8] sm:$0xff]
    %v1126 = vld [vmem:[#allocation7 + $0xe0] sm:$0xff]
    %v1127 = vld [vmem:[#allocation7 + $0xe8] sm:$0xff]
    %v1128 = vld [vmem:[#allocation7 + $0xf0] sm:$0xff]
    %v1129 = vld [vmem:[#allocation7 + $0xf8] sm:$0xff]
    %v1130 = vld [vmem:[#allocation7 + $0x100] sm:$0xff]
    %v1131 = vld [vmem:[#allocation7 + $0x108] sm:$0xff]
    %v1132 = vld [vmem:[#allocation7 + $0x110] sm:$0xff]
    %v1133 = vld [vmem:[#allocation7 + $0x118] sm:$0xff]
    %v1134 = vld [vmem:[#allocation7 + $0x120] sm:$0xff]
    %v1135 = vld [vmem:[#allocation7 + $0x128] sm:$0xff]
    %v1136 = vld [vmem:[#allocation7 + $0x130] sm:$0xff]
    %v1137 = vld [vmem:[#allocation7 + $0x138] sm:$0xff]
    %v1138 = vld [vmem:[#allocation7 + $0x140] sm:$0xff]
    %v1139 = vld [vmem:[#allocation7 + $0x148] sm:$0xff]
    %v1140 = vld [vmem:[#allocation7 + $0x150] sm:$0xff]
    %v1141 = vld [vmem:[#allocation7 + $0x158] sm:$0xff]
    %v1142 = vld [vmem:[#allocation7 + $0x160] sm:$0xff]
    %v1143 = vld [vmem:[#allocation7 + $0x168] sm:$0xff]
    %v1144 = vld [vmem:[#allocation7 + $0x170] sm:$0xff]
    %v1145 = vld [vmem:[#allocation7 + $0x178] sm:$0xff]
    %v1146 = vld [vmem:[#allocation7 + $0x180] sm:$0xff]
    %v1147 = vld [vmem:[#allocation7 + $0x188] sm:$0xff]
    %v1148 = vld [vmem:[#allocation7 + $0x190] sm:$0xff]
    %v1149 = vld [vmem:[#allocation7 + $0x198] sm:$0xff]
    %v1150 = vld [vmem:[#allocation7 + $0x1a0] sm:$0xff]
    %v1151 = vld [vmem:[#allocation7 + $0x1a8] sm:$0xff]
    %v1152 = vld [vmem:[#allocation7 + $0x1b0] sm:$0xff]
    %v1153 = vld [vmem:[#allocation7 + $0x1b8] sm:$0xff]
    %v1154 = vld [vmem:[#allocation7 + $0x1c0] sm:$0xff]
    %v1155 = vld [vmem:[#allocation7 + $0x1c8] sm:$0xff]
    %v1156 = vld [vmem:[#allocation7 + $0x1d0] sm:$0xff]
    %v1157 = vld [vmem:[#allocation7 + $0x1d8] sm:$0xff]
    %v1158 = vld [vmem:[#allocation7 + $0x1e0] sm:$0xff]
    %v1159 = vld [vmem:[#allocation7 + $0x1e8] sm:$0xff]
    %v1160 = vld [vmem:[#allocation7 + $0x1f0] sm:$0xff]
    %v1161 = vld [vmem:[#allocation7 + $0x1f8] sm:$0xff]
    %1162 = vmatprep.subr.mxu0 %v1159
    %1163 = vmatpush1.msra.mxu0 %v1158
    %1164 = vmatprep.subr.mxu0 %v1155
    %1165 = vmatpush1.msra.mxu0 %v1154
    %1166 = vmatprep.subr.mxu0 %v1151
    %1167 = vmatpush1.msra.mxu0 %v1150
    %1168 = vmatprep.subr.mxu0 %v1147
    %1169 = vmatpush1.msra.mxu0 %v1146
    %1170 = vmatprep.subr.mxu0 %v1143
    %1171 = vmatpush1.msra.mxu0 %v1142
    %1172 = vmatprep.subr.mxu0 %v1139
    %1173 = vmatpush1.msra.mxu0 %v1138
    %1174 = vmatprep.subr.mxu0 %v1135
    %1175 = vmatpush1.msra.mxu0 %v1134
    %1176 = vmatprep.subr.mxu0 %v1131
    %1177 = vmatpush1.msra.mxu0 %v1130
    %1178 = vmatprep.subr.mxu0 %v1127
    %1179 = vmatpush1.msra.mxu0 %v1126
    %1180 = vmatprep.subr.mxu0 %v1123
    %1181 = vmatpush1.msra.mxu0 %v1122
    %1182 = vmatprep.subr.mxu0 %v1119
    %1183 = vmatpush1.msra.mxu0 %v1118
    %1184 = vmatprep.subr.mxu0 %v1115
    %1185 = vmatpush1.msra.mxu0 %v1114
    %1186 = vmatprep.subr.mxu0 %v1111
    %1187 = vmatpush1.msra.mxu0 %v1110
    %1188 = vmatprep.subr.mxu0 %v1107
    %1189 = vmatpush1.msra.mxu0 %v1106
    %1190 = vmatprep.subr.mxu0 %v1103
    %1191 = vmatpush1.msra.mxu0 %v1102
    %1192 = vmatprep.subr.mxu0 %v1099
    %1193 = vmatpush1.msra.mxu0 %v1098
    %1194 = vmatprep.subr.mxu0 0.0
    %1195 = vmatpush2.msra.mxu0 0.0
    %1196 = vmatprep.subr.mxu0 0.0
    %1197 = vmatpush2.msra.mxu0 0.0
    %1198 = vmatprep.subr.mxu0 0.0
    %1199 = vmatpush2.msra.mxu0 0.0
    %1200 = vmatprep.subr.mxu0 0.0
    %1201 = vmatpush2.msra.mxu0 0.0
    %1202 = vmatprep.subr.mxu0 0.0
    %1203 = vmatpush2.msra.mxu0 0.0
    %1204 = vmatprep.subr.mxu0 0.0
    %1205 = vmatpush2.msra.mxu0 0.0
    %1206 = vmatprep.subr.mxu0 0.0
    %1207 = vmatpush2.msra.mxu0 0.0
    %1208 = vmatprep.subr.mxu0 0.0
    %1209 = vmatpush2.msra.mxu0 0.0
    %1210 = vmatprep.subr.mxu0 0.0
    %1211 = vmatpush2.msra.mxu0 0.0
    %1212 = vmatprep.subr.mxu0 0.0
    %1213 = vmatpush2.msra.mxu0 0.0
    %1214 = vmatprep.subr.mxu0 0.0
    %1215 = vmatpush2.msra.mxu0 0.0
    %1216 = vmatprep.subr.mxu0 0.0
    %1217 = vmatpush2.msra.mxu0 0.0
    %1218 = vmatprep.subr.mxu0 0.0
    %1219 = vmatpush2.msra.mxu0 0.0
    %1220 = vmatprep.subr.mxu0 0.0
    %1221 = vmatpush2.msra.mxu0 0.0
    %1222 = vmatprep.subr.mxu0 0.0
    %1223 = vmatpush2.msra.mxu0 0.0
    %1224 = vmatprep.subr.mxu0 0.0
    %1225 = vmatpush2.msra.mxu0 0.0
    %1226 = vmatprep.mubr.f32.mxu0 0.0
    %1227 = vmatmul.mubr.f32.gmra.mxu0 %v1088
    %v1228 = vpop.f32.mrf.mxu0
    %v1229 = vadd.f32 0.0, %v1228
    %v1230 = vpop.f32.mrf.mxu0
    %v1231 = vadd.f32 0.0, %v1230
    %1232 = vdwg.mxu0
    %1233 = vmatprep.subr.mxu0 %v1161
    %1234 = vmatpush1.msra.mxu0 %v1160
    %1235 = vmatprep.subr.mxu0 %v1157
    %1236 = vmatpush1.msra.mxu0 %v1156
    %1237 = vmatprep.subr.mxu0 %v1153
    %1238 = vmatpush1.msra.mxu0 %v1152
    %1239 = vmatprep.subr.mxu0 %v1149
    %1240 = vmatpush1.msra.mxu0 %v1148
    %1241 = vmatprep.subr.mxu0 %v1145
    %1242 = vmatpush1.msra.mxu0 %v1144
    %1243 = vmatprep.subr.mxu0 %v1141
    %1244 = vmatpush1.msra.mxu0 %v1140
    %1245 = vmatprep.subr.mxu0 %v1137
    %1246 = vmatpush1.msra.mxu0 %v1136
    %1247 = vmatprep.subr.mxu0 %v1133
    %1248 = vmatpush1.msra.mxu0 %v1132
    %1249 = vmatprep.subr.mxu0 %v1129
    %1250 = vmatpush1.msra.mxu0 %v1128
    %1251 = vmatprep.subr.mxu0 %v1125
    %1252 = vmatpush1.msra.mxu0 %v1124
    %1253 = vmatprep.subr.mxu0 %v1121
    %1254 = vmatpush1.msra.mxu0 %v1120
    %1255 = vmatprep.subr.mxu0 %v1117
    %1256 = vmatpush1.msra.mxu0 %v1116
    %1257 = vmatprep.subr.mxu0 %v1113
    %1258 = vmatpush1.msra.mxu0 %v1112
    %1259 = vmatprep.subr.mxu0 %v1109
    %1260 = vmatpush1.msra.mxu0 %v1108
    %1261 = vmatprep.subr.mxu0 %v1105
    %1262 = vmatpush1.msra.mxu0 %v1104
    %1263 = vmatprep.subr.mxu0 %v1101
    %1264 = vmatpush1.msra.mxu0 %v1100
    %1265 = vmatprep.subr.mxu0 0.0
    %1266 = vmatpush2.msra.mxu0 0.0
    %1267 = vmatprep.subr.mxu0 0.0
    %1268 = vmatpush2.msra.mxu0 0.0
    %1269 = vmatprep.subr.mxu0 0.0
    %1270 = vmatpush2.msra.mxu0 0.0
    %1271 = vmatprep.subr.mxu0 0.0
    %1272 = vmatpush2.msra.mxu0 0.0
    %1273 = vmatprep.subr.mxu0 0.0
    %1274 = vmatpush2.msra.mxu0 0.0
    %1275 = vmatprep.subr.mxu0 0.0
    %1276 = vmatpush2.msra.mxu0 0.0
    %1277 = vmatprep.subr.mxu0 0.0
    %1278 = vmatpush2.msra.mxu0 0.0
    %1279 = vmatprep.subr.mxu0 0.0
    %1280 = vmatpush2.msra.mxu0 0.0
    %1281 = vmatprep.subr.mxu0 0.0
    %1282 = vmatpush2.msra.mxu0 0.0
    %1283 = vmatprep.subr.mxu0 0.0
    %1284 = vmatpush2.msra.mxu0 0.0
    %1285 = vmatprep.subr.mxu0 0.0
    %1286 = vmatpush2.msra.mxu0 0.0
    %1287 = vmatprep.subr.mxu0 0.0
    %1288 = vmatpush2.msra.mxu0 0.0
    %1289 = vmatprep.subr.mxu0 0.0
    %1290 = vmatpush2.msra.mxu0 0.0
    %1291 = vmatprep.subr.mxu0 0.0
    %1292 = vmatpush2.msra.mxu0 0.0
    %1293 = vmatprep.subr.mxu0 0.0
    %1294 = vmatpush2.msra.mxu0 0.0
    %1295 = vmatprep.subr.mxu0 0.0
    %1296 = vmatpush2.msra.mxu0 0.0
    %1297 = vmatprep.mubr.f32.mxu0 0.0
    %1298 = vmatmul.mubr.f32.gmra.mxu0 %v1088
    %v1299 = vpop.f32.mrf.mxu0
    %v1300 = vadd.f32 0.0, %v1299
    %v1301 = vpop.f32.mrf.mxu0
    %v1302 = vadd.f32 0.0, %v1301
    %1303 = vdwg.mxu0
    %v1304 = vadd.f32 %v1094, %v1229
    %v1305 = vadd.f32 %v1095, %v1231
    %v1306 = vadd.f32 %v1096, %v1300
    %v1307 = vadd.f32 %v1097, %v1302
    %v1308 = vxor.u32 %v1304, 2147483648
    %v1309 = vmul.f32 %v1308, 1.442695
    %v1310 = vpow.pop %v1309
    %v1311 = vadd.f32 %v1310, 1.0
    %v1312 = vrcp.pop %v1311
    %v1313 = vmul.f32 1.0, %v1312
    %v1314 = vxor.u32 %v1305, 2147483648
    %v1315 = vmul.f32 %v1314, 1.442695
    %v1316 = vpow.pop %v1315
    %v1317 = vadd.f32 %v1316, 1.0
    %v1318 = vrcp.pop %v1317
    %v1319 = vmul.f32 1.0, %v1318
    %v1320 = vtanh.pop %v1306
    %v1321 = vxor.u32 %v1307, 2147483648
    %v1322 = vmul.f32 %v1321, 1.442695
    %v1323 = vpow.pop %v1322
    %v1324 = vadd.f32 %v1323, 1.0
    %v1325 = vrcp.pop %v1324
    %v1326 = vmul.f32 1.0, %v1325
    %v1327 = vmul.f32 %v1319, %v1086
    %v1328 = vmul.f32 %v1313, %v1320
    %v1329 = vadd.f32 %v1327, %v1328
    %v1330 = vtanh.pop %v1329
    %v1331 = vmul.f32 %v1326, %v1330
    %s1332 = scalar_lea.vmem [#allocation3], 16
    %1333 = vst [vmem:[%s1332] sm:$0xff] %v1331
    %s1334 = smul.u32 3, 4
    %s1335 = smul.addr %s1334, 8
    %s1336 = scalar_lea.vmem [#allocation2], %s1335
    %v1337 = vld [vmem:[%s1336] sm:$0xff]
    %v1338 = vld [vmem:[%s1336 + $0x8] sm:$0xff]
    %v1339 = vld [vmem:[%s1336 + $0x10] sm:$0xff]
    %v1340 = vld [vmem:[%s1336 + $0x18] sm:$0xff]
    %v1341 = vld [vmem:[#allocation7] sm:$0xff]
    %v1342 = vld [vmem:[#allocation7 + $0x8] sm:$0xff]
    %v1343 = vld [vmem:[#allocation7 + $0x10] sm:$0xff]
    %v1344 = vld [vmem:[#allocation7 + $0x18] sm:$0xff]
    %v1345 = vld [vmem:[#allocation7 + $0x20] sm:$0xff]
    %v1346 = vld [vmem:[#allocation7 + $0x28] sm:$0xff]
    %v1347 = vld [vmem:[#allocation7 + $0x30] sm:$0xff]
    %v1348 = vld [vmem:[#allocation7 + $0x38] sm:$0xff]
    %v1349 = vld [vmem:[#allocation7 + $0x40] sm:$0xff]
    %v1350 = vld [vmem:[#allocation7 + $0x48] sm:$0xff]
    %v1351 = vld [vmem:[#allocation7 + $0x50] sm:$0xff]
    %v1352 = vld [vmem:[#allocation7 + $0x58] sm:$0xff]
    %v1353 = vld [vmem:[#allocation7 + $0x60] sm:$0xff]
    %v1354 = vld [vmem:[#allocation7 + $0x68] sm:$0xff]
    %v1355 = vld [vmem:[#allocation7 + $0x70] sm:$0xff]
    %v1356 = vld [vmem:[#allocation7 + $0x78] sm:$0xff]
    %v1357 = vld [vmem:[#allocation7 + $0x80] sm:$0xff]
    %v1358 = vld [vmem:[#allocation7 + $0x88] sm:$0xff]
    %v1359 = vld [vmem:[#allocation7 + $0x90] sm:$0xff]
    %v1360 = vld [vmem:[#allocation7 + $0x98] sm:$0xff]
    %v1361 = vld [vmem:[#allocation7 + $0xa0] sm:$0xff]
    %v1362 = vld [vmem:[#allocation7 + $0xa8] sm:$0xff]
    %v1363 = vld [vmem:[#allocation7 + $0xb0] sm:$0xff]
    %v1364 = vld [vmem:[#allocation7 + $0xb8] sm:$0xff]
    %v1365 = vld [vmem:[#allocation7 + $0xc0] sm:$0xff]
    %v1366 = vld [vmem:[#allocation7 + $0xc8] sm:$0xff]
    %v1367 = vld [vmem:[#allocation7 + $0xd0] sm:$0xff]
    %v1368 = vld [vmem:[#allocation7 + $0xd8] sm:$0xff]
    %v1369 = vld [vmem:[#allocation7 + $0xe0] sm:$0xff]
    %v1370 = vld [vmem:[#allocation7 + $0xe8] sm:$0xff]
    %v1371 = vld [vmem:[#allocation7 + $0xf0] sm:$0xff]
    %v1372 = vld [vmem:[#allocation7 + $0xf8] sm:$0xff]
    %v1373 = vld [vmem:[#allocation7 + $0x100] sm:$0xff]
    %v1374 = vld [vmem:[#allocation7 + $0x108] sm:$0xff]
    %v1375 = vld [vmem:[#allocation7 + $0x110] sm:$0xff]
    %v1376 = vld [vmem:[#allocation7 + $0x118] sm:$0xff]
    %v1377 = vld [vmem:[#allocation7 + $0x120] sm:$0xff]
    %v1378 = vld [vmem:[#allocation7 + $0x128] sm:$0xff]
    %v1379 = vld [vmem:[#allocation7 + $0x130] sm:$0xff]
    %v1380 = vld [vmem:[#allocation7 + $0x138] sm:$0xff]
    %v1381 = vld [vmem:[#allocation7 + $0x140] sm:$0xff]
    %v1382 = vld [vmem:[#allocation7 + $0x148] sm:$0xff]
    %v1383 = vld [vmem:[#allocation7 + $0x150] sm:$0xff]
    %v1384 = vld [vmem:[#allocation7 + $0x158] sm:$0xff]
    %v1385 = vld [vmem:[#allocation7 + $0x160] sm:$0xff]
    %v1386 = vld [vmem:[#allocation7 + $0x168] sm:$0xff]
    %v1387 = vld [vmem:[#allocation7 + $0x170] sm:$0xff]
    %v1388 = vld [vmem:[#allocation7 + $0x178] sm:$0xff]
    %v1389 = vld [vmem:[#allocation7 + $0x180] sm:$0xff]
    %v1390 = vld [vmem:[#allocation7 + $0x188] sm:$0xff]
    %v1391 = vld [vmem:[#allocation7 + $0x190] sm:$0xff]
    %v1392 = vld [vmem:[#allocation7 + $0x198] sm:$0xff]
    %v1393 = vld [vmem:[#allocation7 + $0x1a0] sm:$0xff]
    %v1394 = vld [vmem:[#allocation7 + $0x1a8] sm:$0xff]
    %v1395 = vld [vmem:[#allocation7 + $0x1b0] sm:$0xff]
    %v1396 = vld [vmem:[#allocation7 + $0x1b8] sm:$0xff]
    %v1397 = vld [vmem:[#allocation7 + $0x1c0] sm:$0xff]
    %v1398 = vld [vmem:[#allocation7 + $0x1c8] sm:$0xff]
    %v1399 = vld [vmem:[#allocation7 + $0x1d0] sm:$0xff]
    %v1400 = vld [vmem:[#allocation7 + $0x1d8] sm:$0xff]
    %v1401 = vld [vmem:[#allocation7 + $0x1e0] sm:$0xff]
    %v1402 = vld [vmem:[#allocation7 + $0x1e8] sm:$0xff]
    %v1403 = vld [vmem:[#allocation7 + $0x1f0] sm:$0xff]
    %v1404 = vld [vmem:[#allocation7 + $0x1f8] sm:$0xff]
    %1405 = vmatprep.subr.mxu0 %v1402
    %1406 = vmatpush1.msra.mxu0 %v1401
    %1407 = vmatprep.subr.mxu0 %v1398
    %1408 = vmatpush1.msra.mxu0 %v1397
    %1409 = vmatprep.subr.mxu0 %v1394
    %1410 = vmatpush1.msra.mxu0 %v1393
    %1411 = vmatprep.subr.mxu0 %v1390
    %1412 = vmatpush1.msra.mxu0 %v1389
    %1413 = vmatprep.subr.mxu0 %v1386
    %1414 = vmatpush1.msra.mxu0 %v1385
    %1415 = vmatprep.subr.mxu0 %v1382
    %1416 = vmatpush1.msra.mxu0 %v1381
    %1417 = vmatprep.subr.mxu0 %v1378
    %1418 = vmatpush1.msra.mxu0 %v1377
    %1419 = vmatprep.subr.mxu0 %v1374
    %1420 = vmatpush1.msra.mxu0 %v1373
    %1421 = vmatprep.subr.mxu0 %v1370
    %1422 = vmatpush1.msra.mxu0 %v1369
    %1423 = vmatprep.subr.mxu0 %v1366
    %1424 = vmatpush1.msra.mxu0 %v1365
    %1425 = vmatprep.subr.mxu0 %v1362
    %1426 = vmatpush1.msra.mxu0 %v1361
    %1427 = vmatprep.subr.mxu0 %v1358
    %1428 = vmatpush1.msra.mxu0 %v1357
    %1429 = vmatprep.subr.mxu0 %v1354
    %1430 = vmatpush1.msra.mxu0 %v1353
    %1431 = vmatprep.subr.mxu0 %v1350
    %1432 = vmatpush1.msra.mxu0 %v1349
    %1433 = vmatprep.subr.mxu0 %v1346
    %1434 = vmatpush1.msra.mxu0 %v1345
    %1435 = vmatprep.subr.mxu0 %v1342
    %1436 = vmatpush1.msra.mxu0 %v1341
    %1437 = vmatprep.subr.mxu0 0.0
    %1438 = vmatpush2.msra.mxu0 0.0
    %1439 = vmatprep.subr.mxu0 0.0
    %1440 = vmatpush2.msra.mxu0 0.0
    %1441 = vmatprep.subr.mxu0 0.0
    %1442 = vmatpush2.msra.mxu0 0.0
    %1443 = vmatprep.subr.mxu0 0.0
    %1444 = vmatpush2.msra.mxu0 0.0
    %1445 = vmatprep.subr.mxu0 0.0
    %1446 = vmatpush2.msra.mxu0 0.0
    %1447 = vmatprep.subr.mxu0 0.0
    %1448 = vmatpush2.msra.mxu0 0.0
    %1449 = vmatprep.subr.mxu0 0.0
    %1450 = vmatpush2.msra.mxu0 0.0
    %1451 = vmatprep.subr.mxu0 0.0
    %1452 = vmatpush2.msra.mxu0 0.0
    %1453 = vmatprep.subr.mxu0 0.0
    %1454 = vmatpush2.msra.mxu0 0.0
    %1455 = vmatprep.subr.mxu0 0.0
    %1456 = vmatpush2.msra.mxu0 0.0
    %1457 = vmatprep.subr.mxu0 0.0
    %1458 = vmatpush2.msra.mxu0 0.0
    %1459 = vmatprep.subr.mxu0 0.0
    %1460 = vmatpush2.msra.mxu0 0.0
    %1461 = vmatprep.subr.mxu0 0.0
    %1462 = vmatpush2.msra.mxu0 0.0
    %1463 = vmatprep.subr.mxu0 0.0
    %1464 = vmatpush2.msra.mxu0 0.0
    %1465 = vmatprep.subr.mxu0 0.0
    %1466 = vmatpush2.msra.mxu0 0.0
    %1467 = vmatprep.subr.mxu0 0.0
    %1468 = vmatpush2.msra.mxu0 0.0
    %1469 = vmatprep.mubr.f32.mxu0 0.0
    %1470 = vmatmul.mubr.f32.gmra.mxu0 %v1331
    %v1471 = vpop.f32.mrf.mxu0
    %v1472 = vadd.f32 0.0, %v1471
    %v1473 = vpop.f32.mrf.mxu0
    %v1474 = vadd.f32 0.0, %v1473
    %1475 = vdwg.mxu0
    %1476 = vmatprep.subr.mxu0 %v1404
    %1477 = vmatpush1.msra.mxu0 %v1403
    %1478 = vmatprep.subr.mxu0 %v1400
    %1479 = vmatpush1.msra.mxu0 %v1399
    %1480 = vmatprep.subr.mxu0 %v1396
    %1481 = vmatpush1.msra.mxu0 %v1395
    %1482 = vmatprep.subr.mxu0 %v1392
    %1483 = vmatpush1.msra.mxu0 %v1391
    %1484 = vmatprep.subr.mxu0 %v1388
    %1485 = vmatpush1.msra.mxu0 %v1387
    %1486 = vmatprep.subr.mxu0 %v1384
    %1487 = vmatpush1.msra.mxu0 %v1383
    %1488 = vmatprep.subr.mxu0 %v1380
    %1489 = vmatpush1.msra.mxu0 %v1379
    %1490 = vmatprep.subr.mxu0 %v1376
    %1491 = vmatpush1.msra.mxu0 %v1375
    %1492 = vmatprep.subr.mxu0 %v1372
    %1493 = vmatpush1.msra.mxu0 %v1371
    %1494 = vmatprep.subr.mxu0 %v1368
    %1495 = vmatpush1.msra.mxu0 %v1367
    %1496 = vmatprep.subr.mxu0 %v1364
    %1497 = vmatpush1.msra.mxu0 %v1363
    %1498 = vmatprep.subr.mxu0 %v1360
    %1499 = vmatpush1.msra.mxu0 %v1359
    %1500 = vmatprep.subr.mxu0 %v1356
    %1501 = vmatpush1.msra.mxu0 %v1355
    %1502 = vmatprep.subr.mxu0 %v1352
    %1503 = vmatpush1.msra.mxu0 %v1351
    %1504 = vmatprep.subr.mxu0 %v1348
    %1505 = vmatpush1.msra.mxu0 %v1347
    %1506 = vmatprep.subr.mxu0 %v1344
    %1507 = vmatpush1.msra.mxu0 %v1343
    %1508 = vmatprep.subr.mxu0 0.0
    %1509 = vmatpush2.msra.mxu0 0.0
    %1510 = vmatprep.subr.mxu0 0.0
    %1511 = vmatpush2.msra.mxu0 0.0
    %1512 = vmatprep.subr.mxu0 0.0
    %1513 = vmatpush2.msra.mxu0 0.0
    %1514 = vmatprep.subr.mxu0 0.0
    %1515 = vmatpush2.msra.mxu0 0.0
    %1516 = vmatprep.subr.mxu0 0.0
    %1517 = vmatpush2.msra.mxu0 0.0
    %1518 = vmatprep.subr.mxu0 0.0
    %1519 = vmatpush2.msra.mxu0 0.0
    %1520 = vmatprep.subr.mxu0 0.0
    %1521 = vmatpush2.msra.mxu0 0.0
    %1522 = vmatprep.subr.mxu0 0.0
    %1523 = vmatpush2.msra.mxu0 0.0
    %1524 = vmatprep.subr.mxu0 0.0
    %1525 = vmatpush2.msra.mxu0 0.0
    %1526 = vmatprep.subr.mxu0 0.0
    %1527 = vmatpush2.msra.mxu0 0.0
    %1528 = vmatprep.subr.mxu0 0.0
    %1529 = vmatpush2.msra.mxu0 0.0
    %1530 = vmatprep.subr.mxu0 0.0
    %1531 = vmatpush2.msra.mxu0 0.0
    %1532 = vmatprep.subr.mxu0 0.0
    %1533 = vmatpush2.msra.mxu0 0.0
    %1534 = vmatprep.subr.mxu0 0.0
    %1535 = vmatpush2.msra.mxu0 0.0
    %1536 = vmatprep.subr.mxu0 0.0
    %1537 = vmatpush2.msra.mxu0 0.0
    %1538 = vmatprep.subr.mxu0 0.0
    %1539 = vmatpush2.msra.mxu0 0.0
    %1540 = vmatprep.mubr.f32.mxu0 0.0
    %1541 = vmatmul.mubr.f32.gmra.mxu0 %v1331
    %v1542 = vpop.f32.mrf.mxu0
    %v1543 = vadd.f32 0.0, %v1542
    %v1544 = vpop.f32.mrf.mxu0
    %v1545 = vadd.f32 0.0, %v1544
    %1546 = vdwg.mxu0
    %v1547 = vadd.f32 %v1337, %v1472
    %v1548 = vadd.f32 %v1338, %v1474
    %v1549 = vadd.f32 %v1339, %v1543
    %v1550 = vadd.f32 %v1340, %v1545
    %v1551 = vxor.u32 %v1547, 2147483648
    %v1552 = vmul.f32 %v1551, 1.442695
    %v1553 = vpow.pop %v1552
    %v1554 = vadd.f32 %v1553, 1.0
    %v1555 = vrcp.pop %v1554
    %v1556 = vmul.f32 1.0, %v1555
    %v1557 = vxor.u32 %v1548, 2147483648
    %v1558 = vmul.f32 %v1557, 1.442695
    %v1559 = vpow.pop %v1558
    %v1560 = vadd.f32 %v1559, 1.0
    %v1561 = vrcp.pop %v1560
    %v1562 = vmul.f32 1.0, %v1561
    %v1563 = vtanh.pop %v1549
    %v1564 = vxor.u32 %v1550, 2147483648
    %v1565 = vmul.f32 %v1564, 1.442695
    %v1566 = vpow.pop %v1565
    %v1567 = vadd.f32 %v1566, 1.0
    %v1568 = vrcp.pop %v1567
    %v1569 = vmul.f32 1.0, %v1568
    %v1570 = vmul.f32 %v1562, %v1329
    %v1571 = vmul.f32 %v1556, %v1563
    %v1572 = vadd.f32 %v1570, %v1571
    %v1573 = vtanh.pop %v1572
    %v1574 = vmul.f32 %v1569, %v1573
    %s1575 = scalar_lea.vmem [#allocation3], 24
    %1576 = vst [vmem:[%s1575] sm:$0xff] %v1574
    %s1577 = smul.u32 4, 4
    %s1578 = smul.addr %s1577, 8
    %s1579 = scalar_lea.vmem [#allocation2], %s1578
    %v1580 = vld [vmem:[%s1579] sm:$0xff]
    %v1581 = vld [vmem:[%s1579 + $0x8] sm:$0xff]
    %v1582 = vld [vmem:[%s1579 + $0x10] sm:$0xff]
    %v1583 = vld [vmem:[%s1579 + $0x18] sm:$0xff]
    %v1584 = vld [vmem:[#allocation7] sm:$0xff]
    %v1585 = vld [vmem:[#allocation7 + $0x8] sm:$0xff]
    %v1586 = vld [vmem:[#allocation7 + $0x10] sm:$0xff]
    %v1587 = vld [vmem:[#allocation7 + $0x18] sm:$0xff]
    %v1588 = vld [vmem:[#allocation7 + $0x20] sm:$0xff]
    %v1589 = vld [vmem:[#allocation7 + $0x28] sm:$0xff]
    %v1590 = vld [vmem:[#allocation7 + $0x30] sm:$0xff]
    %v1591 = vld [vmem:[#allocation7 + $0x38] sm:$0xff]
    %v1592 = vld [vmem:[#allocation7 + $0x40] sm:$0xff]
    %v1593 = vld [vmem:[#allocation7 + $0x48] sm:$0xff]
    %v1594 = vld [vmem:[#allocation7 + $0x50] sm:$0xff]
    %v1595 = vld [vmem:[#allocation7 + $0x58] sm:$0xff]
    %v1596 = vld [vmem:[#allocation7 + $0x60] sm:$0xff]
    %v1597 = vld [vmem:[#allocation7 + $0x68] sm:$0xff]
    %v1598 = vld [vmem:[#allocation7 + $0x70] sm:$0xff]
    %v1599 = vld [vmem:[#allocation7 + $0x78] sm:$0xff]
    %v1600 = vld [vmem:[#allocation7 + $0x80] sm:$0xff]
    %v1601 = vld [vmem:[#allocation7 + $0x88] sm:$0xff]
    %v1602 = vld [vmem:[#allocation7 + $0x90] sm:$0xff]
    %v1603 = vld [vmem:[#allocation7 + $0x98] sm:$0xff]
    %v1604 = vld [vmem:[#allocation7 + $0xa0] sm:$0xff]
    %v1605 = vld [vmem:[#allocation7 + $0xa8] sm:$0xff]
    %v1606 = vld [vmem:[#allocation7 + $0xb0] sm:$0xff]
    %v1607 = vld [vmem:[#allocation7 + $0xb8] sm:$0xff]
    %v1608 = vld [vmem:[#allocation7 + $0xc0] sm:$0xff]
    %v1609 = vld [vmem:[#allocation7 + $0xc8] sm:$0xff]
    %v1610 = vld [vmem:[#allocation7 + $0xd0] sm:$0xff]
    %v1611 = vld [vmem:[#allocation7 + $0xd8] sm:$0xff]
    %v1612 = vld [vmem:[#allocation7 + $0xe0] sm:$0xff]
    %v1613 = vld [vmem:[#allocation7 + $0xe8] sm:$0xff]
    %v1614 = vld [vmem:[#allocation7 + $0xf0] sm:$0xff]
    %v1615 = vld [vmem:[#allocation7 + $0xf8] sm:$0xff]
    %v1616 = vld [vmem:[#allocation7 + $0x100] sm:$0xff]
    %v1617 = vld [vmem:[#allocation7 + $0x108] sm:$0xff]
    %v1618 = vld [vmem:[#allocation7 + $0x110] sm:$0xff]
    %v1619 = vld [vmem:[#allocation7 + $0x118] sm:$0xff]
    %v1620 = vld [vmem:[#allocation7 + $0x120] sm:$0xff]
    %v1621 = vld [vmem:[#allocation7 + $0x128] sm:$0xff]
    %v1622 = vld [vmem:[#allocation7 + $0x130] sm:$0xff]
    %v1623 = vld [vmem:[#allocation7 + $0x138] sm:$0xff]
    %v1624 = vld [vmem:[#allocation7 + $0x140] sm:$0xff]
    %v1625 = vld [vmem:[#allocation7 + $0x148] sm:$0xff]
    %v1626 = vld [vmem:[#allocation7 + $0x150] sm:$0xff]
    %v1627 = vld [vmem:[#allocation7 + $0x158] sm:$0xff]
    %v1628 = vld [vmem:[#allocation7 + $0x160] sm:$0xff]
    %v1629 = vld [vmem:[#allocation7 + $0x168] sm:$0xff]
    %v1630 = vld [vmem:[#allocation7 + $0x170] sm:$0xff]
    %v1631 = vld [vmem:[#allocation7 + $0x178] sm:$0xff]
    %v1632 = vld [vmem:[#allocation7 + $0x180] sm:$0xff]
    %v1633 = vld [vmem:[#allocation7 + $0x188] sm:$0xff]
    %v1634 = vld [vmem:[#allocation7 + $0x190] sm:$0xff]
    %v1635 = vld [vmem:[#allocation7 + $0x198] sm:$0xff]
    %v1636 = vld [vmem:[#allocation7 + $0x1a0] sm:$0xff]
    %v1637 = vld [vmem:[#allocation7 + $0x1a8] sm:$0xff]
    %v1638 = vld [vmem:[#allocation7 + $0x1b0] sm:$0xff]
    %v1639 = vld [vmem:[#allocation7 + $0x1b8] sm:$0xff]
    %v1640 = vld [vmem:[#allocation7 + $0x1c0] sm:$0xff]
    %v1641 = vld [vmem:[#allocation7 + $0x1c8] sm:$0xff]
    %v1642 = vld [vmem:[#allocation7 + $0x1d0] sm:$0xff]
    %v1643 = vld [vmem:[#allocation7 + $0x1d8] sm:$0xff]
    %v1644 = vld [vmem:[#allocation7 + $0x1e0] sm:$0xff]
    %v1645 = vld [vmem:[#allocation7 + $0x1e8] sm:$0xff]
    %v1646 = vld [vmem:[#allocation7 + $0x1f0] sm:$0xff]
    %v1647 = vld [vmem:[#allocation7 + $0x1f8] sm:$0xff]
    %1648 = vmatprep.subr.mxu0 %v1645
    %1649 = vmatpush1.msra.mxu0 %v1644
    %1650 = vmatprep.subr.mxu0 %v1641
    %1651 = vmatpush1.msra.mxu0 %v1640
    %1652 = vmatprep.subr.mxu0 %v1637
    %1653 = vmatpush1.msra.mxu0 %v1636
    %1654 = vmatprep.subr.mxu0 %v1633
    %1655 = vmatpush1.msra.mxu0 %v1632
    %1656 = vmatprep.subr.mxu0 %v1629
    %1657 = vmatpush1.msra.mxu0 %v1628
    %1658 = vmatprep.subr.mxu0 %v1625
    %1659 = vmatpush1.msra.mxu0 %v1624
    %1660 = vmatprep.subr.mxu0 %v1621
    %1661 = vmatpush1.msra.mxu0 %v1620
    %1662 = vmatprep.subr.mxu0 %v1617
    %1663 = vmatpush1.msra.mxu0 %v1616
    %1664 = vmatprep.subr.mxu0 %v1613
    %1665 = vmatpush1.msra.mxu0 %v1612
    %1666 = vmatprep.subr.mxu0 %v1609
    %1667 = vmatpush1.msra.mxu0 %v1608
    %1668 = vmatprep.subr.mxu0 %v1605
    %1669 = vmatpush1.msra.mxu0 %v1604
    %1670 = vmatprep.subr.mxu0 %v1601
    %1671 = vmatpush1.msra.mxu0 %v1600
    %1672 = vmatprep.subr.mxu0 %v1597
    %1673 = vmatpush1.msra.mxu0 %v1596
    %1674 = vmatprep.subr.mxu0 %v1593
    %1675 = vmatpush1.msra.mxu0 %v1592
    %1676 = vmatprep.subr.mxu0 %v1589
    %1677 = vmatpush1.msra.mxu0 %v1588
    %1678 = vmatprep.subr.mxu0 %v1585
    %1679 = vmatpush1.msra.mxu0 %v1584
    %1680 = vmatprep.subr.mxu0 0.0
    %1681 = vmatpush2.msra.mxu0 0.0
    %1682 = vmatprep.subr.mxu0 0.0
    %1683 = vmatpush2.msra.mxu0 0.0
    %1684 = vmatprep.subr.mxu0 0.0
    %1685 = vmatpush2.msra.mxu0 0.0
    %1686 = vmatprep.subr.mxu0 0.0
    %1687 = vmatpush2.msra.mxu0 0.0
    %1688 = vmatprep.subr.mxu0 0.0
    %1689 = vmatpush2.msra.mxu0 0.0
    %1690 = vmatprep.subr.mxu0 0.0
    %1691 = vmatpush2.msra.mxu0 0.0
    %1692 = vmatprep.subr.mxu0 0.0
    %1693 = vmatpush2.msra.mxu0 0.0
    %1694 = vmatprep.subr.mxu0 0.0
    %1695 = vmatpush2.msra.mxu0 0.0
    %1696 = vmatprep.subr.mxu0 0.0
    %1697 = vmatpush2.msra.mxu0 0.0
    %1698 = vmatprep.subr.mxu0 0.0
    %1699 = vmatpush2.msra.mxu0 0.0
    %1700 = vmatprep.subr.mxu0 0.0
    %1701 = vmatpush2.msra.mxu0 0.0
    %1702 = vmatprep.subr.mxu0 0.0
    %1703 = vmatpush2.msra.mxu0 0.0
    %1704 = vmatprep.subr.mxu0 0.0
    %1705 = vmatpush2.msra.mxu0 0.0
    %1706 = vmatprep.subr.mxu0 0.0
    %1707 = vmatpush2.msra.mxu0 0.0
    %1708 = vmatprep.subr.mxu0 0.0
    %1709 = vmatpush2.msra.mxu0 0.0
    %1710 = vmatprep.subr.mxu0 0.0
    %1711 = vmatpush2.msra.mxu0 0.0
    %1712 = vmatprep.mubr.f32.mxu0 0.0
    %1713 = vmatmul.mubr.f32.gmra.mxu0 %v1574
    %v1714 = vpop.f32.mrf.mxu0
    %v1715 = vadd.f32 0.0, %v1714
    %v1716 = vpop.f32.mrf.mxu0
    %v1717 = vadd.f32 0.0, %v1716
    %1718 = vdwg.mxu0
    %1719 = vmatprep.subr.mxu0 %v1647
    %1720 = vmatpush1.msra.mxu0 %v1646
    %1721 = vmatprep.subr.mxu0 %v1643
    %1722 = vmatpush1.msra.mxu0 %v1642
    %1723 = vmatprep.subr.mxu0 %v1639
    %1724 = vmatpush1.msra.mxu0 %v1638
    %1725 = vmatprep.subr.mxu0 %v1635
    %1726 = vmatpush1.msra.mxu0 %v1634
    %1727 = vmatprep.subr.mxu0 %v1631
    %1728 = vmatpush1.msra.mxu0 %v1630
    %1729 = vmatprep.subr.mxu0 %v1627
    %1730 = vmatpush1.msra.mxu0 %v1626
    %1731 = vmatprep.subr.mxu0 %v1623
    %1732 = vmatpush1.msra.mxu0 %v1622
    %1733 = vmatprep.subr.mxu0 %v1619
    %1734 = vmatpush1.msra.mxu0 %v1618
    %1735 = vmatprep.subr.mxu0 %v1615
    %1736 = vmatpush1.msra.mxu0 %v1614
    %1737 = vmatprep.subr.mxu0 %v1611
    %1738 = vmatpush1.msra.mxu0 %v1610
    %1739 = vmatprep.subr.mxu0 %v1607
    %1740 = vmatpush1.msra.mxu0 %v1606
    %1741 = vmatprep.subr.mxu0 %v1603
    %1742 = vmatpush1.msra.mxu0 %v1602
    %1743 = vmatprep.subr.mxu0 %v1599
    %1744 = vmatpush1.msra.mxu0 %v1598
    %1745 = vmatprep.subr.mxu0 %v1595
    %1746 = vmatpush1.msra.mxu0 %v1594
    %1747 = vmatprep.subr.mxu0 %v1591
    %1748 = vmatpush1.msra.mxu0 %v1590
    %1749 = vmatprep.subr.mxu0 %v1587
    %1750 = vmatpush1.msra.mxu0 %v1586
    %1751 = vmatprep.subr.mxu0 0.0
    %1752 = vmatpush2.msra.mxu0 0.0
    %1753 = vmatprep.subr.mxu0 0.0
    %1754 = vmatpush2.msra.mxu0 0.0
    %1755 = vmatprep.subr.mxu0 0.0
    %1756 = vmatpush2.msra.mxu0 0.0
    %1757 = vmatprep.subr.mxu0 0.0
    %1758 = vmatpush2.msra.mxu0 0.0
    %1759 = vmatprep.subr.mxu0 0.0
    %1760 = vmatpush2.msra.mxu0 0.0
    %1761 = vmatprep.subr.mxu0 0.0
    %1762 = vmatpush2.msra.mxu0 0.0
    %1763 = vmatprep.subr.mxu0 0.0
    %1764 = vmatpush2.msra.mxu0 0.0
    %1765 = vmatprep.subr.mxu0 0.0
    %1766 = vmatpush2.msra.mxu0 0.0
    %1767 = vmatprep.subr.mxu0 0.0
    %1768 = vmatpush2.msra.mxu0 0.0
    %1769 = vmatprep.subr.mxu0 0.0
    %1770 = vmatpush2.msra.mxu0 0.0
    %1771 = vmatprep.subr.mxu0 0.0
    %1772 = vmatpush2.msra.mxu0 0.0
    %1773 = vmatprep.subr.mxu0 0.0
    %1774 = vmatpush2.msra.mxu0 0.0
    %1775 = vmatprep.subr.mxu0 0.0
    %1776 = vmatpush2.msra.mxu0 0.0
    %1777 = vmatprep.subr.mxu0 0.0
    %1778 = vmatpush2.msra.mxu0 0.0
    %1779 = vmatprep.subr.mxu0 0.0
    %1780 = vmatpush2.msra.mxu0 0.0
    %1781 = vmatprep.subr.mxu0 0.0
    %1782 = vmatpush2.msra.mxu0 0.0
    %1783 = vmatprep.mubr.f32.mxu0 0.0
    %1784 = vmatmul.mubr.f32.gmra.mxu0 %v1574
    %v1785 = vpop.f32.mrf.mxu0
    %v1786 = vadd.f32 0.0, %v1785
    %v1787 = vpop.f32.mrf.mxu0
    %v1788 = vadd.f32 0.0, %v1787
    %1789 = vdwg.mxu0
    %v1790 = vadd.f32 %v1580, %v1715
    %v1791 = vadd.f32 %v1581, %v1717
    %v1792 = vadd.f32 %v1582, %v1786
    %v1793 = vadd.f32 %v1583, %v1788
    %v1794 = vxor.u32 %v1790, 2147483648
    %v1795 = vmul.f32 %v1794, 1.442695
    %v1796 = vpow.pop %v1795
    %v1797 = vadd.f32 %v1796, 1.0
    %v1798 = vrcp.pop %v1797
    %v1799 = vmul.f32 1.0, %v1798
    %v1800 = vxor.u32 %v1791, 2147483648
    %v1801 = vmul.f32 %v1800, 1.442695
    %v1802 = vpow.pop %v1801
    %v1803 = vadd.f32 %v1802, 1.0
    %v1804 = vrcp.pop %v1803
    %v1805 = vmul.f32 1.0, %v1804
    %v1806 = vtanh.pop %v1792
    %v1807 = vxor.u32 %v1793, 2147483648
    %v1808 = vmul.f32 %v1807, 1.442695
    %v1809 = vpow.pop %v1808
    %v1810 = vadd.f32 %v1809, 1.0
    %v1811 = vrcp.pop %v1810
    %v1812 = vmul.f32 1.0, %v1811
    %v1813 = vmul.f32 %v1805, %v1572
    %v1814 = vmul.f32 %v1799, %v1806
    %v1815 = vadd.f32 %v1813, %v1814
    %v1816 = vtanh.pop %v1815
    %v1817 = vmul.f32 %v1812, %v1816
    %s1818 = scalar_lea.vmem [#allocation3], 32
    %1819 = vst [vmem:[%s1818] sm:$0xff] %v1817
    %s1820 = smul.u32 5, 4
    %s1821 = smul.addr %s1820, 8
    %s1822 = scalar_lea.vmem [#allocation2], %s1821
    %v1823 = vld [vmem:[%s1822] sm:$0xff]
    %v1824 = vld [vmem:[%s1822 + $0x8] sm:$0xff]
    %v1825 = vld [vmem:[%s1822 + $0x10] sm:$0xff]
    %v1826 = vld [vmem:[%s1822 + $0x18] sm:$0xff]
    %v1827 = vld [vmem:[#allocation7] sm:$0xff]
    %v1828 = vld [vmem:[#allocation7 + $0x8] sm:$0xff]
    %v1829 = vld [vmem:[#allocation7 + $0x10] sm:$0xff]
    %v1830 = vld [vmem:[#allocation7 + $0x18] sm:$0xff]
    %v1831 = vld [vmem:[#allocation7 + $0x20] sm:$0xff]
    %v1832 = vld [vmem:[#allocation7 + $0x28] sm:$0xff]
    %v1833 = vld [vmem:[#allocation7 + $0x30] sm:$0xff]
    %v1834 = vld [vmem:[#allocation7 + $0x38] sm:$0xff]
    %v1835 = vld [vmem:[#allocation7 + $0x40] sm:$0xff]
    %v1836 = vld [vmem:[#allocation7 + $0x48] sm:$0xff]
    %v1837 = vld [vmem:[#allocation7 + $0x50] sm:$0xff]
    %v1838 = vld [vmem:[#allocation7 + $0x58] sm:$0xff]
    %v1839 = vld [vmem:[#allocation7 + $0x60] sm:$0xff]
    %v1840 = vld [vmem:[#allocation7 + $0x68] sm:$0xff]
    %v1841 = vld [vmem:[#allocation7 + $0x70] sm:$0xff]
    %v1842 = vld [vmem:[#allocation7 + $0x78] sm:$0xff]
    %v1843 = vld [vmem:[#allocation7 + $0x80] sm:$0xff]
    %v1844 = vld [vmem:[#allocation7 + $0x88] sm:$0xff]
    %v1845 = vld [vmem:[#allocation7 + $0x90] sm:$0xff]
    %v1846 = vld [vmem:[#allocation7 + $0x98] sm:$0xff]
    %v1847 = vld [vmem:[#allocation7 + $0xa0] sm:$0xff]
    %v1848 = vld [vmem:[#allocation7 + $0xa8] sm:$0xff]
    %v1849 = vld [vmem:[#allocation7 + $0xb0] sm:$0xff]
    %v1850 = vld [vmem:[#allocation7 + $0xb8] sm:$0xff]
    %v1851 = vld [vmem:[#allocation7 + $0xc0] sm:$0xff]
    %v1852 = vld [vmem:[#allocation7 + $0xc8] sm:$0xff]
    %v1853 = vld [vmem:[#allocation7 + $0xd0] sm:$0xff]
    %v1854 = vld [vmem:[#allocation7 + $0xd8] sm:$0xff]
    %v1855 = vld [vmem:[#allocation7 + $0xe0] sm:$0xff]
    %v1856 = vld [vmem:[#allocation7 + $0xe8] sm:$0xff]
    %v1857 = vld [vmem:[#allocation7 + $0xf0] sm:$0xff]
    %v1858 = vld [vmem:[#allocation7 + $0xf8] sm:$0xff]
    %v1859 = vld [vmem:[#allocation7 + $0x100] sm:$0xff]
    %v1860 = vld [vmem:[#allocation7 + $0x108] sm:$0xff]
    %v1861 = vld [vmem:[#allocation7 + $0x110] sm:$0xff]
    %v1862 = vld [vmem:[#allocation7 + $0x118] sm:$0xff]
    %v1863 = vld [vmem:[#allocation7 + $0x120] sm:$0xff]
    %v1864 = vld [vmem:[#allocation7 + $0x128] sm:$0xff]
    %v1865 = vld [vmem:[#allocation7 + $0x130] sm:$0xff]
    %v1866 = vld [vmem:[#allocation7 + $0x138] sm:$0xff]
    %v1867 = vld [vmem:[#allocation7 + $0x140] sm:$0xff]
    %v1868 = vld [vmem:[#allocation7 + $0x148] sm:$0xff]
    %v1869 = vld [vmem:[#allocation7 + $0x150] sm:$0xff]
    %v1870 = vld [vmem:[#allocation7 + $0x158] sm:$0xff]
    %v1871 = vld [vmem:[#allocation7 + $0x160] sm:$0xff]
    %v1872 = vld [vmem:[#allocation7 + $0x168] sm:$0xff]
    %v1873 = vld [vmem:[#allocation7 + $0x170] sm:$0xff]
    %v1874 = vld [vmem:[#allocation7 + $0x178] sm:$0xff]
    %v1875 = vld [vmem:[#allocation7 + $0x180] sm:$0xff]
    %v1876 = vld [vmem:[#allocation7 + $0x188] sm:$0xff]
    %v1877 = vld [vmem:[#allocation7 + $0x190] sm:$0xff]
    %v1878 = vld [vmem:[#allocation7 + $0x198] sm:$0xff]
    %v1879 = vld [vmem:[#allocation7 + $0x1a0] sm:$0xff]
    %v1880 = vld [vmem:[#allocation7 + $0x1a8] sm:$0xff]
    %v1881 = vld [vmem:[#allocation7 + $0x1b0] sm:$0xff]
    %v1882 = vld [vmem:[#allocation7 + $0x1b8] sm:$0xff]
    %v1883 = vld [vmem:[#allocation7 + $0x1c0] sm:$0xff]
    %v1884 = vld [vmem:[#allocation7 + $0x1c8] sm:$0xff]
    %v1885 = vld [vmem:[#allocation7 + $0x1d0] sm:$0xff]
    %v1886 = vld [vmem:[#allocation7 + $0x1d8] sm:$0xff]
    %v1887 = vld [vmem:[#allocation7 + $0x1e0] sm:$0xff]
    %v1888 = vld [vmem:[#allocation7 + $0x1e8] sm:$0xff]
    %v1889 = vld [vmem:[#allocation7 + $0x1f0] sm:$0xff]
    %v1890 = vld [vmem:[#allocation7 + $0x1f8] sm:$0xff]
    %1891 = vmatprep.subr.mxu0 %v1888
    %1892 = vmatpush1.msra.mxu0 %v1887
    %1893 = vmatprep.subr.mxu0 %v1884
    %1894 = vmatpush1.msra.mxu0 %v1883
    %1895 = vmatprep.subr.mxu0 %v1880
    %1896 = vmatpush1.msra.mxu0 %v1879
    %1897 = vmatprep.subr.mxu0 %v1876
    %1898 = vmatpush1.msra.mxu0 %v1875
    %1899 = vmatprep.subr.mxu0 %v1872
    %1900 = vmatpush1.msra.mxu0 %v1871
    %1901 = vmatprep.subr.mxu0 %v1868
    %1902 = vmatpush1.msra.mxu0 %v1867
    %1903 = vmatprep.subr.mxu0 %v1864
    %1904 = vmatpush1.msra.mxu0 %v1863
    %1905 = vmatprep.subr.mxu0 %v1860
    %1906 = vmatpush1.msra.mxu0 %v1859
    %1907 = vmatprep.subr.mxu0 %v1856
    %1908 = vmatpush1.msra.mxu0 %v1855
    %1909 = vmatprep.subr.mxu0 %v1852
    %1910 = vmatpush1.msra.mxu0 %v1851
    %1911 = vmatprep.subr.mxu0 %v1848
    %1912 = vmatpush1.msra.mxu0 %v1847
    %1913 = vmatprep.subr.mxu0 %v1844
    %1914 = vmatpush1.msra.mxu0 %v1843
    %1915 = vmatprep.subr.mxu0 %v1840
    %1916 = vmatpush1.msra.mxu0 %v1839
    %1917 = vmatprep.subr.mxu0 %v1836
    %1918 = vmatpush1.msra.mxu0 %v1835
    %1919 = vmatprep.subr.mxu0 %v1832
    %1920 = vmatpush1.msra.mxu0 %v1831
    %1921 = vmatprep.subr.mxu0 %v1828
    %1922 = vmatpush1.msra.mxu0 %v1827
    %1923 = vmatprep.subr.mxu0 0.0
    %1924 = vmatpush2.msra.mxu0 0.0
    %1925 = vmatprep.subr.mxu0 0.0
    %1926 = vmatpush2.msra.mxu0 0.0
    %1927 = vmatprep.subr.mxu0 0.0
    %1928 = vmatpush2.msra.mxu0 0.0
    %1929 = vmatprep.subr.mxu0 0.0
    %1930 = vmatpush2.msra.mxu0 0.0
    %1931 = vmatprep.subr.mxu0 0.0
    %1932 = vmatpush2.msra.mxu0 0.0
    %1933 = vmatprep.subr.mxu0 0.0
    %1934 = vmatpush2.msra.mxu0 0.0
    %1935 = vmatprep.subr.mxu0 0.0
    %1936 = vmatpush2.msra.mxu0 0.0
    %1937 = vmatprep.subr.mxu0 0.0
    %1938 = vmatpush2.msra.mxu0 0.0
    %1939 = vmatprep.subr.mxu0 0.0
    %1940 = vmatpush2.msra.mxu0 0.0
    %1941 = vmatprep.subr.mxu0 0.0
    %1942 = vmatpush2.msra.mxu0 0.0
    %1943 = vmatprep.subr.mxu0 0.0
    %1944 = vmatpush2.msra.mxu0 0.0
    %1945 = vmatprep.subr.mxu0 0.0
    %1946 = vmatpush2.msra.mxu0 0.0
    %1947 = vmatprep.subr.mxu0 0.0
    %1948 = vmatpush2.msra.mxu0 0.0
    %1949 = vmatprep.subr.mxu0 0.0
    %1950 = vmatpush2.msra.mxu0 0.0
    %1951 = vmatprep.subr.mxu0 0.0
    %1952 = vmatpush2.msra.mxu0 0.0
    %1953 = vmatprep.subr.mxu0 0.0
    %1954 = vmatpush2.msra.mxu0 0.0
    %1955 = vmatprep.mubr.f32.mxu0 0.0
    %1956 = vmatmul.mubr.f32.gmra.mxu0 %v1817
    %v1957 = vpop.f32.mrf.mxu0
    %v1958 = vadd.f32 0.0, %v1957
    %v1959 = vpop.f32.mrf.mxu0
    %v1960 = vadd.f32 0.0, %v1959
    %1961 = vdwg.mxu0
    %1962 = vmatprep.subr.mxu0 %v1890
    %1963 = vmatpush1.msra.mxu0 %v1889
    %1964 = vmatprep.subr.mxu0 %v1886
    %1965 = vmatpush1.msra.mxu0 %v1885
    %1966 = vmatprep.subr.mxu0 %v1882
    %1967 = vmatpush1.msra.mxu0 %v1881
    %1968 = vmatprep.subr.mxu0 %v1878
    %1969 = vmatpush1.msra.mxu0 %v1877
    %1970 = vmatprep.subr.mxu0 %v1874
    %1971 = vmatpush1.msra.mxu0 %v1873
    %1972 = vmatprep.subr.mxu0 %v1870
    %1973 = vmatpush1.msra.mxu0 %v1869
    %1974 = vmatprep.subr.mxu0 %v1866
    %1975 = vmatpush1.msra.mxu0 %v1865
    %1976 = vmatprep.subr.mxu0 %v1862
    %1977 = vmatpush1.msra.mxu0 %v1861
    %1978 = vmatprep.subr.mxu0 %v1858
    %1979 = vmatpush1.msra.mxu0 %v1857
    %1980 = vmatprep.subr.mxu0 %v1854
    %1981 = vmatpush1.msra.mxu0 %v1853
    %1982 = vmatprep.subr.mxu0 %v1850
    %1983 = vmatpush1.msra.mxu0 %v1849
    %1984 = vmatprep.subr.mxu0 %v1846
    %1985 = vmatpush1.msra.mxu0 %v1845
    %1986 = vmatprep.subr.mxu0 %v1842
    %1987 = vmatpush1.msra.mxu0 %v1841
    %1988 = vmatprep.subr.mxu0 %v1838
    %1989 = vmatpush1.msra.mxu0 %v1837
    %1990 = vmatprep.subr.mxu0 %v1834
    %1991 = vmatpush1.msra.mxu0 %v1833
    %1992 = vmatprep.subr.mxu0 %v1830
    %1993 = vmatpush1.msra.mxu0 %v1829
    %1994 = vmatprep.subr.mxu0 0.0
    %1995 = vmatpush2.msra.mxu0 0.0
    %1996 = vmatprep.subr.mxu0 0.0
    %1997 = vmatpush2.msra.mxu0 0.0
    %1998 = vmatprep.subr.mxu0 0.0
    %1999 = vmatpush2.msra.mxu0 0.0
    %2000 = vmatprep.subr.mxu0 0.0
    %2001 = vmatpush2.msra.mxu0 0.0
    %2002 = vmatprep.subr.mxu0 0.0
    %2003 = vmatpush2.msra.mxu0 0.0
    %2004 = vmatprep.subr.mxu0 0.0
    %2005 = vmatpush2.msra.mxu0 0.0
    %2006 = vmatprep.subr.mxu0 0.0
    %2007 = vmatpush2.msra.mxu0 0.0
    %2008 = vmatprep.subr.mxu0 0.0
    %2009 = vmatpush2.msra.mxu0 0.0
    %2010 = vmatprep.subr.mxu0 0.0
    %2011 = vmatpush2.msra.mxu0 0.0
    %2012 = vmatprep.subr.mxu0 0.0
    %2013 = vmatpush2.msra.mxu0 0.0
    %2014 = vmatprep.subr.mxu0 0.0
    %2015 = vmatpush2.msra.mxu0 0.0
    %2016 = vmatprep.subr.mxu0 0.0
    %2017 = vmatpush2.msra.mxu0 0.0
    %2018 = vmatprep.subr.mxu0 0.0
    %2019 = vmatpush2.msra.mxu0 0.0
    %2020 = vmatprep.subr.mxu0 0.0
    %2021 = vmatpush2.msra.mxu0 0.0
    %2022 = vmatprep.subr.mxu0 0.0
    %2023 = vmatpush2.msra.mxu0 0.0
    %2024 = vmatprep.subr.mxu0 0.0
    %2025 = vmatpush2.msra.mxu0 0.0
    %2026 = vmatprep.mubr.f32.mxu0 0.0
    %2027 = vmatmul.mubr.f32.gmra.mxu0 %v1817
    %v2028 = vpop.f32.mrf.mxu0
    %v2029 = vadd.f32 0.0, %v2028
    %v2030 = vpop.f32.mrf.mxu0
    %v2031 = vadd.f32 0.0, %v2030
    %2032 = vdwg.mxu0
    %v2033 = vadd.f32 %v1823, %v1958
    %v2034 = vadd.f32 %v1824, %v1960
    %v2035 = vadd.f32 %v1825, %v2029
    %v2036 = vadd.f32 %v1826, %v2031
    %v2037 = vxor.u32 %v2033, 2147483648
    %v2038 = vmul.f32 %v2037, 1.442695
    %v2039 = vpow.pop %v2038
    %v2040 = vadd.f32 %v2039, 1.0
    %v2041 = vrcp.pop %v2040
    %v2042 = vmul.f32 1.0, %v2041
    %v2043 = vxor.u32 %v2034, 2147483648
    %v2044 = vmul.f32 %v2043, 1.442695
    %v2045 = vpow.pop %v2044
    %v2046 = vadd.f32 %v2045, 1.0
    %v2047 = vrcp.pop %v2046
    %v2048 = vmul.f32 1.0, %v2047
    %v2049 = vtanh.pop %v2035
    %v2050 = vxor.u32 %v2036, 2147483648
    %v2051 = vmul.f32 %v2050, 1.442695
    %v2052 = vpow.pop %v2051
    %v2053 = vadd.f32 %v2052, 1.0
    %v2054 = vrcp.pop %v2053
    %v2055 = vmul.f32 1.0, %v2054
    %v2056 = vmul.f32 %v2048, %v1815
    %v2057 = vmul.f32 %v2042, %v2049
    %v2058 = vadd.f32 %v2056, %v2057
    %v2059 = vtanh.pop %v2058
    %v2060 = vmul.f32 %v2055, %v2059
    %s2061 = scalar_lea.vmem [#allocation3], 40
    %2062 = vst [vmem:[%s2061] sm:$0xff] %v2060
    %s2063 = smul.u32 6, 4
    %s2064 = smul.addr %s2063, 8
    %s2065 = scalar_lea.vmem [#allocation2], %s2064
    %v2066 = vld [vmem:[%s2065] sm:$0xff]
    %v2067 = vld [vmem:[%s2065 + $0x8] sm:$0xff]
    %v2068 = vld [vmem:[%s2065 + $0x10] sm:$0xff]
    %v2069 = vld [vmem:[%s2065 + $0x18] sm:$0xff]
    %v2070 = vld [vmem:[#allocation7] sm:$0xff]
    %v2071 = vld [vmem:[#allocation7 + $0x8] sm:$0xff]
    %v2072 = vld [vmem:[#allocation7 + $0x10] sm:$0xff]
    %v2073 = vld [vmem:[#allocation7 + $0x18] sm:$0xff]
    %v2074 = vld [vmem:[#allocation7 + $0x20] sm:$0xff]
    %v2075 = vld [vmem:[#allocation7 + $0x28] sm:$0xff]
    %v2076 = vld [vmem:[#allocation7 + $0x30] sm:$0xff]
    %v2077 = vld [vmem:[#allocation7 + $0x38] sm:$0xff]
    %v2078 = vld [vmem:[#allocation7 + $0x40] sm:$0xff]
    %v2079 = vld [vmem:[#allocation7 + $0x48] sm:$0xff]
    %v2080 = vld [vmem:[#allocation7 + $0x50] sm:$0xff]
    %v2081 = vld [vmem:[#allocation7 + $0x58] sm:$0xff]
    %v2082 = vld [vmem:[#allocation7 + $0x60] sm:$0xff]
    %v2083 = vld [vmem:[#allocation7 + $0x68] sm:$0xff]
    %v2084 = vld [vmem:[#allocation7 + $0x70] sm:$0xff]
    %v2085 = vld [vmem:[#allocation7 + $0x78] sm:$0xff]
    %v2086 = vld [vmem:[#allocation7 + $0x80] sm:$0xff]
    %v2087 = vld [vmem:[#allocation7 + $0x88] sm:$0xff]
    %v2088 = vld [vmem:[#allocation7 + $0x90] sm:$0xff]
    %v2089 = vld [vmem:[#allocation7 + $0x98] sm:$0xff]
    %v2090 = vld [vmem:[#allocation7 + $0xa0] sm:$0xff]
    %v2091 = vld [vmem:[#allocation7 + $0xa8] sm:$0xff]
    %v2092 = vld [vmem:[#allocation7 + $0xb0] sm:$0xff]
    %v2093 = vld [vmem:[#allocation7 + $0xb8] sm:$0xff]
    %v2094 = vld [vmem:[#allocation7 + $0xc0] sm:$0xff]
    %v2095 = vld [vmem:[#allocation7 + $0xc8] sm:$0xff]
    %v2096 = vld [vmem:[#allocation7 + $0xd0] sm:$0xff]
    %v2097 = vld [vmem:[#allocation7 + $0xd8] sm:$0xff]
    %v2098 = vld [vmem:[#allocation7 + $0xe0] sm:$0xff]
    %v2099 = vld [vmem:[#allocation7 + $0xe8] sm:$0xff]
    %v2100 = vld [vmem:[#allocation7 + $0xf0] sm:$0xff]
    %v2101 = vld [vmem:[#allocation7 + $0xf8] sm:$0xff]
    %v2102 = vld [vmem:[#allocation7 + $0x100] sm:$0xff]
    %v2103 = vld [vmem:[#allocation7 + $0x108] sm:$0xff]
    %v2104 = vld [vmem:[#allocation7 + $0x110] sm:$0xff]
    %v2105 = vld [vmem:[#allocation7 + $0x118] sm:$0xff]
    %v2106 = vld [vmem:[#allocation7 + $0x120] sm:$0xff]
    %v2107 = vld [vmem:[#allocation7 + $0x128] sm:$0xff]
    %v2108 = vld [vmem:[#allocation7 + $0x130] sm:$0xff]
    %v2109 = vld [vmem:[#allocation7 + $0x138] sm:$0xff]
    %v2110 = vld [vmem:[#allocation7 + $0x140] sm:$0xff]
    %v2111 = vld [vmem:[#allocation7 + $0x148] sm:$0xff]
    %v2112 = vld [vmem:[#allocation7 + $0x150] sm:$0xff]
    %v2113 = vld [vmem:[#allocation7 + $0x158] sm:$0xff]
    %v2114 = vld [vmem:[#allocation7 + $0x160] sm:$0xff]
    %v2115 = vld [vmem:[#allocation7 + $0x168] sm:$0xff]
    %v2116 = vld [vmem:[#allocation7 + $0x170] sm:$0xff]
    %v2117 = vld [vmem:[#allocation7 + $0x178] sm:$0xff]
    %v2118 = vld [vmem:[#allocation7 + $0x180] sm:$0xff]
    %v2119 = vld [vmem:[#allocation7 + $0x188] sm:$0xff]
    %v2120 = vld [vmem:[#allocation7 + $0x190] sm:$0xff]
    %v2121 = vld [vmem:[#allocation7 + $0x198] sm:$0xff]
    %v2122 = vld [vmem:[#allocation7 + $0x1a0] sm:$0xff]
    %v2123 = vld [vmem:[#allocation7 + $0x1a8] sm:$0xff]
    %v2124 = vld [vmem:[#allocation7 + $0x1b0] sm:$0xff]
    %v2125 = vld [vmem:[#allocation7 + $0x1b8] sm:$0xff]
    %v2126 = vld [vmem:[#allocation7 + $0x1c0] sm:$0xff]
    %v2127 = vld [vmem:[#allocation7 + $0x1c8] sm:$0xff]
    %v2128 = vld [vmem:[#allocation7 + $0x1d0] sm:$0xff]
    %v2129 = vld [vmem:[#allocation7 + $0x1d8] sm:$0xff]
    %v2130 = vld [vmem:[#allocation7 + $0x1e0] sm:$0xff]
    %v2131 = vld [vmem:[#allocation7 + $0x1e8] sm:$0xff]
    %v2132 = vld [vmem:[#allocation7 + $0x1f0] sm:$0xff]
    %v2133 = vld [vmem:[#allocation7 + $0x1f8] sm:$0xff]
    %2134 = vmatprep.subr.mxu0 %v2131
    %2135 = vmatpush1.msra.mxu0 %v2130
    %2136 = vmatprep.subr.mxu0 %v2127
    %2137 = vmatpush1.msra.mxu0 %v2126
    %2138 = vmatprep.subr.mxu0 %v2123
    %2139 = vmatpush1.msra.mxu0 %v2122
    %2140 = vmatprep.subr.mxu0 %v2119
    %2141 = vmatpush1.msra.mxu0 %v2118
    %2142 = vmatprep.subr.mxu0 %v2115
    %2143 = vmatpush1.msra.mxu0 %v2114
    %2144 = vmatprep.subr.mxu0 %v2111
    %2145 = vmatpush1.msra.mxu0 %v2110
    %2146 = vmatprep.subr.mxu0 %v2107
    %2147 = vmatpush1.msra.mxu0 %v2106
    %2148 = vmatprep.subr.mxu0 %v2103
    %2149 = vmatpush1.msra.mxu0 %v2102
    %2150 = vmatprep.subr.mxu0 %v2099
    %2151 = vmatpush1.msra.mxu0 %v2098
    %2152 = vmatprep.subr.mxu0 %v2095
    %2153 = vmatpush1.msra.mxu0 %v2094
    %2154 = vmatprep.subr.mxu0 %v2091
    %2155 = vmatpush1.msra.mxu0 %v2090
    %2156 = vmatprep.subr.mxu0 %v2087
    %2157 = vmatpush1.msra.mxu0 %v2086
    %2158 = vmatprep.subr.mxu0 %v2083
    %2159 = vmatpush1.msra.mxu0 %v2082
    %2160 = vmatprep.subr.mxu0 %v2079
    %2161 = vmatpush1.msra.mxu0 %v2078
    %2162 = vmatprep.subr.mxu0 %v2075
    %2163 = vmatpush1.msra.mxu0 %v2074
    %2164 = vmatprep.subr.mxu0 %v2071
    %2165 = vmatpush1.msra.mxu0 %v2070
    %2166 = vmatprep.subr.mxu0 0.0
    %2167 = vmatpush2.msra.mxu0 0.0
    %2168 = vmatprep.subr.mxu0 0.0
    %2169 = vmatpush2.msra.mxu0 0.0
    %2170 = vmatprep.subr.mxu0 0.0
    %2171 = vmatpush2.msra.mxu0 0.0
    %2172 = vmatprep.subr.mxu0 0.0
    %2173 = vmatpush2.msra.mxu0 0.0
    %2174 = vmatprep.subr.mxu0 0.0
    %2175 = vmatpush2.msra.mxu0 0.0
    %2176 = vmatprep.subr.mxu0 0.0
    %2177 = vmatpush2.msra.mxu0 0.0
    %2178 = vmatprep.subr.mxu0 0.0
    %2179 = vmatpush2.msra.mxu0 0.0
    %2180 = vmatprep.subr.mxu0 0.0
    %2181 = vmatpush2.msra.mxu0 0.0
    %2182 = vmatprep.subr.mxu0 0.0
    %2183 = vmatpush2.msra.mxu0 0.0
    %2184 = vmatprep.subr.mxu0 0.0
    %2185 = vmatpush2.msra.mxu0 0.0
    %2186 = vmatprep.subr.mxu0 0.0
    %2187 = vmatpush2.msra.mxu0 0.0
    %2188 = vmatprep.subr.mxu0 0.0
    %2189 = vmatpush2.msra.mxu0 0.0
    %2190 = vmatprep.subr.mxu0 0.0
    %2191 = vmatpush2.msra.mxu0 0.0
    %2192 = vmatprep.subr.mxu0 0.0
    %2193 = vmatpush2.msra.mxu0 0.0
    %2194 = vmatprep.subr.mxu0 0.0
    %2195 = vmatpush2.msra.mxu0 0.0
    %2196 = vmatprep.subr.mxu0 0.0
    %2197 = vmatpush2.msra.mxu0 0.0
    %2198 = vmatprep.mubr.f32.mxu0 0.0
    %2199 = vmatmul.mubr.f32.gmra.mxu0 %v2060
    %v2200 = vpop.f32.mrf.mxu0
    %v2201 = vadd.f32 0.0, %v2200
    %v2202 = vpop.f32.mrf.mxu0
    %v2203 = vadd.f32 0.0, %v2202
    %2204 = vdwg.mxu0
    %2205 = vmatprep.subr.mxu0 %v2133
    %2206 = vmatpush1.msra.mxu0 %v2132
    %2207 = vmatprep.subr.mxu0 %v2129
    %2208 = vmatpush1.msra.mxu0 %v2128
    %2209 = vmatprep.subr.mxu0 %v2125
    %2210 = vmatpush1.msra.mxu0 %v2124
    %2211 = vmatprep.subr.mxu0 %v2121
    %2212 = vmatpush1.msra.mxu0 %v2120
    %2213 = vmatprep.subr.mxu0 %v2117
    %2214 = vmatpush1.msra.mxu0 %v2116
    %2215 = vmatprep.subr.mxu0 %v2113
    %2216 = vmatpush1.msra.mxu0 %v2112
    %2217 = vmatprep.subr.mxu0 %v2109
    %2218 = vmatpush1.msra.mxu0 %v2108
    %2219 = vmatprep.subr.mxu0 %v2105
    %2220 = vmatpush1.msra.mxu0 %v2104
    %2221 = vmatprep.subr.mxu0 %v2101
    %2222 = vmatpush1.msra.mxu0 %v2100
    %2223 = vmatprep.subr.mxu0 %v2097
    %2224 = vmatpush1.msra.mxu0 %v2096
    %2225 = vmatprep.subr.mxu0 %v2093
    %2226 = vmatpush1.msra.mxu0 %v2092
    %2227 = vmatprep.subr.mxu0 %v2089
    %2228 = vmatpush1.msra.mxu0 %v2088
    %2229 = vmatprep.subr.mxu0 %v2085
    %2230 = vmatpush1.msra.mxu0 %v2084
    %2231 = vmatprep.subr.mxu0 %v2081
    %2232 = vmatpush1.msra.mxu0 %v2080
    %2233 = vmatprep.subr.mxu0 %v2077
    %2234 = vmatpush1.msra.mxu0 %v2076
    %2235 = vmatprep.subr.mxu0 %v2073
    %2236 = vmatpush1.msra.mxu0 %v2072
    %2237 = vmatprep.subr.mxu0 0.0
    %2238 = vmatpush2.msra.mxu0 0.0
    %2239 = vmatprep.subr.mxu0 0.0
    %2240 = vmatpush2.msra.mxu0 0.0
    %2241 = vmatprep.subr.mxu0 0.0
    %2242 = vmatpush2.msra.mxu0 0.0
    %2243 = vmatprep.subr.mxu0 0.0
    %2244 = vmatpush2.msra.mxu0 0.0
    %2245 = vmatprep.subr.mxu0 0.0
    %2246 = vmatpush2.msra.mxu0 0.0
    %2247 = vmatprep.subr.mxu0 0.0
    %2248 = vmatpush2.msra.mxu0 0.0
    %2249 = vmatprep.subr.mxu0 0.0
    %2250 = vmatpush2.msra.mxu0 0.0
    %2251 = vmatprep.subr.mxu0 0.0
    %2252 = vmatpush2.msra.mxu0 0.0
    %2253 = vmatprep.subr.mxu0 0.0
    %2254 = vmatpush2.msra.mxu0 0.0
    %2255 = vmatprep.subr.mxu0 0.0
    %2256 = vmatpush2.msra.mxu0 0.0
    %2257 = vmatprep.subr.mxu0 0.0
    %2258 = vmatpush2.msra.mxu0 0.0
    %2259 = vmatprep.subr.mxu0 0.0
    %2260 = vmatpush2.msra.mxu0 0.0
    %2261 = vmatprep.subr.mxu0 0.0
    %2262 = vmatpush2.msra.mxu0 0.0
    %2263 = vmatprep.subr.mxu0 0.0
    %2264 = vmatpush2.msra.mxu0 0.0
    %2265 = vmatprep.subr.mxu0 0.0
    %2266 = vmatpush2.msra.mxu0 0.0
    %2267 = vmatprep.subr.mxu0 0.0
    %2268 = vmatpush2.msra.mxu0 0.0
    %2269 = vmatprep.mubr.f32.mxu0 0.0
    %2270 = vmatmul.mubr.f32.gmra.mxu0 %v2060
    %v2271 = vpop.f32.mrf.mxu0
    %v2272 = vadd.f32 0.0, %v2271
    %v2273 = vpop.f32.mrf.mxu0
    %v2274 = vadd.f32 0.0, %v2273
    %2275 = vdwg.mxu0
    %v2276 = vadd.f32 %v2066, %v2201
    %v2277 = vadd.f32 %v2067, %v2203
    %v2278 = vadd.f32 %v2068, %v2272
    %v2279 = vadd.f32 %v2069, %v2274
    %v2280 = vxor.u32 %v2276, 2147483648
    %v2281 = vmul.f32 %v2280, 1.442695
    %v2282 = vpow.pop %v2281
    %v2283 = vadd.f32 %v2282, 1.0
    %v2284 = vrcp.pop %v2283
    %v2285 = vmul.f32 1.0, %v2284
    %v2286 = vxor.u32 %v2277, 2147483648
    %v2287 = vmul.f32 %v2286, 1.442695
    %v2288 = vpow.pop %v2287
    %v2289 = vadd.f32 %v2288, 1.0
    %v2290 = vrcp.pop %v2289
    %v2291 = vmul.f32 1.0, %v2290
    %v2292 = vtanh.pop %v2278
    %v2293 = vxor.u32 %v2279, 2147483648
    %v2294 = vmul.f32 %v2293, 1.442695
    %v2295 = vpow.pop %v2294
    %v2296 = vadd.f32 %v2295, 1.0
    %v2297 = vrcp.pop %v2296
    %v2298 = vmul.f32 1.0, %v2297
    %v2299 = vmul.f32 %v2291, %v2058
    %v2300 = vmul.f32 %v2285, %v2292
    %v2301 = vadd.f32 %v2299, %v2300
    %v2302 = vtanh.pop %v2301
    %v2303 = vmul.f32 %v2298, %v2302
    %s2304 = scalar_lea.vmem [#allocation3], 48
    %2305 = vst [vmem:[%s2304] sm:$0xff] %v2303
    %s2306 = smul.u32 7, 4
    %s2307 = smul.addr %s2306, 8
    %s2308 = scalar_lea.vmem [#allocation2], %s2307
    %v2309 = vld [vmem:[%s2308] sm:$0xff]
    %v2310 = vld [vmem:[%s2308 + $0x8] sm:$0xff]
    %v2311 = vld [vmem:[%s2308 + $0x10] sm:$0xff]
    %v2312 = vld [vmem:[%s2308 + $0x18] sm:$0xff]
    %v2313 = vld [vmem:[#allocation7] sm:$0xff]
    %v2314 = vld [vmem:[#allocation7 + $0x8] sm:$0xff]
    %v2315 = vld [vmem:[#allocation7 + $0x10] sm:$0xff]
    %v2316 = vld [vmem:[#allocation7 + $0x18] sm:$0xff]
    %v2317 = vld [vmem:[#allocation7 + $0x20] sm:$0xff]
    %v2318 = vld [vmem:[#allocation7 + $0x28] sm:$0xff]
    %v2319 = vld [vmem:[#allocation7 + $0x30] sm:$0xff]
    %v2320 = vld [vmem:[#allocation7 + $0x38] sm:$0xff]
    %v2321 = vld [vmem:[#allocation7 + $0x40] sm:$0xff]
    %v2322 = vld [vmem:[#allocation7 + $0x48] sm:$0xff]
    %v2323 = vld [vmem:[#allocation7 + $0x50] sm:$0xff]
    %v2324 = vld [vmem:[#allocation7 + $0x58] sm:$0xff]
    %v2325 = vld [vmem:[#allocation7 + $0x60] sm:$0xff]
    %v2326 = vld [vmem:[#allocation7 + $0x68] sm:$0xff]
    %v2327 = vld [vmem:[#allocation7 + $0x70] sm:$0xff]
    %v2328 = vld [vmem:[#allocation7 + $0x78] sm:$0xff]
    %v2329 = vld [vmem:[#allocation7 + $0x80] sm:$0xff]
    %v2330 = vld [vmem:[#allocation7 + $0x88] sm:$0xff]
    %v2331 = vld [vmem:[#allocation7 + $0x90] sm:$0xff]
    %v2332 = vld [vmem:[#allocation7 + $0x98] sm:$0xff]
    %v2333 = vld [vmem:[#allocation7 + $0xa0] sm:$0xff]
    %v2334 = vld [vmem:[#allocation7 + $0xa8] sm:$0xff]
    %v2335 = vld [vmem:[#allocation7 + $0xb0] sm:$0xff]
    %v2336 = vld [vmem:[#allocation7 + $0xb8] sm:$0xff]
    %v2337 = vld [vmem:[#allocation7 + $0xc0] sm:$0xff]
    %v2338 = vld [vmem:[#allocation7 + $0xc8] sm:$0xff]
    %v2339 = vld [vmem:[#allocation7 + $0xd0] sm:$0xff]
    %v2340 = vld [vmem:[#allocation7 + $0xd8] sm:$0xff]
    %v2341 = vld [vmem:[#allocation7 + $0xe0] sm:$0xff]
    %v2342 = vld [vmem:[#allocation7 + $0xe8] sm:$0xff]
    %v2343 = vld [vmem:[#allocation7 + $0xf0] sm:$0xff]
    %v2344 = vld [vmem:[#allocation7 + $0xf8] sm:$0xff]
    %v2345 = vld [vmem:[#allocation7 + $0x100] sm:$0xff]
    %v2346 = vld [vmem:[#allocation7 + $0x108] sm:$0xff]
    %v2347 = vld [vmem:[#allocation7 + $0x110] sm:$0xff]
    %v2348 = vld [vmem:[#allocation7 + $0x118] sm:$0xff]
    %v2349 = vld [vmem:[#allocation7 + $0x120] sm:$0xff]
    %v2350 = vld [vmem:[#allocation7 + $0x128] sm:$0xff]
    %v2351 = vld [vmem:[#allocation7 + $0x130] sm:$0xff]
    %v2352 = vld [vmem:[#allocation7 + $0x138] sm:$0xff]
    %v2353 = vld [vmem:[#allocation7 + $0x140] sm:$0xff]
    %v2354 = vld [vmem:[#allocation7 + $0x148] sm:$0xff]
    %v2355 = vld [vmem:[#allocation7 + $0x150] sm:$0xff]
    %v2356 = vld [vmem:[#allocation7 + $0x158] sm:$0xff]
    %v2357 = vld [vmem:[#allocation7 + $0x160] sm:$0xff]
    %v2358 = vld [vmem:[#allocation7 + $0x168] sm:$0xff]
    %v2359 = vld [vmem:[#allocation7 + $0x170] sm:$0xff]
    %v2360 = vld [vmem:[#allocation7 + $0x178] sm:$0xff]
    %v2361 = vld [vmem:[#allocation7 + $0x180] sm:$0xff]
    %v2362 = vld [vmem:[#allocation7 + $0x188] sm:$0xff]
    %v2363 = vld [vmem:[#allocation7 + $0x190] sm:$0xff]
    %v2364 = vld [vmem:[#allocation7 + $0x198] sm:$0xff]
    %v2365 = vld [vmem:[#allocation7 + $0x1a0] sm:$0xff]
    %v2366 = vld [vmem:[#allocation7 + $0x1a8] sm:$0xff]
    %v2367 = vld [vmem:[#allocation7 + $0x1b0] sm:$0xff]
    %v2368 = vld [vmem:[#allocation7 + $0x1b8] sm:$0xff]
    %v2369 = vld [vmem:[#allocation7 + $0x1c0] sm:$0xff]
    %v2370 = vld [vmem:[#allocation7 + $0x1c8] sm:$0xff]
    %v2371 = vld [vmem:[#allocation7 + $0x1d0] sm:$0xff]
    %v2372 = vld [vmem:[#allocation7 + $0x1d8] sm:$0xff]
    %v2373 = vld [vmem:[#allocation7 + $0x1e0] sm:$0xff]
    %v2374 = vld [vmem:[#allocation7 + $0x1e8] sm:$0xff]
    %v2375 = vld [vmem:[#allocation7 + $0x1f0] sm:$0xff]
    %v2376 = vld [vmem:[#allocation7 + $0x1f8] sm:$0xff]
    %2377 = vmatprep.subr.mxu0 %v2374
    %2378 = vmatpush1.msra.mxu0 %v2373
    %2379 = vmatprep.subr.mxu0 %v2370
    %2380 = vmatpush1.msra.mxu0 %v2369
    %2381 = vmatprep.subr.mxu0 %v2366
    %2382 = vmatpush1.msra.mxu0 %v2365
    %2383 = vmatprep.subr.mxu0 %v2362
    %2384 = vmatpush1.msra.mxu0 %v2361
    %2385 = vmatprep.subr.mxu0 %v2358
    %2386 = vmatpush1.msra.mxu0 %v2357
    %2387 = vmatprep.subr.mxu0 %v2354
    %2388 = vmatpush1.msra.mxu0 %v2353
    %2389 = vmatprep.subr.mxu0 %v2350
    %2390 = vmatpush1.msra.mxu0 %v2349
    %2391 = vmatprep.subr.mxu0 %v2346
    %2392 = vmatpush1.msra.mxu0 %v2345
    %2393 = vmatprep.subr.mxu0 %v2342
    %2394 = vmatpush1.msra.mxu0 %v2341
    %2395 = vmatprep.subr.mxu0 %v2338
    %2396 = vmatpush1.msra.mxu0 %v2337
    %2397 = vmatprep.subr.mxu0 %v2334
    %2398 = vmatpush1.msra.mxu0 %v2333
    %2399 = vmatprep.subr.mxu0 %v2330
    %2400 = vmatpush1.msra.mxu0 %v2329
    %2401 = vmatprep.subr.mxu0 %v2326
    %2402 = vmatpush1.msra.mxu0 %v2325
    %2403 = vmatprep.subr.mxu0 %v2322
    %2404 = vmatpush1.msra.mxu0 %v2321
    %2405 = vmatprep.subr.mxu0 %v2318
    %2406 = vmatpush1.msra.mxu0 %v2317
    %2407 = vmatprep.subr.mxu0 %v2314
    %2408 = vmatpush1.msra.mxu0 %v2313
    %2409 = vmatprep.subr.mxu0 0.0
    %2410 = vmatpush2.msra.mxu0 0.0
    %2411 = vmatprep.subr.mxu0 0.0
    %2412 = vmatpush2.msra.mxu0 0.0
    %2413 = vmatprep.subr.mxu0 0.0
    %2414 = vmatpush2.msra.mxu0 0.0
    %2415 = vmatprep.subr.mxu0 0.0
    %2416 = vmatpush2.msra.mxu0 0.0
    %2417 = vmatprep.subr.mxu0 0.0
    %2418 = vmatpush2.msra.mxu0 0.0
    %2419 = vmatprep.subr.mxu0 0.0
    %2420 = vmatpush2.msra.mxu0 0.0
    %2421 = vmatprep.subr.mxu0 0.0
    %2422 = vmatpush2.msra.mxu0 0.0
    %2423 = vmatprep.subr.mxu0 0.0
    %2424 = vmatpush2.msra.mxu0 0.0
    %2425 = vmatprep.subr.mxu0 0.0
    %2426 = vmatpush2.msra.mxu0 0.0
    %2427 = vmatprep.subr.mxu0 0.0
    %2428 = vmatpush2.msra.mxu0 0.0
    %2429 = vmatprep.subr.mxu0 0.0
    %2430 = vmatpush2.msra.mxu0 0.0
    %2431 = vmatprep.subr.mxu0 0.0
    %2432 = vmatpush2.msra.mxu0 0.0
    %2433 = vmatprep.subr.mxu0 0.0
    %2434 = vmatpush2.msra.mxu0 0.0
    %2435 = vmatprep.subr.mxu0 0.0
    %2436 = vmatpush2.msra.mxu0 0.0
    %2437 = vmatprep.subr.mxu0 0.0
    %2438 = vmatpush2.msra.mxu0 0.0
    %2439 = vmatprep.subr.mxu0 0.0
    %2440 = vmatpush2.msra.mxu0 0.0
    %2441 = vmatprep.mubr.f32.mxu0 0.0
    %2442 = vmatmul.mubr.f32.gmra.mxu0 %v2303
    %v2443 = vpop.f32.mrf.mxu0
    %v2444 = vadd.f32 0.0, %v2443
    %v2445 = vpop.f32.mrf.mxu0
    %v2446 = vadd.f32 0.0, %v2445
    %2447 = vdwg.mxu0
    %2448 = vmatprep.subr.mxu0 %v2376
    %2449 = vmatpush1.msra.mxu0 %v2375
    %2450 = vmatprep.subr.mxu0 %v2372
    %2451 = vmatpush1.msra.mxu0 %v2371
    %2452 = vmatprep.subr.mxu0 %v2368
    %2453 = vmatpush1.msra.mxu0 %v2367
    %2454 = vmatprep.subr.mxu0 %v2364
    %2455 = vmatpush1.msra.mxu0 %v2363
    %2456 = vmatprep.subr.mxu0 %v2360
    %2457 = vmatpush1.msra.mxu0 %v2359
    %2458 = vmatprep.subr.mxu0 %v2356
    %2459 = vmatpush1.msra.mxu0 %v2355
    %2460 = vmatprep.subr.mxu0 %v2352
    %2461 = vmatpush1.msra.mxu0 %v2351
    %2462 = vmatprep.subr.mxu0 %v2348
    %2463 = vmatpush1.msra.mxu0 %v2347
    %2464 = vmatprep.subr.mxu0 %v2344
    %2465 = vmatpush1.msra.mxu0 %v2343
    %2466 = vmatprep.subr.mxu0 %v2340
    %2467 = vmatpush1.msra.mxu0 %v2339
    %2468 = vmatprep.subr.mxu0 %v2336
    %2469 = vmatpush1.msra.mxu0 %v2335
    %2470 = vmatprep.subr.mxu0 %v2332
    %2471 = vmatpush1.msra.mxu0 %v2331
    %2472 = vmatprep.subr.mxu0 %v2328
    %2473 = vmatpush1.msra.mxu0 %v2327
    %2474 = vmatprep.subr.mxu0 %v2324
    %2475 = vmatpush1.msra.mxu0 %v2323
    %2476 = vmatprep.subr.mxu0 %v2320
    %2477 = vmatpush1.msra.mxu0 %v2319
    %2478 = vmatprep.subr.mxu0 %v2316
    %2479 = vmatpush1.msra.mxu0 %v2315
    %2480 = vmatprep.subr.mxu0 0.0
    %2481 = vmatpush2.msra.mxu0 0.0
    %2482 = vmatprep.subr.mxu0 0.0
    %2483 = vmatpush2.msra.mxu0 0.0
    %2484 = vmatprep.subr.mxu0 0.0
    %2485 = vmatpush2.msra.mxu0 0.0
    %2486 = vmatprep.subr.mxu0 0.0
    %2487 = vmatpush2.msra.mxu0 0.0
    %2488 = vmatprep.subr.mxu0 0.0
    %2489 = vmatpush2.msra.mxu0 0.0
    %2490 = vmatprep.subr.mxu0 0.0
    %2491 = vmatpush2.msra.mxu0 0.0
    %2492 = vmatprep.subr.mxu0 0.0
    %2493 = vmatpush2.msra.mxu0 0.0
    %2494 = vmatprep.subr.mxu0 0.0
    %2495 = vmatpush2.msra.mxu0 0.0
    %2496 = vmatprep.subr.mxu0 0.0
    %2497 = vmatpush2.msra.mxu0 0.0
    %2498 = vmatprep.subr.mxu0 0.0
    %2499 = vmatpush2.msra.mxu0 0.0
    %2500 = vmatprep.subr.mxu0 0.0
    %2501 = vmatpush2.msra.mxu0 0.0
    %2502 = vmatprep.subr.mxu0 0.0
    %2503 = vmatpush2.msra.mxu0 0.0
    %2504 = vmatprep.subr.mxu0 0.0
    %2505 = vmatpush2.msra.mxu0 0.0
    %2506 = vmatprep.subr.mxu0 0.0
    %2507 = vmatpush2.msra.mxu0 0.0
    %2508 = vmatprep.subr.mxu0 0.0
    %2509 = vmatpush2.msra.mxu0 0.0
    %2510 = vmatprep.subr.mxu0 0.0
    %2511 = vmatpush2.msra.mxu0 0.0
    %2512 = vmatprep.mubr.f32.mxu0 0.0
    %2513 = vmatmul.mubr.f32.gmra.mxu0 %v2303
    %v2514 = vpop.f32.mrf.mxu0
    %v2515 = vadd.f32 0.0, %v2514
    %v2516 = vpop.f32.mrf.mxu0
    %v2517 = vadd.f32 0.0, %v2516
    %2518 = vdwg.mxu0
    %v2519 = vadd.f32 %v2309, %v2444
    %v2520 = vadd.f32 %v2310, %v2446
    %v2521 = vadd.f32 %v2311, %v2515
    %v2522 = vadd.f32 %v2312, %v2517
    %v2523 = vxor.u32 %v2519, 2147483648
    %v2524 = vmul.f32 %v2523, 1.442695
    %v2525 = vpow.pop %v2524
    %v2526 = vadd.f32 %v2525, 1.0
    %v2527 = vrcp.pop %v2526
    %v2528 = vmul.f32 1.0, %v2527
    %v2529 = vxor.u32 %v2520, 2147483648
    %v2530 = vmul.f32 %v2529, 1.442695
    %v2531 = vpow.pop %v2530
    %v2532 = vadd.f32 %v2531, 1.0
    %v2533 = vrcp.pop %v2532
    %v2534 = vmul.f32 1.0, %v2533
    %v2535 = vtanh.pop %v2521
    %v2536 = vxor.u32 %v2522, 2147483648
    %v2537 = vmul.f32 %v2536, 1.442695
    %v2538 = vpow.pop %v2537
    %v2539 = vadd.f32 %v2538, 1.0
    %v2540 = vrcp.pop %v2539
    %v2541 = vmul.f32 1.0, %v2540
    %v2542 = vmul.f32 %v2534, %v2301
    %v2543 = vmul.f32 %v2528, %v2535
    %v2544 = vadd.f32 %v2542, %v2543
    %v2545 = vtanh.pop %v2544
    %v2546 = vmul.f32 %v2541, %v2545
    %s2547 = scalar_lea.vmem [#allocation3], 56
    %2548 = vst [vmem:[%s2547] sm:$0xff] %v2546
    %2549 = vst [vmem:[#allocation11] sm:$0xff] %v2546
    %2550 = vst [vmem:[#allocation13] sm:$0xff] %v2544
    %v2551 = vld [vmem:[#allocation3] sm:$0xff]
    %v2552 = vld [vmem:[#allocation3 + $0x8] sm:$0xff]
    %v2553 = vld [vmem:[#allocation3 + $0x10] sm:$0xff]
    %v2554 = vld [vmem:[#allocation3 + $0x18] sm:$0xff]
    %v2555 = vld [vmem:[#allocation3 + $0x20] sm:$0xff]
    %v2556 = vld [vmem:[#allocation3 + $0x28] sm:$0xff]
    %v2557 = vld [vmem:[#allocation3 + $0x30] sm:$0xff]
    %v2558 = vld [vmem:[#allocation3 + $0x38] sm:$0xff]
    %v2559 = vld [vmem:[#allocation9] sm:$0xff]
    %v2560 = vld [vmem:[#allocation9 + $0x8] sm:$0xff]
    %v2561 = vld [vmem:[#allocation9 + $0x10] sm:$0xff]
    %v2562 = vld [vmem:[#allocation9 + $0x18] sm:$0xff]
    %v2563 = vld [vmem:[#allocation9 + $0x20] sm:$0xff]
    %v2564 = vld [vmem:[#allocation9 + $0x28] sm:$0xff]
    %v2565 = vld [vmem:[#allocation9 + $0x30] sm:$0xff]
    %v2566 = vld [vmem:[#allocation9 + $0x38] sm:$0xff]
    %v2567 = vld [vmem:[#allocation9 + $0x40] sm:$0xff]
    %v2568 = vld [vmem:[#allocation9 + $0x48] sm:$0xff]
    %v2569 = vld [vmem:[#allocation9 + $0x50] sm:$0xff]
    %v2570 = vld [vmem:[#allocation9 + $0x58] sm:$0xff]
    %v2571 = vld [vmem:[#allocation9 + $0x60] sm:$0xff]
    %v2572 = vld [vmem:[#allocation9 + $0x68] sm:$0xff]
    %v2573 = vld [vmem:[#allocation9 + $0x70] sm:$0xff]
    %v2574 = vld [vmem:[#allocation9 + $0x78] sm:$0xff]
    %v2575 = vld [vmem:[%s7] sm:$0x1]
    %v2577 = vlaneseq
    %v2578 = vshrl.u32 %v2577, 7
    %v2579 = vsub.s32 0, %v2578
    %v2580 = vrot.slane %v2575, %v2579
    %2582 = vmatprep.subr.mxu0 0.0
    %2583 = vmatpush1.msra.mxu0 %v2574
    %2584 = vmatprep.subr.mxu0 0.0
    %2585 = vmatpush1.msra.mxu0 %v2573
    %2586 = vmatprep.subr.mxu0 0.0
    %2587 = vmatpush1.msra.mxu0 %v2572
    %2588 = vmatprep.subr.mxu0 0.0
    %2589 = vmatpush1.msra.mxu0 %v2571
    %2590 = vmatprep.subr.mxu0 0.0
    %2591 = vmatpush1.msra.mxu0 %v2570
    %2592 = vmatprep.subr.mxu0 0.0
    %2593 = vmatpush1.msra.mxu0 %v2569
    %2594 = vmatprep.subr.mxu0 0.0
    %2595 = vmatpush1.msra.mxu0 %v2568
    %2596 = vmatprep.subr.mxu0 0.0
    %2597 = vmatpush1.msra.mxu0 %v2567
    %2598 = vmatprep.subr.mxu0 0.0
    %2599 = vmatpush1.msra.mxu0 %v2566
    %2600 = vmatprep.subr.mxu0 0.0
    %2601 = vmatpush1.msra.mxu0 %v2565
    %2602 = vmatprep.subr.mxu0 0.0
    %2603 = vmatpush1.msra.mxu0 %v2564
    %2604 = vmatprep.subr.mxu0 0.0
    %2605 = vmatpush1.msra.mxu0 %v2563
    %2606 = vmatprep.subr.mxu0 0.0
    %2607 = vmatpush1.msra.mxu0 %v2562
    %2608 = vmatprep.subr.mxu0 0.0
    %2609 = vmatpush1.msra.mxu0 %v2561
    %2610 = vmatprep.subr.mxu0 0.0
    %2611 = vmatpush1.msra.mxu0 %v2560
    %2612 = vmatprep.subr.mxu0 0.0
    %2613 = vmatpush1.msra.mxu0 %v2559
    %2614 = vmatprep.subr.mxu0 0.0
    %2615 = vmatpush2.msra.mxu0 0.0
    %2616 = vmatprep.subr.mxu0 0.0
    %2617 = vmatpush2.msra.mxu0 0.0
    %2618 = vmatprep.subr.mxu0 0.0
    %2619 = vmatpush2.msra.mxu0 0.0
    %2620 = vmatprep.subr.mxu0 0.0
    %2621 = vmatpush2.msra.mxu0 0.0
    %2622 = vmatprep.subr.mxu0 0.0
    %2623 = vmatpush2.msra.mxu0 0.0
    %2624 = vmatprep.subr.mxu0 0.0
    %2625 = vmatpush2.msra.mxu0 0.0
    %2626 = vmatprep.subr.mxu0 0.0
    %2627 = vmatpush2.msra.mxu0 0.0
    %2628 = vmatprep.subr.mxu0 0.0
    %2629 = vmatpush2.msra.mxu0 0.0
    %2630 = vmatprep.subr.mxu0 0.0
    %2631 = vmatpush2.msra.mxu0 0.0
    %2632 = vmatprep.subr.mxu0 0.0
    %2633 = vmatpush2.msra.mxu0 0.0
    %2634 = vmatprep.subr.mxu0 0.0
    %2635 = vmatpush2.msra.mxu0 0.0
    %2636 = vmatprep.subr.mxu0 0.0
    %2637 = vmatpush2.msra.mxu0 0.0
    %2638 = vmatprep.subr.mxu0 0.0
    %2639 = vmatpush2.msra.mxu0 0.0
    %2640 = vmatprep.subr.mxu0 0.0
    %2641 = vmatpush2.msra.mxu0 0.0
    %2642 = vmatprep.subr.mxu0 0.0
    %2643 = vmatpush2.msra.mxu0 0.0
    %2644 = vmatprep.subr.mxu0 0.0
    %2645 = vmatpush2.msra.mxu0 0.0
    %2646 = vmatprep.mubr.f32.mxu0 0.0
    %2647 = vmatmul.mubr.f32.gmra.mxu0 %v2551
    %v2648 = vpop.f32.mrf.mxu0
    %v2649 = vadd.f32 %v2580, %v2648
    %v2650 = vpop.f32.mrf.mxu0
    %2651 = vmatprep.mubr.f32.mxu0 0.0
    %2652 = vmatmul.mubr.f32.gmra.mxu0 %v2552
    %v2653 = vpop.f32.mrf.mxu0
    %v2654 = vadd.f32 %v2580, %v2653
    %v2655 = vpop.f32.mrf.mxu0
    %2656 = vmatprep.mubr.f32.mxu0 0.0
    %2657 = vmatmul.mubr.f32.gmra.mxu0 %v2553
    %v2658 = vpop.f32.mrf.mxu0
    %v2659 = vadd.f32 %v2580, %v2658
    %v2660 = vpop.f32.mrf.mxu0
    %2661 = vmatprep.mubr.f32.mxu0 0.0
    %2662 = vmatmul.mubr.f32.gmra.mxu0 %v2554
    %v2663 = vpop.f32.mrf.mxu0
    %v2664 = vadd.f32 %v2580, %v2663
    %v2665 = vpop.f32.mrf.mxu0
    %2666 = vmatprep.mubr.f32.mxu0 0.0
    %2667 = vmatmul.mubr.f32.gmra.mxu0 %v2555
    %v2668 = vpop.f32.mrf.mxu0
    %v2669 = vadd.f32 %v2580, %v2668
    %v2670 = vpop.f32.mrf.mxu0
    %2671 = vmatprep.mubr.f32.mxu0 0.0
    %2672 = vmatmul.mubr.f32.gmra.mxu0 %v2556
    %v2673 = vpop.f32.mrf.mxu0
    %v2674 = vadd.f32 %v2580, %v2673
    %v2675 = vpop.f32.mrf.mxu0
    %2676 = vmatprep.mubr.f32.mxu0 0.0
    %2677 = vmatmul.mubr.f32.gmra.mxu0 %v2557
    %v2678 = vpop.f32.mrf.mxu0
    %v2679 = vadd.f32 %v2580, %v2678
    %v2680 = vpop.f32.mrf.mxu0
    %2681 = vmatprep.mubr.f32.mxu0 0.0
    %2682 = vmatmul.mubr.f32.gmra.mxu0 %v2558
    %v2683 = vpop.f32.mrf.mxu0
    %v2684 = vadd.f32 %v2580, %v2683
    %v2685 = vpop.f32.mrf.mxu0
    %2686 = vdwg.mxu0
    %2687 = vmax.xlane.f32.xlu0 %v2649
    %v2688 = vpop.xlane.xlu0 %2687
    %2689 = vmax.xlane.f32.xlu0 %v2654
    %v2690 = vpop.xlane.xlu0 %2689
    %2691 = vmax.xlane.f32.xlu0 %v2659
    %v2692 = vpop.xlane.xlu0 %2691
    %2693 = vmax.xlane.f32.xlu0 %v2664
    %v2694 = vpop.xlane.xlu0 %2693
    %2695 = vmax.xlane.f32.xlu0 %v2669
    %v2696 = vpop.xlane.xlu0 %2695
    %2697 = vmax.xlane.f32.xlu0 %v2674
    %v2698 = vpop.xlane.xlu0 %2697
    %2699 = vmax.xlane.f32.xlu0 %v2679
    %v2700 = vpop.xlane.xlu0 %2699
    %2701 = vmax.xlane.f32.xlu0 %v2684
    %v2702 = vpop.xlane.xlu0 %2701
    %v2703 = vsub.f32 %v2649, %v2688
    %v2704 = vsub.f32 %v2654, %v2690
    %v2705 = vsub.f32 %v2659, %v2692
    %v2706 = vsub.f32 %v2664, %v2694
    %v2707 = vsub.f32 %v2669, %v2696
    %v2708 = vsub.f32 %v2674, %v2698
    %v2709 = vsub.f32 %v2679, %v2700
    %v2710 = vsub.f32 %v2684, %v2702
    %v2711 = vmul.f32 %v2703, 1.442695
    %v2712 = vpow.pop %v2711
    %v2713 = vmul.f32 %v2704, 1.442695
    %v2714 = vpow.pop %v2713
    %v2715 = vmul.f32 %v2705, 1.442695
    %v2716 = vpow.pop %v2715
    %v2717 = vmul.f32 %v2706, 1.442695
    %v2718 = vpow.pop %v2717
    %v2719 = vmul.f32 %v2707, 1.442695
    %v2720 = vpow.pop %v2719
    %v2721 = vmul.f32 %v2708, 1.442695
    %v2722 = vpow.pop %v2721
    %v2723 = vmul.f32 %v2709, 1.442695
    %v2724 = vpow.pop %v2723
    %v2725 = vmul.f32 %v2710, 1.442695
    %v2726 = vpow.pop %v2725
    %2727 = vadd.xlane.f32.xlu0 %v2712
    %v2728 = vpop.xlane.xlu0 %2727
    %2729 = vadd.xlane.f32.xlu0 %v2714
    %v2730 = vpop.xlane.xlu0 %2729
    %2731 = vadd.xlane.f32.xlu0 %v2716
    %v2732 = vpop.xlane.xlu0 %2731
    %2733 = vadd.xlane.f32.xlu0 %v2718
    %v2734 = vpop.xlane.xlu0 %2733
    %2735 = vadd.xlane.f32.xlu0 %v2720
    %v2736 = vpop.xlane.xlu0 %2735
    %2737 = vadd.xlane.f32.xlu0 %v2722
    %v2738 = vpop.xlane.xlu0 %2737
    %2739 = vadd.xlane.f32.xlu0 %v2724
    %v2740 = vpop.xlane.xlu0 %2739
    %2741 = vadd.xlane.f32.xlu0 %v2726
    %v2742 = vpop.xlane.xlu0 %2741
    %v2743 = vlog2.pop %v2728
    %v2744 = vmul.f32 %v2743, 0.6931472
    %v2745 = vlog2.pop %v2730
    %v2746 = vmul.f32 %v2745, 0.6931472
    %v2747 = vlog2.pop %v2732
    %v2748 = vmul.f32 %v2747, 0.6931472
    %v2749 = vlog2.pop %v2734
    %v2750 = vmul.f32 %v2749, 0.6931472
    %v2751 = vlog2.pop %v2736
    %v2752 = vmul.f32 %v2751, 0.6931472
    %v2753 = vlog2.pop %v2738
    %v2754 = vmul.f32 %v2753, 0.6931472
    %v2755 = vlog2.pop %v2740
    %v2756 = vmul.f32 %v2755, 0.6931472
    %v2757 = vlog2.pop %v2742
    %v2758 = vmul.f32 %v2757, 0.6931472
    %v2759 = vsub.f32 %v2703, %v2744
    %v2760 = vsub.f32 %v2704, %v2746
    %v2761 = vsub.f32 %v2705, %v2748
    %v2762 = vsub.f32 %v2706, %v2750
    %v2763 = vsub.f32 %v2707, %v2752
    %v2764 = vsub.f32 %v2708, %v2754
    %v2765 = vsub.f32 %v2709, %v2756
    %v2766 = vsub.f32 %v2710, %v2758
    %v2767 = vadd.f32 %v2759, -0.105360515
    %v2768 = vadd.f32 %v2760, -0.105360515
    %v2769 = vadd.f32 %v2761, -0.105360515
    %v2770 = vadd.f32 %v2762, -0.105360515
    %v2771 = vadd.f32 %v2763, -0.105360515
    %v2772 = vadd.f32 %v2764, -0.105360515
    %v2773 = vadd.f32 %v2765, -0.105360515
    %v2774 = vadd.f32 %v2766, -0.105360515
    %v2775 = vmax.f32 %v2767, -4.3820267
    %v2776 = vmax.f32 %v2768, -4.3820267
    %v2777 = vmax.f32 %v2769, -4.3820267
    %v2778 = vmax.f32 %v2770, -4.3820267
    %v2779 = vmax.f32 %v2771, -4.3820267
    %v2780 = vmax.f32 %v2772, -4.3820267
    %v2781 = vmax.f32 %v2773, -4.3820267
    %v2782 = vmax.f32 %v2774, -4.3820267
    %v2783 = vsub.f32 %v2767, %v2775
    %v2784 = vsub.f32 %v2768, %v2776
    %v2785 = vsub.f32 %v2769, %v2777
    %v2786 = vsub.f32 %v2770, %v2778
    %v2787 = vsub.f32 %v2771, %v2779
    %v2788 = vsub.f32 %v2772, %v2780
    %v2789 = vsub.f32 %v2773, %v2781
    %v2790 = vsub.f32 %v2774, %v2782
    %v2791 = vmul.f32 %v2783, 1.442695
    %v2792 = vpow.pop %v2791
    %v2793 = vmul.f32 %v2784, 1.442695
    %v2794 = vpow.pop %v2793
    %v2795 = vmul.f32 %v2785, 1.442695
    %v2796 = vpow.pop %v2795
    %v2797 = vmul.f32 %v2786, 1.442695
    %v2798 = vpow.pop %v2797
    %v2799 = vmul.f32 %v2787, 1.442695
    %v2800 = vpow.pop %v2799
    %v2801 = vmul.f32 %v2788, 1.442695
    %v2802 = vpow.pop %v2801
    %v2803 = vmul.f32 %v2789, 1.442695
    %v2804 = vpow.pop %v2803
    %v2805 = vmul.f32 %v2790, 1.442695
    %v2806 = vpow.pop %v2805
    %v2807 = vsub.f32 -4.3820267, %v2775
    %v2808 = vsub.f32 -4.3820267, %v2776
    %v2809 = vsub.f32 -4.3820267, %v2777
    %v2810 = vsub.f32 -4.3820267, %v2778
    %v2811 = vsub.f32 -4.3820267, %v2779
    %v2812 = vsub.f32 -4.3820267, %v2780
    %v2813 = vsub.f32 -4.3820267, %v2781
    %v2814 = vsub.f32 -4.3820267, %v2782
    %v2815 = vmul.f32 %v2807, 1.442695
    %v2816 = vpow.pop %v2815
    %v2817 = vmul.f32 %v2808, 1.442695
    %v2818 = vpow.pop %v2817
    %v2819 = vmul.f32 %v2809, 1.442695
    %v2820 = vpow.pop %v2819
    %v2821 = vmul.f32 %v2810, 1.442695
    %v2822 = vpow.pop %v2821
    %v2823 = vmul.f32 %v2811, 1.442695
    %v2824 = vpow.pop %v2823
    %v2825 = vmul.f32 %v2812, 1.442695
    %v2826 = vpow.pop %v2825
    %v2827 = vmul.f32 %v2813, 1.442695
    %v2828 = vpow.pop %v2827
    %v2829 = vmul.f32 %v2814, 1.442695
    %v2830 = vpow.pop %v2829
    %v2831 = vadd.f32 %v2792, %v2816
    %v2832 = vadd.f32 %v2794, %v2818
    %v2833 = vadd.f32 %v2796, %v2820
    %v2834 = vadd.f32 %v2798, %v2822
    %v2835 = vadd.f32 %v2800, %v2824
    %v2836 = vadd.f32 %v2802, %v2826
    %v2837 = vadd.f32 %v2804, %v2828
    %v2838 = vadd.f32 %v2806, %v2830
    %v2839 = vlog2.pop %v2831
    %v2840 = vmul.f32 %v2839, 0.6931472
    %v2841 = vlog2.pop %v2832
    %v2842 = vmul.f32 %v2841, 0.6931472
    %v2843 = vlog2.pop %v2833
    %v2844 = vmul.f32 %v2843, 0.6931472
    %v2845 = vlog2.pop %v2834
    %v2846 = vmul.f32 %v2845, 0.6931472
    %v2847 = vlog2.pop %v2835
    %v2848 = vmul.f32 %v2847, 0.6931472
    %v2849 = vlog2.pop %v2836
    %v2850 = vmul.f32 %v2849, 0.6931472
    %v2851 = vlog2.pop %v2837
    %v2852 = vmul.f32 %v2851, 0.6931472
    %v2853 = vlog2.pop %v2838
    %v2854 = vmul.f32 %v2853, 0.6931472
    %v2855 = vadd.f32 %v2775, %v2840
    %v2856 = vadd.f32 %v2776, %v2842
    %v2857 = vadd.f32 %v2777, %v2844
    %v2858 = vadd.f32 %v2778, %v2846
    %v2859 = vadd.f32 %v2779, %v2848
    %v2860 = vadd.f32 %v2780, %v2850
    %v2861 = vadd.f32 %v2781, %v2852
    %v2862 = vadd.f32 %v2782, %v2854
    %2863 = vst [vmem:[#allocation10] sm:$0xff] %v2855
    %2864 = vst [vmem:[#allocation10 + $0x8] sm:$0xff] %v2856
    %2865 = vst [vmem:[#allocation10 + $0x10] sm:$0xff] %v2857
    %2866 = vst [vmem:[#allocation10 + $0x18] sm:$0xff] %v2858
    %2867 = vst [vmem:[#allocation10 + $0x20] sm:$0xff] %v2859
    %2868 = vst [vmem:[#allocation10 + $0x28] sm:$0xff] %v2860
    %2869 = vst [vmem:[#allocation10 + $0x30] sm:$0xff] %v2861
    %2870 = vst [vmem:[#allocation10 + $0x38] sm:$0xff] %v2862
    // Predicated region
    $region58: #{tpu_custom_call.1} parent=1 // pred_check
      _
    $region59: #{tpu_custom_call.1} parent=1 // pred_check_branch
      %2872 = sbr.rel (0) target = $region61
    $region60: #{tpu_custom_call.1} parent=1 // pred_region
      %s2874 = ssub.s32 1024, 1024
      %2875 = vsyncadd [#allocation6], %s2874
      %s2876 = sshll.u32 [#allocation10], 4
      %s2877 = int_to_ptr.vmem [resolvable:$true] %s2876
      %2882 = dma.vmem_to_hbm [thread:$0]  %s2877, 1024, %s10, [#allocation6], 128, 128, 8
    $region61: #{tpu_custom_call.1} parent=1 // pred_fallthru
      _
    // Predicated region
    $region62: #{tpu_custom_call.1} parent=1 // pred_check
      _
    $region63: #{tpu_custom_call.1} parent=1 // pred_check_branch
      %2884 = sbr.rel (0) target = $region65
    $region64: #{tpu_custom_call.1} parent=1 // pred_region
      %s2886 = ssub.s32 128, 128
      %2887 = vsyncadd [#allocation12], %s2886
      %s2889 = sshll.u32 [#allocation11], 4
      %s2890 = int_to_ptr.vmem [resolvable:$true] %s2889
      %2892 = dma.vmem_to_hbm [thread:$0]  %s2890, 128, %s11, [#allocation12]
    $region65: #{tpu_custom_call.1} parent=1 // pred_fallthru
      _
    // Predicated region
    $region66: #{tpu_custom_call.1} parent=1 // pred_check
      _
    $region67: #{tpu_custom_call.1} parent=1 // pred_check_branch
      %2894 = sbr.rel (0) target = $region69
    $region68: #{tpu_custom_call.1} parent=1 // pred_region
      %s2896 = ssub.s32 128, 128
      %2897 = vsyncadd [#allocation12], %s2896
      %s2899 = sshll.u32 [#allocation13], 4
      %s2900 = int_to_ptr.vmem [resolvable:$true] %s2899
      %2902 = dma.vmem_to_hbm [thread:$0]  %s2900, 128, %s12, [#allocation12]
    $region69: #{tpu_custom_call.1} parent=1 // pred_fallthru
      _
    // Predicated region
    $region70: #{tpu_custom_call.1} parent=1 // pred_check
      _
    $region71: #{tpu_custom_call.1} parent=1 // pred_check_branch
      %2904 = sbr.rel (0) target = $region73
    $region72: #{tpu_custom_call.1} parent=1 // pred_region
      %2905 = dma.done [#allocation6], 1024
    $region73: #{tpu_custom_call.1} parent=1 // pred_fallthru
      _
    // Predicated region
    $region74: #{tpu_custom_call.1} parent=1 // pred_check
      _
    $region75: #{tpu_custom_call.1} parent=1 // pred_check_branch
      %2907 = sbr.rel (0) target = $region77
    $region76: #{tpu_custom_call.1} parent=1 // pred_region
      %2908 = dma.done [#allocation12], 128
    $region77: #{tpu_custom_call.1} parent=1 // pred_fallthru
      _
    // Predicated region
    $region78: #{tpu_custom_call.1} parent=1 // pred_check
      _
    $region79: #{tpu_custom_call.1} parent=1 // pred_check_branch
      %2910 = sbr.rel (0) target = $region81
    $region80: #{tpu_custom_call.1} parent=1 // pred_region
      %2911 = dma.done [#allocation12], 128
    $region81: #{tpu_custom_call.1} parent=1 // pred_fallthru
      _
    %2912 = vsyncpa [#allocation5], 1
    %2913 = vsyncpa [#allocation8], 1
    %2914 = vsyncpa [#allocation6], 1
    %2915 = vsyncpa [#allocation12], 1

</llo_original>
